<compile_context>
chip_gen: v5e
topology: v5e:2x2
jax: 0.10.0
libtpu: 0.0.40
codegen_flags: <defaults>
</compile_context>

<pallas_src>
import functools

import jax
import jax.numpy as jnp
import numpy as np
from jax import lax
from jax.experimental import pallas as pl
from jax.experimental.pallas import tpu as pltpu


# ----------------------------- kernel ---------------------------------------
def _gnn_kernel(a_ref, h_ref, w_edge_ref, b_edge_ref, w_gate_x_ref,
                w_gate_h_ref, b_gate_ref, out_ref, *, num_steps):
    Bt, L, E = h_ref.shape
    M = Bt * L
    f32 = jnp.float32
    bf16 = jnp.bfloat16

    A = a_ref[...].astype(f32)                  # (Bt, L, 2L)
    w_edge = w_edge_ref[...]                    # (E, 2E)   bf16
    b_edge = b_edge_ref[...]                    # (1, 2E)   f32
    w_gate_x = w_gate_x_ref[...]                # (2E, 4E)  bf16
    w_gate_h = w_gate_h_ref[...]                # (E, 4E)   bf16
    b_gate = b_gate_ref[...]                    # (1, 4E)   f32

    # Lane mask: first E lanes belong to the "in" half, last E to the "out"
    # half of the concatenated 2E-wide edge/input tensors.  Hoisted out of the
    # step loop (JAX does not CSE broadcasts).
    lane = lax.broadcasted_iota(jnp.int32, (1, 1, 2 * E), 2)
    in_half = lane < E                          # (1, 1, 2E) bool

    # (Bt, L, E) -> (M, E): collapses leading dims only (tile-exact for L=8).
    h0 = h_ref[...].astype(f32).reshape(M, E)

    def cell(h):
        hb = h.astype(bf16)

        # Fused edge projections: one MXU dot -> [edge_in | edge_out].
        ep = jnp.dot(hb, w_edge, preferred_element_type=f32) + b_edge   # (M, 2E)
        ep3 = ep.reshape(Bt, L, 2 * E)

        # Adjacency contraction on the VPU (L is tiny, A is block-diagonal
        # per session):  acc[b,i,:E]  = sum_j A[b,i,j]   * edge_in[b,j,:]
        #                acc[b,i,E:]  = sum_j A[b,i,L+j] * edge_out[b,j,:]
        a0 = jnp.where(in_half, A[:, :, 0:1], A[:, :, L:L + 1])
        acc = a0 * ep3[:, 0:1, :]
        for j in range(1, L):
            a_j = jnp.where(in_half, A[:, :, j:j + 1], A[:, :, L + j:L + j + 1])
            acc = acc + a_j * ep3[:, j:j + 1, :]
        xg = acc.reshape(M, 2 * E)              # [input_in | input_out]
        # (b_iah / b_ioh are folded into b_gate in the wrapper.)

        # Fused gate matmuls -> columns [g_r | g_i | i_n | h_n]  (M, 4E)
        g = (jnp.dot(xg.astype(bf16), w_gate_x, preferred_element_type=f32)
             + jnp.dot(hb, w_gate_h, preferred_element_type=f32)
             + b_gate)

        reset_gate = jax.nn.sigmoid(g[:, 0 * E:1 * E])
        input_gate = jax.nn.sigmoid(g[:, 1 * E:2 * E])
        new_gate = jnp.tanh(g[:, 2 * E:3 * E] + reset_gate * g[:, 3 * E:4 * E])
        return (1.0 - input_gate) * h + input_gate * new_gate

    h = lax.fori_loop(0, num_steps, lambda _, hh: cell(hh), h0, unroll=True)
    out_ref[...] = h.reshape(Bt, L, E).astype(out_ref.dtype)


# ------------------------- parameter fusion ----------------------------------
def _prepare_params(params):
    """Fuse / pre-transpose PyTorch-layout params into 5 kernel arrays.

    Returns:
      w_edge   (E, 2E)  bf16 : h @ w_edge           -> [edge_in | edge_out]
      b_edge   (1, 2E)  f32
      w_gate_x (2E, 4E) bf16 : [in_in|in_out] @ Wx  -> part of [g_r|g_i|i_n|h_n]
      w_gate_h (E, 4E)  bf16 : h @ Wh               -> rest of [g_r|g_i|i_n|h_n]
      b_gate   (1, 4E)  f32  : per-gate biases with b_iah/b_ioh folded through Wx
    """
    w_ein, b_ein, w_eout, b_eout, b_iah, b_ioh, w_ih, b_ih, w_hh, b_hh = params
    E = w_ein.shape[0]
    f32 = jnp.float32
    bf16 = jnp.bfloat16

    # --- fused edge projection -----------------------------------------------
    w_edge = jnp.concatenate([jnp.asarray(w_ein, f32).T,
                              jnp.asarray(w_eout, f32).T], axis=1)      # (E, 2E)
    b_edge = jnp.concatenate([jnp.reshape(b_ein, (1, E)),
                              jnp.reshape(b_eout, (1, E))], axis=1).astype(f32)

    # --- fused gate weights: output columns are [g_r | g_i | i_n | h_n] ------
    w_ih_t = jnp.asarray(w_ih, f32).T      # (2E, 3E); rows 0:E input_in, E:2E input_out
    w_hh_t = jnp.asarray(w_hh, f32).T      # (E, 3E)
    w_gate_x = jnp.concatenate(
        [w_ih_t, jnp.zeros((2 * E, E), f32)], axis=1)                   # (2E, 4E)
    w_gate_h = jnp.concatenate(
        [w_hh_t[:, :2 * E], jnp.zeros((E, E), f32), w_hh_t[:, 2 * E:]],
        axis=1)                                                         # (E, 4E)

    b_ih_f = jnp.reshape(jnp.asarray(b_ih, f32), (3 * E,))
    b_hh_f = jnp.reshape(jnp.asarray(b_hh, f32), (3 * E,))
    b_gate = jnp.concatenate([
        b_ih_f[:E] + b_hh_f[:E],             # r (pre-folded)
        b_ih_f[E:2 * E] + b_hh_f[E:2 * E],   # i (pre-folded)
        b_ih_f[2 * E:],                      # n, input side
        b_hh_f[2 * E:],                      # n, hidden side
    ]).reshape(1, 4 * E)
    # b_iah / b_ioh are added to input_in / input_out which only feed w_gate_x,
    # so fold them (exact, in f32) into the fused gate bias.
    b_io = jnp.concatenate([jnp.reshape(b_iah, (1, E)),
                            jnp.reshape(b_ioh, (1, E))], axis=1).astype(f32)
    b_gate = b_gate + b_io @ w_gate_x

    return (w_edge.astype(bf16), b_edge,
            w_gate_x.astype(bf16), w_gate_h.astype(bf16), b_gate)


# ------------------------------- wrapper -------------------------------------
@functools.partial(jax.jit, static_argnames=("step", "block_b"))
def gnn_forward(A, hidden, params, step=1, block_b=None):
    """GNN.forward: `step` GNNCell iterations. A: (B,L,2L), hidden: (B,L,E)."""
    B, L, E = hidden.shape
    assert A.shape == (B, L, 2 * L)

    w_edge, b_edge, w_gate_x, w_gate_h, b_gate = _prepare_params(params)

    A_f = A.astype(jnp.float32)

    if block_b is None:
        block_b = min(max(1, 1024 // L), 512)     # target M = block_b*L ~ 1024
        if B > 1:                                  # keep >= 2 blocks for megacore
            block_b = min(block_b, -(-B // 2))
    block_b = int(max(1, min(block_b, B)))

    Bp = -(-B // block_b) * block_b
    if Bp != B:
        pad = Bp - B
        A_f = jnp.pad(A_f, ((0, pad), (0, 0), (0, 0)))
        hidden_p = jnp.pad(hidden, ((0, pad), (0, 0), (0, 0)))
    else:
        hidden_p = hidden

    grid = (Bp // block_b,)

    def batched(shape):
        return pl.BlockSpec((block_b,) + tuple(shape),
                            lambda b: (b,) + (0,) * len(shape))

    def replicated(arr):
        nd = arr.ndim
        return pl.BlockSpec(arr.shape, lambda b, _nd=nd: (0,) * _nd)

    kernel = functools.partial(_gnn_kernel, num_steps=step)

    out = pl.pallas_call(
        kernel,
        out_shape=jax.ShapeDtypeStruct((Bp, L, E), hidden.dtype),
        grid_spec=pltpu.PrefetchScalarGridSpec(
            num_scalar_prefetch=0,
            grid=grid,
            in_specs=[
                batched((L, 2 * L)),        # A
                batched((L, E)),            # hidden
                replicated(w_edge),
                replicated(b_edge),
                replicated(w_gate_x),
                replicated(w_gate_h),
                replicated(b_gate),
            ],
            out_specs=pl.BlockSpec((block_b, L, E), lambda b: (b, 0, 0)),
        ),
        compiler_params=pltpu.CompilerParams(
            dimension_semantics=("parallel",),
            vmem_limit_bytes=48 * 1024 * 1024),
    )(A_f, hidden_p, w_edge, b_edge, w_gate_x, w_gate_h, b_gate)

    return out[:B]


# ------------------------- pure-JAX reference --------------------------------
def gnn_cell_ref(A, hidden, params):
    w_ein, b_ein, w_eout, b_eout, b_iah, b_ioh, w_ih, b_ih, w_hh, b_hh = params
    L = A.shape[1]
    edge_in = hidden @ w_ein.T + b_ein
    edge_out = hidden @ w_eout.T + b_eout
    input_in = jnp.matmul(A[:, :, :L], edge_in) + b_iah
    input_out = jnp.matmul(A[:, :, L:2 * L], edge_out) + b_ioh
    inputs = jnp.concatenate([input_in, input_out], axis=2)
    gi = inputs @ w_ih.T + b_ih
    gh = hidden @ w_hh.T + b_hh
    i_r, i_i, i_n = jnp.split(gi, 3, axis=2)
    h_r, h_i, h_n = jnp.split(gh, 3, axis=2)
    reset_gate = jax.nn.sigmoid(i_r + h_r)
    input_gate = jax.nn.sigmoid(i_i + h_i)
    new_gate = jnp.tanh(i_n + reset_gate * h_n)
    return (1.0 - input_gate) * hidden + input_gate * new_gate


def init_params(key, E):
    """Deterministic synthetic init (SRGNN uses uniform(-1/sqrt(E), 1/sqrt(E)))."""
    stdv = 1.0 / np.sqrt(E)
    ks = jax.random.split(key, 10)
    u = lambda k, shape: jax.random.uniform(k, shape, jnp.float32, -stdv, stdv)
    w_ein = u(ks[0], (E, E))
    b_ein = u(ks[1], (1, E))
    w_eout = u(ks[2], (E, E))
    b_eout = u(ks[3], (1, E))
    b_iah = u(ks[4], (1, E))
    b_ioh = u(ks[5], (1, E))
    w_ih = u(ks[6], (3 * E, 2 * E))
    b_ih = u(ks[7], (1, 3 * E))
    w_hh = u(ks[8], (3 * E, E))
    b_hh = u(ks[9], (1, 3 * E))
    return (w_ein, b_ein, w_eout, b_eout, b_iah, b_ioh, w_ih, b_ih, w_hh, b_hh)


if __name__ == "__main__":
    L, E = 8, 32   # max_session_len, embedding_size

    key = jax.random.PRNGKey(0)
    k_a, k_h, k_p = jax.random.split(key, 3)
    params = init_params(k_p, E)

    # (batch, step) cases: batched multi-block path and tiny padded multi-step path.
    for (B, STEP) in [(64, 1), (3, 2)]:
        ka = jax.random.fold_in(k_a, B)
        kh = jax.random.fold_in(k_h, B)
        A = jax.random.uniform(ka, (B, L, 2 * L), jnp.float32, 0.0, 1.0)
        A = A / jnp.sum(A, axis=-1, keepdims=True)
        hidden = jax.random.normal(kh, (B, L, E), jnp.float32)

        out = jax.block_until_ready(gnn_forward(A, hidden, params, step=STEP))

        ref = hidden
        for _ in range(STEP):
            ref = gnn_cell_ref(A, ref, params)
        ref = jax.block_until_ready(ref)

        # bf16 matmul operands / f32 accumulation -> compare with a loose but
        # still structure-catching tolerance against the f32 reference.
        np.testing.assert_allclose(np.asarray(out), np.asarray(ref),
                                   rtol=2e-2, atol=2e-2)

    print("KERNEL_OK")
</pallas_src>

<mosaic_0001>
module attributes {stable_mosaic.version = 11 : i64} {
  func.func @_gnn_kernel(%arg0: i32, %arg1: memref<32x8x16xf32, #tpu.memory_space<vmem>>, %arg2: memref<32x8x32xf32, #tpu.memory_space<vmem>>, %arg3: memref<32x64xbf16, #tpu.memory_space<vmem>>, %arg4: memref<1x64xf32, #tpu.memory_space<vmem>>, %arg5: memref<64x128xbf16, #tpu.memory_space<vmem>>, %arg6: memref<32x128xbf16, #tpu.memory_space<vmem>>, %arg7: memref<1x128xf32, #tpu.memory_space<vmem>>, %arg8: memref<32x8x32xf32, #tpu.memory_space<vmem>>) attributes {dimension_semantics = [#tpu.dimension_semantics<parallel>], iteration_bounds = array<i64: 2>, scalar_prefetch = 0 : i64, scratch_operands = 0 : i64, tpu.core_type = #tpu.core_type<tc>, window_params = [{transform_indices = @transform_0, window_bounds = array<i64: 32, 8, 16>}, {transform_indices = @transform_1, window_bounds = array<i64: 32, 8, 32>}, {pipeline_mode = #tpu.pipeline_mode<synchronous>, transform_indices = @transform_2, window_bounds = array<i64: 32, 64>}, {pipeline_mode = #tpu.pipeline_mode<synchronous>, transform_indices = @transform_3, window_bounds = array<i64: 1, 64>}, {pipeline_mode = #tpu.pipeline_mode<synchronous>, transform_indices = @transform_4, window_bounds = array<i64: 64, 128>}, {pipeline_mode = #tpu.pipeline_mode<synchronous>, transform_indices = @transform_5, window_bounds = array<i64: 32, 128>}, {pipeline_mode = #tpu.pipeline_mode<synchronous>, transform_indices = @transform_6, window_bounds = array<i64: 1, 128>}, {transform_indices = @transform_7, window_bounds = array<i64: 32, 8, 32>}]} {
    %c0 = arith.constant 0 : index
    %c0_0 = arith.constant 0 : index
    %c0_1 = arith.constant 0 : index
    %0 = vector.load %arg1[%c0, %c0_0, %c0_1] : memref<32x8x16xf32, #tpu.memory_space<vmem>>, vector<32x8x16xf32>
    %c0_2 = arith.constant 0 : index
    %c0_3 = arith.constant 0 : index
    %1 = vector.load %arg3[%c0_2, %c0_3] : memref<32x64xbf16, #tpu.memory_space<vmem>>, vector<32x64xbf16>
    %c0_4 = arith.constant 0 : index
    %c0_5 = arith.constant 0 : index
    %2 = vector.load %arg4[%c0_4, %c0_5] : memref<1x64xf32, #tpu.memory_space<vmem>>, vector<1x64xf32>
    %c0_6 = arith.constant 0 : index
    %c0_7 = arith.constant 0 : index
    %3 = vector.load %arg5[%c0_6, %c0_7] : memref<64x128xbf16, #tpu.memory_space<vmem>>, vector<64x128xbf16>
    %c0_8 = arith.constant 0 : index
    %c0_9 = arith.constant 0 : index
    %4 = vector.load %arg6[%c0_8, %c0_9] : memref<32x128xbf16, #tpu.memory_space<vmem>>, vector<32x128xbf16>
    %c0_10 = arith.constant 0 : index
    %c0_11 = arith.constant 0 : index
    %5 = vector.load %arg7[%c0_10, %c0_11] : memref<1x128xf32, #tpu.memory_space<vmem>>, vector<1x128xf32>
    %6 = tpu.iota {dimensions = array<i32: 2>} : vector<1x1x64xi32>
    %c32_i32 = arith.constant 32 : i32
    %7 = vector.broadcast %c32_i32 : i32 to vector<1x1x64xi32>
    %8 = arith.cmpi slt, %6, %7 : vector<1x1x64xi32>
    %c0_12 = arith.constant 0 : index
    %c0_13 = arith.constant 0 : index
    %c0_14 = arith.constant 0 : index
    %9 = vector.load %arg2[%c0_12, %c0_13, %c0_14] : memref<32x8x32xf32, #tpu.memory_space<vmem>>, vector<32x8x32xf32>
    %10 = vector.shape_cast %9 : vector<32x8x32xf32> to vector<256x32xf32>
    %c0_i32 = arith.constant 0 : i32
    %11 = arith.truncf %10 : vector<256x32xf32> to vector<256x32xbf16>
    %cst = arith.constant dense<0.000000e+00> : vector<256x64xf32>
    %12 = tpu.matmul %11, %1, %cst {dimension_numbers = #tpu.dot_dimension_numbers<[1], [0], [0], [1], [0, 0, 1, 1], [], []>} : vector<256x32xbf16>, vector<32x64xbf16>, vector<256x64xf32> -> vector<256x64xf32>
    %13 = vector.broadcast %2 : vector<1x64xf32> to vector<256x64xf32>
    %14 = arith.addf %12, %13 : vector<256x64xf32>
    %15 = vector.shape_cast %14 : vector<256x64xf32> to vector<32x8x64xf32>
    %16 = vector.extract_strided_slice %0 {offsets = [0, 0, 0], sizes = [32, 8, 1], strides = [1, 1, 1]} : vector<32x8x16xf32> to vector<32x8x1xf32>
    %17 = vector.extract_strided_slice %0 {offsets = [0, 0, 8], sizes = [32, 8, 1], strides = [1, 1, 1]} : vector<32x8x16xf32> to vector<32x8x1xf32>
    %18 = vector.shape_cast %8 : vector<1x1x64xi1> to vector<1x1x64xi1>
    %19 = vector.broadcast %18 : vector<1x1x64xi1> to vector<32x8x64xi1>
    %20 = vector.shape_cast %16 : vector<32x8x1xf32> to vector<32x8x1xf32>
    %21 = vector.broadcast %20 : vector<32x8x1xf32> to vector<32x8x64xf32>
    %22 = vector.shape_cast %17 : vector<32x8x1xf32> to vector<32x8x1xf32>
    %23 = vector.broadcast %22 : vector<32x8x1xf32> to vector<32x8x64xf32>
    %24 = arith.select %19, %21, %23 : vector<32x8x64xi1>, vector<32x8x64xf32>
    %25 = vector.extract_strided_slice %15 {offsets = [0, 0, 0], sizes = [32, 1, 64], strides = [1, 1, 1]} : vector<32x8x64xf32> to vector<32x1x64xf32>
    %26 = vector.broadcast %25 : vector<32x1x64xf32> to vector<32x8x64xf32>
    %27 = arith.mulf %24, %26 : vector<32x8x64xf32>
    %28 = vector.extract_strided_slice %0 {offsets = [0, 0, 1], sizes = [32, 8, 1], strides = [1, 1, 1]} : vector<32x8x16xf32> to vector<32x8x1xf32>
    %29 = vector.extract_strided_slice %0 {offsets = [0, 0, 9], sizes = [32, 8, 1], strides = [1, 1, 1]} : vector<32x8x16xf32> to vector<32x8x1xf32>
    %30 = vector.shape_cast %8 : vector<1x1x64xi1> to vector<1x1x64xi1>
    %31 = vector.broadcast %30 : vector<1x1x64xi1> to vector<32x8x64xi1>
    %32 = vector.shape_cast %28 : vector<32x8x1xf32> to vector<32x8x1xf32>
    %33 = vector.broadcast %32 : vector<32x8x1xf32> to vector<32x8x64xf32>
    %34 = vector.shape_cast %29 : vector<32x8x1xf32> to vector<32x8x1xf32>
    %35 = vector.broadcast %34 : vector<32x8x1xf32> to vector<32x8x64xf32>
    %36 = arith.select %31, %33, %35 : vector<32x8x64xi1>, vector<32x8x64xf32>
    %37 = vector.extract_strided_slice %15 {offsets = [0, 1, 0], sizes = [32, 1, 64], strides = [1, 1, 1]} : vector<32x8x64xf32> to vector<32x1x64xf32>
    %38 = vector.broadcast %37 : vector<32x1x64xf32> to vector<32x8x64xf32>
    %39 = arith.mulf %36, %38 : vector<32x8x64xf32>
    %40 = arith.addf %27, %39 : vector<32x8x64xf32>
    %41 = vector.extract_strided_slice %0 {offsets = [0, 0, 2], sizes = [32, 8, 1], strides = [1, 1, 1]} : vector<32x8x16xf32> to vector<32x8x1xf32>
    %42 = vector.extract_strided_slice %0 {offsets = [0, 0, 10], sizes = [32, 8, 1], strides = [1, 1, 1]} : vector<32x8x16xf32> to vector<32x8x1xf32>
    %43 = vector.shape_cast %8 : vector<1x1x64xi1> to vector<1x1x64xi1>
    %44 = vector.broadcast %43 : vector<1x1x64xi1> to vector<32x8x64xi1>
    %45 = vector.shape_cast %41 : vector<32x8x1xf32> to vector<32x8x1xf32>
    %46 = vector.broadcast %45 : vector<32x8x1xf32> to vector<32x8x64xf32>
    %47 = vector.shape_cast %42 : vector<32x8x1xf32> to vector<32x8x1xf32>
    %48 = vector.broadcast %47 : vector<32x8x1xf32> to vector<32x8x64xf32>
    %49 = arith.select %44, %46, %48 : vector<32x8x64xi1>, vector<32x8x64xf32>
    %50 = vector.extract_strided_slice %15 {offsets = [0, 2, 0], sizes = [32, 1, 64], strides = [1, 1, 1]} : vector<32x8x64xf32> to vector<32x1x64xf32>
    %51 = vector.broadcast %50 : vector<32x1x64xf32> to vector<32x8x64xf32>
    %52 = arith.mulf %49, %51 : vector<32x8x64xf32>
    %53 = arith.addf %40, %52 : vector<32x8x64xf32>
    %54 = vector.extract_strided_slice %0 {offsets = [0, 0, 3], sizes = [32, 8, 1], strides = [1, 1, 1]} : vector<32x8x16xf32> to vector<32x8x1xf32>
    %55 = vector.extract_strided_slice %0 {offsets = [0, 0, 11], sizes = [32, 8, 1], strides = [1, 1, 1]} : vector<32x8x16xf32> to vector<32x8x1xf32>
    %56 = vector.shape_cast %8 : vector<1x1x64xi1> to vector<1x1x64xi1>
    %57 = vector.broadcast %56 : vector<1x1x64xi1> to vector<32x8x64xi1>
    %58 = vector.shape_cast %54 : vector<32x8x1xf32> to vector<32x8x1xf32>
    %59 = vector.broadcast %58 : vector<32x8x1xf32> to vector<32x8x64xf32>
    %60 = vector.shape_cast %55 : vector<32x8x1xf32> to vector<32x8x1xf32>
    %61 = vector.broadcast %60 : vector<32x8x1xf32> to vector<32x8x64xf32>
    %62 = arith.select %57, %59, %61 : vector<32x8x64xi1>, vector<32x8x64xf32>
    %63 = vector.extract_strided_slice %15 {offsets = [0, 3, 0], sizes = [32, 1, 64], strides = [1, 1, 1]} : vector<32x8x64xf32> to vector<32x1x64xf32>
    %64 = vector.broadcast %63 : vector<32x1x64xf32> to vector<32x8x64xf32>
    %65 = arith.mulf %62, %64 : vector<32x8x64xf32>
    %66 = arith.addf %53, %65 : vector<32x8x64xf32>
    %67 = vector.extract_strided_slice %0 {offsets = [0, 0, 4], sizes = [32, 8, 1], strides = [1, 1, 1]} : vector<32x8x16xf32> to vector<32x8x1xf32>
    %68 = vector.extract_strided_slice %0 {offsets = [0, 0, 12], sizes = [32, 8, 1], strides = [1, 1, 1]} : vector<32x8x16xf32> to vector<32x8x1xf32>
    %69 = vector.shape_cast %8 : vector<1x1x64xi1> to vector<1x1x64xi1>
    %70 = vector.broadcast %69 : vector<1x1x64xi1> to vector<32x8x64xi1>
    %71 = vector.shape_cast %67 : vector<32x8x1xf32> to vector<32x8x1xf32>
    %72 = vector.broadcast %71 : vector<32x8x1xf32> to vector<32x8x64xf32>
    %73 = vector.shape_cast %68 : vector<32x8x1xf32> to vector<32x8x1xf32>
    %74 = vector.broadcast %73 : vector<32x8x1xf32> to vector<32x8x64xf32>
    %75 = arith.select %70, %72, %74 : vector<32x8x64xi1>, vector<32x8x64xf32>
    %76 = vector.extract_strided_slice %15 {offsets = [0, 4, 0], sizes = [32, 1, 64], strides = [1, 1, 1]} : vector<32x8x64xf32> to vector<32x1x64xf32>
    %77 = vector.broadcast %76 : vector<32x1x64xf32> to vector<32x8x64xf32>
    %78 = arith.mulf %75, %77 : vector<32x8x64xf32>
    %79 = arith.addf %66, %78 : vector<32x8x64xf32>
    %80 = vector.extract_strided_slice %0 {offsets = [0, 0, 5], sizes = [32, 8, 1], strides = [1, 1, 1]} : vector<32x8x16xf32> to vector<32x8x1xf32>
    %81 = vector.extract_strided_slice %0 {offsets = [0, 0, 13], sizes = [32, 8, 1], strides = [1, 1, 1]} : vector<32x8x16xf32> to vector<32x8x1xf32>
    %82 = vector.shape_cast %8 : vector<1x1x64xi1> to vector<1x1x64xi1>
    %83 = vector.broadcast %82 : vector<1x1x64xi1> to vector<32x8x64xi1>
    %84 = vector.shape_cast %80 : vector<32x8x1xf32> to vector<32x8x1xf32>
    %85 = vector.broadcast %84 : vector<32x8x1xf32> to vector<32x8x64xf32>
    %86 = vector.shape_cast %81 : vector<32x8x1xf32> to vector<32x8x1xf32>
    %87 = vector.broadcast %86 : vector<32x8x1xf32> to vector<32x8x64xf32>
    %88 = arith.select %83, %85, %87 : vector<32x8x64xi1>, vector<32x8x64xf32>
    %89 = vector.extract_strided_slice %15 {offsets = [0, 5, 0], sizes = [32, 1, 64], strides = [1, 1, 1]} : vector<32x8x64xf32> to vector<32x1x64xf32>
    %90 = vector.broadcast %89 : vector<32x1x64xf32> to vector<32x8x64xf32>
    %91 = arith.mulf %88, %90 : vector<32x8x64xf32>
    %92 = arith.addf %79, %91 : vector<32x8x64xf32>
    %93 = vector.extract_strided_slice %0 {offsets = [0, 0, 6], sizes = [32, 8, 1], strides = [1, 1, 1]} : vector<32x8x16xf32> to vector<32x8x1xf32>
    %94 = vector.extract_strided_slice %0 {offsets = [0, 0, 14], sizes = [32, 8, 1], strides = [1, 1, 1]} : vector<32x8x16xf32> to vector<32x8x1xf32>
    %95 = vector.shape_cast %8 : vector<1x1x64xi1> to vector<1x1x64xi1>
    %96 = vector.broadcast %95 : vector<1x1x64xi1> to vector<32x8x64xi1>
    %97 = vector.shape_cast %93 : vector<32x8x1xf32> to vector<32x8x1xf32>
    %98 = vector.broadcast %97 : vector<32x8x1xf32> to vector<32x8x64xf32>
    %99 = vector.shape_cast %94 : vector<32x8x1xf32> to vector<32x8x1xf32>
    %100 = vector.broadcast %99 : vector<32x8x1xf32> to vector<32x8x64xf32>
    %101 = arith.select %96, %98, %100 : vector<32x8x64xi1>, vector<32x8x64xf32>
    %102 = vector.extract_strided_slice %15 {offsets = [0, 6, 0], sizes = [32, 1, 64], strides = [1, 1, 1]} : vector<32x8x64xf32> to vector<32x1x64xf32>
    %103 = vector.broadcast %102 : vector<32x1x64xf32> to vector<32x8x64xf32>
    %104 = arith.mulf %101, %103 : vector<32x8x64xf32>
    %105 = arith.addf %92, %104 : vector<32x8x64xf32>
    %106 = vector.extract_strided_slice %0 {offsets = [0, 0, 7], sizes = [32, 8, 1], strides = [1, 1, 1]} : vector<32x8x16xf32> to vector<32x8x1xf32>
    %107 = vector.extract_strided_slice %0 {offsets = [0, 0, 15], sizes = [32, 8, 1], strides = [1, 1, 1]} : vector<32x8x16xf32> to vector<32x8x1xf32>
    %108 = vector.shape_cast %8 : vector<1x1x64xi1> to vector<1x1x64xi1>
    %109 = vector.broadcast %108 : vector<1x1x64xi1> to vector<32x8x64xi1>
    %110 = vector.shape_cast %106 : vector<32x8x1xf32> to vector<32x8x1xf32>
    %111 = vector.broadcast %110 : vector<32x8x1xf32> to vector<32x8x64xf32>
    %112 = vector.shape_cast %107 : vector<32x8x1xf32> to vector<32x8x1xf32>
    %113 = vector.broadcast %112 : vector<32x8x1xf32> to vector<32x8x64xf32>
    %114 = arith.select %109, %111, %113 : vector<32x8x64xi1>, vector<32x8x64xf32>
    %115 = vector.extract_strided_slice %15 {offsets = [0, 7, 0], sizes = [32, 1, 64], strides = [1, 1, 1]} : vector<32x8x64xf32> to vector<32x1x64xf32>
    %116 = vector.broadcast %115 : vector<32x1x64xf32> to vector<32x8x64xf32>
    %117 = arith.mulf %114, %116 : vector<32x8x64xf32>
    %118 = arith.addf %105, %117 : vector<32x8x64xf32>
    %119 = vector.shape_cast %118 : vector<32x8x64xf32> to vector<256x64xf32>
    %120 = arith.truncf %119 : vector<256x64xf32> to vector<256x64xbf16>
    %cst_15 = arith.constant dense<0.000000e+00> : vector<256x128xf32>
    %121 = tpu.matmul %120, %3, %cst_15 {dimension_numbers = #tpu.dot_dimension_numbers<[1], [0], [0], [1], [0, 0, 1, 1], [], []>} : vector<256x64xbf16>, vector<64x128xbf16>, vector<256x128xf32> -> vector<256x128xf32>
    %cst_16 = arith.constant dense<0.000000e+00> : vector<256x128xf32>
    %122 = tpu.matmul %11, %4, %cst_16 {dimension_numbers = #tpu.dot_dimension_numbers<[1], [0], [0], [1], [0, 0, 1, 1], [], []>} : vector<256x32xbf16>, vector<32x128xbf16>, vector<256x128xf32> -> vector<256x128xf32>
    %123 = arith.addf %121, %122 : vector<256x128xf32>
    %124 = vector.broadcast %5 : vector<1x128xf32> to vector<256x128xf32>
    %125 = arith.addf %123, %124 : vector<256x128xf32>
    %126 = vector.extract_strided_slice %125 {offsets = [0, 0], sizes = [256, 32], strides = [1, 1]} : vector<256x128xf32> to vector<256x32xf32>
    %127 = arith.negf %126 : vector<256x32xf32>
    %128 = math.exp %127 : vector<256x32xf32>
    %cst_17 = arith.constant 1.000000e+00 : f32
    %129 = vector.broadcast %cst_17 : f32 to vector<256x32xf32>
    %130 = arith.addf %129, %128 : vector<256x32xf32>
    %131 = arith.divf %129, %130 : vector<256x32xf32>
    %132 = vector.extract_strided_slice %125 {offsets = [0, 32], sizes = [256, 32], strides = [1, 1]} : vector<256x128xf32> to vector<256x32xf32>
    %133 = arith.negf %132 : vector<256x32xf32>
    %134 = math.exp %133 : vector<256x32xf32>
    %cst_18 = arith.constant 1.000000e+00 : f32
    %135 = vector.broadcast %cst_18 : f32 to vector<256x32xf32>
    %136 = arith.addf %135, %134 : vector<256x32xf32>
    %137 = arith.divf %135, %136 : vector<256x32xf32>
    %138 = vector.extract_strided_slice %125 {offsets = [0, 64], sizes = [256, 32], strides = [1, 1]} : vector<256x128xf32> to vector<256x32xf32>
    %139 = vector.extract_strided_slice %125 {offsets = [0, 96], sizes = [256, 32], strides = [1, 1]} : vector<256x128xf32> to vector<256x32xf32>
    %140 = arith.mulf %131, %139 : vector<256x32xf32>
    %141 = arith.addf %138, %140 : vector<256x32xf32>
    %142 = math.tanh %141 : vector<256x32xf32>
    %cst_19 = arith.constant 1.000000e+00 : f32
    %143 = vector.broadcast %cst_19 : f32 to vector<256x32xf32>
    %144 = arith.subf %143, %137 : vector<256x32xf32>
    %145 = arith.mulf %144, %10 : vector<256x32xf32>
    %146 = arith.mulf %137, %142 : vector<256x32xf32>
    %147 = arith.addf %145, %146 : vector<256x32xf32>
    %148 = vector.shape_cast %147 : vector<256x32xf32> to vector<32x8x32xf32>
    %c0_20 = arith.constant 0 : index
    %c0_21 = arith.constant 0 : index
    %c0_22 = arith.constant 0 : index
    %149 = vector.load %arg8[%c0_20, %c0_21, %c0_22] : memref<32x8x32xf32, #tpu.memory_space<vmem>>, vector<32x8x32xf32>
    tpu.vector_store %arg8[%c0_20, %c0_21, %c0_22], %148 {strides = array<i32>} : memref<32x8x32xf32, #tpu.memory_space<vmem>>, vector<32x8x32xf32>,
    return
  }
  func.func @transform_0(%arg0: i32) -> (i32, i32, i32) {
    %c0_i32 = arith.constant 0 : i32
    %c0_i32_0 = arith.constant 0 : i32
    %c0_i32_1 = arith.constant 0 : i32
    return %arg0, %c0_i32, %c0_i32_0 : i32, i32, i32
  }
  func.func @transform_1(%arg0: i32) -> (i32, i32, i32) {
    %c0_i32 = arith.constant 0 : i32
    %c0_i32_0 = arith.constant 0 : i32
    %c0_i32_1 = arith.constant 0 : i32
    return %arg0, %c0_i32, %c0_i32_0 : i32, i32, i32
  }
  func.func @transform_2(%arg0: i32) -> (i32, i32) {
    %c0_i32 = arith.constant 0 : i32
    %c0_i32_0 = arith.constant 0 : i32
    %c0_i32_1 = arith.constant 0 : i32
    return %c0_i32, %c0_i32_0 : i32, i32
  }
  func.func @transform_3(%arg0: i32) -> (i32, i32) {
    %c0_i32 = arith.constant 0 : i32
    %c0_i32_0 = arith.constant 0 : i32
    %c0_i32_1 = arith.constant 0 : i32
    return %c0_i32, %c0_i32_0 : i32, i32
  }
  func.func @transform_4(%arg0: i32) -> (i32, i32) {
    %c0_i32 = arith.constant 0 : i32
    %c0_i32_0 = arith.constant 0 : i32
    %c0_i32_1 = arith.constant 0 : i32
    return %c0_i32, %c0_i32_0 : i32, i32
  }
  func.func @transform_5(%arg0: i32) -> (i32, i32) {
    %c0_i32 = arith.constant 0 : i32
    %c0_i32_0 = arith.constant 0 : i32
    %c0_i32_1 = arith.constant 0 : i32
    return %c0_i32, %c0_i32_0 : i32, i32
  }
  func.func @transform_6(%arg0: i32) -> (i32, i32) {
    %c0_i32 = arith.constant 0 : i32
    %c0_i32_0 = arith.constant 0 : i32
    %c0_i32_1 = arith.constant 0 : i32
    return %c0_i32, %c0_i32_0 : i32, i32
  }
  func.func @transform_7(%arg0: i32) -> (i32, i32, i32) {
    %c0_i32 = arith.constant 0 : i32
    %c0_i32_0 = arith.constant 0 : i32
    %c0_i32_1 = arith.constant 0 : i32
    return %arg0, %c0_i32, %c0_i32_0 : i32, i32, i32
  }
}

</mosaic_0001>

<llo_original>
// kernel: gnn_forward.1
$region0: #{gnn_forward.1}
  #allocation0 [shape = 'u32[]', space=smem, size = 0x4, offset = 0x4, fixed_abs, tag = 'smem constant byte address 0x4 - core index']
  #allocation1 [shape = 'u32[72,128]{1,0:T(1,128)}', space=vmem, size = 0x9000, scoped, tag = 'internal scratch']
  %s0 = inlined_call_operand.vmem [shape: f32[64,8,16], index: 0, kind: input, shape index: {}]
  %s1 = inlined_call_operand.vmem [shape: f32[64,8,32], index: 1, kind: input, shape index: {}]
  %s2 = inlined_call_operand.vmem [shape: bf16[32,64], index: 2, kind: input, shape index: {}]
  %s3 = inlined_call_operand.vmem [shape: f32[1,64], index: 3, kind: input, shape index: {}]
  %s4 = inlined_call_operand.vmem [shape: bf16[64,128], index: 4, kind: input, shape index: {}]
  %s5 = inlined_call_operand.vmem [shape: bf16[32,128], index: 5, kind: input, shape index: {}]
  %s6 = inlined_call_operand.vmem [shape: f32[1,128], index: 6, kind: input, shape index: {}]
  %s7 = inlined_call_operand.vmem [shape: f32[64,8,32], index: 7, kind: output, shape index: {}]
  %s8 = sld [smem:[#allocation0]]
  $region61: #{gnn_forward.1} parent=0
    _
  %s10 = ssub.s32 1, %s8
  %s11 = scalar_select 0, %s10, %s8
  loop: start=0, step=1, limit=4
  $region2: #{gnn_forward.1} parent=0 // loop_pre_header
    _
  $region3: #{gnn_forward.1} parent=0 // loop_header
    %s13 = sphi 0, %s17
    %p14 = scmp.ge.s32.totalorder %s13, 4
    %s23 = sphi 0, %s25
    %s26 = sphi 0, %s23
    %s27 = sphi 0, %s26
    %s43 = sphi 0, %s27
    %s49 = sphi 0, %s51
    %s52 = sphi 0, %s49
    %s53 = sphi 0, %s52
    %s69 = sphi 0, %s53
    %s73 = sphi 0, %s73
    %s75 = sphi 0, %s73
    %s76 = sphi 0, %s75
    %s90 = sphi 0, %s76
    %s94 = sphi 0, %s94
    %s96 = sphi 0, %s94
    %s97 = sphi 0, %s96
    %s111 = sphi 0, %s97
    %s115 = sphi 0, %s115
    %s117 = sphi 0, %s115
    %s118 = sphi 0, %s117
    %s132 = sphi 0, %s118
    %s136 = sphi 0, %s136
    %s138 = sphi 0, %s136
    %s139 = sphi 0, %s138
    %s153 = sphi 0, %s139
    %s157 = sphi 0, %s157
    %s159 = sphi 0, %s157
    %s160 = sphi 0, %s159
    %s174 = sphi 0, %s160
    %s180 = sphi 0, %s182
    %s183 = sphi 0, %s180
    %s184 = sphi 0, %s183
    %s200 = sphi 0, %s184
  $region4: #{gnn_forward.1} parent=0 // loop_header_branch
    %16 = sbr.rel (%p14) target = $region8
  $region5: #{gnn_forward.1} parent=0 // loop_body
    %s18 = ssub.s32 %s13, 1
    %s19 = ssub.s32 %s13, 2
    %s20 = sadd.s32 %s13, 1
    %s21 = ssub.s32 %s13, %s20
    %p22 = scmp.eq.s32.totalorder %s21, 0
    %s24 = sadd.s32 %s23, 1
    %s25 = scalar_select %p22, %s23, %s24
    %p28 = pneg %p22
    %p29 = scmp.eq.s32.totalorder %s13, 1
    %p30 = por %p28, %p29
    %p31 = scmp.ne.s32.totalorder %s23, %s26
    %p32 = scmp.eq.s32.totalorder %s13, 0
    %p33 = por %p31, %p32
    %p34 = scmp.ne.s32.totalorder %s23, %s26
    %p35 = scmp.eq.s32.totalorder %s18, 1
    %p36 = por %p34, %p35
    %p37 = scmp.ne.s32.totalorder %s26, %s27
    %p38 = scmp.eq.s32.totalorder %s18, 0
    %p39 = por %p37, %p38
    %p40 = scmp.ne.s32.totalorder %s26, %s27
    %p41 = scmp.eq.s32.totalorder %s19, 1
    %p42 = por %p40, %p41
    %p44 = scmp.ne.s32.totalorder %s27, %s43
    %p45 = scmp.eq.s32.totalorder %s19, 0
    %p46 = por %p44, %p45
    %s47 = ssub.s32 %s13, %s20
    %p48 = scmp.eq.s32.totalorder %s47, 0
    %s50 = sadd.s32 %s49, 1
    %s51 = scalar_select %p48, %s49, %s50
    %p54 = pneg %p48
    %p55 = scmp.eq.s32.totalorder %s13, 1
    %p56 = por %p54, %p55
    %p57 = scmp.ne.s32.totalorder %s49, %s52
    %p58 = scmp.eq.s32.totalorder %s13, 0
    %p59 = por %p57, %p58
    %p60 = scmp.ne.s32.totalorder %s49, %s52
    %p61 = scmp.eq.s32.totalorder %s18, 1
    %p62 = por %p60, %p61
    %p63 = scmp.ne.s32.totalorder %s52, %s53
    %p64 = scmp.eq.s32.totalorder %s18, 0
    %p65 = por %p63, %p64
    %p66 = scmp.ne.s32.totalorder %s52, %s53
    %p67 = scmp.eq.s32.totalorder %s19, 1
    %p68 = por %p66, %p67
    %p70 = scmp.ne.s32.totalorder %s53, %s69
    %p71 = scmp.eq.s32.totalorder %s19, 0
    %p72 = por %p70, %p71
    %s74 = sadd.s32 %s73, 1
    %p77 = scmp.eq.s32.totalorder %s13, 1
    %p78 = scmp.ne.s32.totalorder %s73, %s75
    %p79 = scmp.eq.s32.totalorder %s13, 0
    %p80 = por %p78, %p79
    %p81 = scmp.ne.s32.totalorder %s73, %s75
    %p82 = scmp.eq.s32.totalorder %s18, 1
    %p83 = por %p81, %p82
    %p84 = scmp.ne.s32.totalorder %s75, %s76
    %p85 = scmp.eq.s32.totalorder %s18, 0
    %p86 = por %p84, %p85
    %p87 = scmp.ne.s32.totalorder %s75, %s76
    %p88 = scmp.eq.s32.totalorder %s19, 1
    %p89 = por %p87, %p88
    %p91 = scmp.ne.s32.totalorder %s76, %s90
    %p92 = scmp.eq.s32.totalorder %s19, 0
    %p93 = por %p91, %p92
    %s95 = sadd.s32 %s94, 1
    %p98 = scmp.eq.s32.totalorder %s13, 1
    %p99 = scmp.ne.s32.totalorder %s94, %s96
    %p100 = scmp.eq.s32.totalorder %s13, 0
    %p101 = por %p99, %p100
    %p102 = scmp.ne.s32.totalorder %s94, %s96
    %p103 = scmp.eq.s32.totalorder %s18, 1
    %p104 = por %p102, %p103
    %p105 = scmp.ne.s32.totalorder %s96, %s97
    %p106 = scmp.eq.s32.totalorder %s18, 0
    %p107 = por %p105, %p106
    %p108 = scmp.ne.s32.totalorder %s96, %s97
    %p109 = scmp.eq.s32.totalorder %s19, 1
    %p110 = por %p108, %p109
    %p112 = scmp.ne.s32.totalorder %s97, %s111
    %p113 = scmp.eq.s32.totalorder %s19, 0
    %p114 = por %p112, %p113
    %s116 = sadd.s32 %s115, 1
    %p119 = scmp.eq.s32.totalorder %s13, 1
    %p120 = scmp.ne.s32.totalorder %s115, %s117
    %p121 = scmp.eq.s32.totalorder %s13, 0
    %p122 = por %p120, %p121
    %p123 = scmp.ne.s32.totalorder %s115, %s117
    %p124 = scmp.eq.s32.totalorder %s18, 1
    %p125 = por %p123, %p124
    %p126 = scmp.ne.s32.totalorder %s117, %s118
    %p127 = scmp.eq.s32.totalorder %s18, 0
    %p128 = por %p126, %p127
    %p129 = scmp.ne.s32.totalorder %s117, %s118
    %p130 = scmp.eq.s32.totalorder %s19, 1
    %p131 = por %p129, %p130
    %p133 = scmp.ne.s32.totalorder %s118, %s132
    %p134 = scmp.eq.s32.totalorder %s19, 0
    %p135 = por %p133, %p134
    %s137 = sadd.s32 %s136, 1
    %p140 = scmp.eq.s32.totalorder %s13, 1
    %p141 = scmp.ne.s32.totalorder %s136, %s138
    %p142 = scmp.eq.s32.totalorder %s13, 0
    %p143 = por %p141, %p142
    %p144 = scmp.ne.s32.totalorder %s136, %s138
    %p145 = scmp.eq.s32.totalorder %s18, 1
    %p146 = por %p144, %p145
    %p147 = scmp.ne.s32.totalorder %s138, %s139
    %p148 = scmp.eq.s32.totalorder %s18, 0
    %p149 = por %p147, %p148
    %p150 = scmp.ne.s32.totalorder %s138, %s139
    %p151 = scmp.eq.s32.totalorder %s19, 1
    %p152 = por %p150, %p151
    %p154 = scmp.ne.s32.totalorder %s139, %s153
    %p155 = scmp.eq.s32.totalorder %s19, 0
    %p156 = por %p154, %p155
    %s158 = sadd.s32 %s157, 1
    %p161 = scmp.eq.s32.totalorder %s13, 1
    %p162 = scmp.ne.s32.totalorder %s157, %s159
    %p163 = scmp.eq.s32.totalorder %s13, 0
    %p164 = por %p162, %p163
    %p165 = scmp.ne.s32.totalorder %s157, %s159
    %p166 = scmp.eq.s32.totalorder %s18, 1
    %p167 = por %p165, %p166
    %p168 = scmp.ne.s32.totalorder %s159, %s160
    %p169 = scmp.eq.s32.totalorder %s18, 0
    %p170 = por %p168, %p169
    %p171 = scmp.ne.s32.totalorder %s159, %s160
    %p172 = scmp.eq.s32.totalorder %s19, 1
    %p173 = por %p171, %p172
    %p175 = scmp.ne.s32.totalorder %s160, %s174
    %p176 = scmp.eq.s32.totalorder %s19, 0
    %p177 = por %p175, %p176
    %s178 = ssub.s32 %s13, %s20
    %p179 = scmp.eq.s32.totalorder %s178, 0
    %s181 = sadd.s32 %s180, 1
    %s182 = scalar_select %p179, %s180, %s181
    %p185 = pneg %p179
    %p186 = scmp.eq.s32.totalorder %s13, 1
    %p187 = por %p185, %p186
    %p188 = scmp.ne.s32.totalorder %s180, %s183
    %p189 = scmp.eq.s32.totalorder %s13, 0
    %p190 = por %p188, %p189
    %p191 = scmp.ne.s32.totalorder %s180, %s183
    %p192 = scmp.eq.s32.totalorder %s18, 1
    %p193 = por %p191, %p192
    %p194 = scmp.ne.s32.totalorder %s183, %s184
    %p195 = scmp.eq.s32.totalorder %s18, 0
    %p196 = por %p194, %p195
    %p197 = scmp.ne.s32.totalorder %s183, %s184
    %p198 = scmp.eq.s32.totalorder %s19, 1
    %p199 = por %p197, %p198
    %p201 = scmp.ne.s32.totalorder %s184, %s200
    %p202 = scmp.eq.s32.totalorder %s19, 0
    %p203 = por %p201, %p202
    %p204 = scmp.le.s32.totalorder 1, %s13
    %p205 = scmp.lt.s32.totalorder %s13, 3
    %p206 = pnand %p204, %p205
    %p207 = pneg %p206
    // Predicated region
    $region9: #{gnn_forward.1} parent=5 // pred_check
      _
    $region10: #{gnn_forward.1} parent=5 // pred_check_branch
      %209 = sbr.rel (%p206) target = $region12
    $region11: #{gnn_forward.1} parent=5 // pred_region
      %s210 = ssub.s32 %s13, 1
      // Predicated region
      $region13: #{gnn_forward.1} parent=11 // pred_check
        %p211 = pneg %p86
      $region14: #{gnn_forward.1} parent=11 // pred_check_branch
        %213 = sbr.rel (%p211) target = $region16
      $region15: #{gnn_forward.1} parent=11 // pred_region
        _
      $region16: #{gnn_forward.1} parent=11 // pred_fallthru
        _
      // Predicated region
      $region17: #{gnn_forward.1} parent=11 // pred_check
        %p214 = pneg %p107
      $region18: #{gnn_forward.1} parent=11 // pred_check_branch
        %216 = sbr.rel (%p214) target = $region20
      $region19: #{gnn_forward.1} parent=11 // pred_region
        _
      $region20: #{gnn_forward.1} parent=11 // pred_fallthru
        _
      // Predicated region
      $region21: #{gnn_forward.1} parent=11 // pred_check
        %p217 = pneg %p128
      $region22: #{gnn_forward.1} parent=11 // pred_check_branch
        %219 = sbr.rel (%p217) target = $region24
      $region23: #{gnn_forward.1} parent=11 // pred_region
        _
      $region24: #{gnn_forward.1} parent=11 // pred_fallthru
        _
      // Predicated region
      $region25: #{gnn_forward.1} parent=11 // pred_check
        %p220 = pneg %p149
      $region26: #{gnn_forward.1} parent=11 // pred_check_branch
        %222 = sbr.rel (%p220) target = $region28
      $region27: #{gnn_forward.1} parent=11 // pred_region
        _
      $region28: #{gnn_forward.1} parent=11 // pred_fallthru
        _
      // Predicated region
      $region29: #{gnn_forward.1} parent=11 // pred_check
        %p223 = pneg %p170
      $region30: #{gnn_forward.1} parent=11 // pred_check_branch
        %225 = sbr.rel (%p223) target = $region32
      $region31: #{gnn_forward.1} parent=11 // pred_region
        _
      $region32: #{gnn_forward.1} parent=11 // pred_fallthru
        _
    $region12: #{gnn_forward.1} parent=5 // pred_fallthru
      _
    %p226 = scmp.lt.s32.totalorder %s13, 2
    // Predicated region
    $region33: #{gnn_forward.1} parent=5 // pred_check
      %p227 = pneg %p226
    $region34: #{gnn_forward.1} parent=5 // pred_check_branch
      %229 = sbr.rel (%p227) target = $region36
    $region35: #{gnn_forward.1} parent=5 // pred_region
      // Predicated region
      $region37: #{gnn_forward.1} parent=35 // pred_check
        %p230 = pneg %p33
      $region38: #{gnn_forward.1} parent=35 // pred_check_branch
        %232 = sbr.rel (%p230) target = $region40
      $region39: #{gnn_forward.1} parent=35 // pred_region
        %s233 = smul.u32 32, %s13
        %p234 = scmp.lt.s32.totalorder %s233, 63
        %s235 = scalar_select %p234, %s233, 63
        %s236 = smul.addr %s235, 8
        %s237 = scalar_lea.vmem %s0, %s236
        %s238 = smul.u32 32, %s13
      $region40: #{gnn_forward.1} parent=35 // pred_fallthru
        _
      // Predicated region
      $region41: #{gnn_forward.1} parent=35 // pred_check
        %p239 = pneg %p59
      $region42: #{gnn_forward.1} parent=35 // pred_check_branch
        %241 = sbr.rel (%p239) target = $region44
      $region43: #{gnn_forward.1} parent=35 // pred_region
        %s242 = smul.u32 32, %s13
        %p243 = scmp.lt.s32.totalorder %s242, 63
        %s244 = scalar_select %p243, %s242, 63
        %s245 = smul.addr %s244, 8
        %s246 = scalar_lea.vmem %s1, %s245
        %s247 = smul.u32 32, %s13
      $region44: #{gnn_forward.1} parent=35 // pred_fallthru
        _
    $region36: #{gnn_forward.1} parent=5 // pred_fallthru
      _
    %p248 = scmp.le.s32.totalorder 1, %s13
    %p249 = scmp.lt.s32.totalorder %s13, 3
    %p250 = pnand %p248, %p249
    %p251 = pneg %p250
    // Predicated region
    $region45: #{gnn_forward.1} parent=5 // pred_check
      _
    $region46: #{gnn_forward.1} parent=5 // pred_check_branch
      %253 = sbr.rel (%p250) target = $region48
    $region47: #{gnn_forward.1} parent=5 // pred_region
      %s254 = ssub.s32 %s13, 1
      %s255 = smul.u32 32, %s18
      %p256 = scmp.lt.s32.totalorder %s255, 63
      %s257 = scalar_select %p256, %s255, 63
      %s258 = smul.addr %s257, 8
      %s259 = scalar_lea.vmem %s0, %s258
      %p260 = pneg %p39
      %p261 = pneg %p36
      %s262 = smul.u32 32, %s18
      %p263 = scmp.lt.s32.totalorder %s262, 63
      %s264 = scalar_select %p263, %s262, 63
      %s265 = smul.addr %s264, 8
      %s266 = scalar_lea.vmem %s1, %s265
      %p267 = pneg %p65
      %p268 = pneg %p62
      %p269 = pneg %p86
      %p270 = pneg %p83
      %p271 = pneg %p107
      %p272 = pneg %p104
      %p273 = pneg %p128
      %p274 = pneg %p125
      %p275 = pneg %p149
      %p276 = pneg %p146
      %p277 = pneg %p170
      %p278 = pneg %p167
      %p279 = pneg %p196
      %p280 = pneg %p193
      %s281 = smul.u32 32, %s18
      %p282 = scmp.lt.s32.totalorder %s281, 63
      %s283 = scalar_select %p282, %s281, 63
      %s284 = smul.addr %s283, 8
      %s285 = scalar_lea.vmem %s7, %s284
      %s286 = smul.u32 32, %s18
      %p287 = scmp.lt.s32.totalorder %s286, 63
      %s288 = scalar_select %p287, %s286, 63
      %s289 = smul.addr %s288, 8
      %s290 = scalar_lea.vmem %s0, %s289
      %s291 = smul.u32 32, %s18
      %s292 = smul.u32 32, %s18
      %p293 = scmp.lt.s32.totalorder %s292, 63
      %s294 = scalar_select %p293, %s292, 63
      %s295 = smul.addr %s294, 8
      %s296 = scalar_lea.vmem %s1, %s295
      %s297 = smul.u32 32, %s18
      %s298 = smul.u32 32, %s18
      %p299 = scmp.lt.s32.totalorder %s298, 63
      %s300 = scalar_select %p299, %s298, 63
      %s301 = smul.addr %s300, 8
      %s302 = scalar_lea.vmem %s7, %s301
      %s303 = smul.u32 32, %s18
      %v305 = vld [vmem:[%s290] sm:$0xff]
      %v306 = vld [vmem:[%s290 + $0x8] sm:$0xff]
      %v307 = vld [vmem:[%s290 + $0x10] sm:$0xff]
      %v308 = vld [vmem:[%s290 + $0x18] sm:$0xff]
      %v309 = vld [vmem:[%s290 + $0x20] sm:$0xff]
      %v310 = vld [vmem:[%s290 + $0x28] sm:$0xff]
      %v311 = vld [vmem:[%s290 + $0x30] sm:$0xff]
      %v312 = vld [vmem:[%s290 + $0x38] sm:$0xff]
      %v313 = vld [vmem:[%s290 + $0x40] sm:$0xff]
      %v314 = vld [vmem:[%s290 + $0x48] sm:$0xff]
      %v315 = vld [vmem:[%s290 + $0x50] sm:$0xff]
      %v316 = vld [vmem:[%s290 + $0x58] sm:$0xff]
      %v317 = vld [vmem:[%s290 + $0x60] sm:$0xff]
      %v318 = vld [vmem:[%s290 + $0x68] sm:$0xff]
      %v319 = vld [vmem:[%s290 + $0x70] sm:$0xff]
      %v320 = vld [vmem:[%s290 + $0x78] sm:$0xff]
      %v321 = vld [vmem:[%s290 + $0x80] sm:$0xff]
      %v322 = vld [vmem:[%s290 + $0x88] sm:$0xff]
      %v323 = vld [vmem:[%s290 + $0x90] sm:$0xff]
      %v324 = vld [vmem:[%s290 + $0x98] sm:$0xff]
      %v325 = vld [vmem:[%s290 + $0xa0] sm:$0xff]
      %v326 = vld [vmem:[%s290 + $0xa8] sm:$0xff]
      %v327 = vld [vmem:[%s290 + $0xb0] sm:$0xff]
      %v328 = vld [vmem:[%s290 + $0xb8] sm:$0xff]
      %v329 = vld [vmem:[%s290 + $0xc0] sm:$0xff]
      %v330 = vld [vmem:[%s290 + $0xc8] sm:$0xff]
      %v331 = vld [vmem:[%s290 + $0xd0] sm:$0xff]
      %v332 = vld [vmem:[%s290 + $0xd8] sm:$0xff]
      %v333 = vld [vmem:[%s290 + $0xe0] sm:$0xff]
      %v334 = vld [vmem:[%s290 + $0xe8] sm:$0xff]
      %v335 = vld [vmem:[%s290 + $0xf0] sm:$0xff]
      %v336 = vld [vmem:[%s290 + $0xf8] sm:$0xff]
      %v337 = vld [vmem:[%s2] sm:$0xf]
      %v338 = vld [vmem:[%s2 + $0x4] sm:$0xf]
      %v339 = vld [vmem:[%s2 + $0x8] sm:$0xf]
      %v340 = vld [vmem:[%s2 + $0xc] sm:$0xf]
      %v341 = vld [vmem:[%s3] sm:$0x1]
      %v342 = vld [vmem:[%s4] sm:$0xf]
      %v343 = vld [vmem:[%s4 + $0x4] sm:$0xf]
      %v344 = vld [vmem:[%s4 + $0x8] sm:$0xf]
      %v345 = vld [vmem:[%s4 + $0xc] sm:$0xf]
      %v346 = vld [vmem:[%s4 + $0x10] sm:$0xf]
      %v347 = vld [vmem:[%s4 + $0x14] sm:$0xf]
      %v348 = vld [vmem:[%s4 + $0x18] sm:$0xf]
      %v349 = vld [vmem:[%s4 + $0x1c] sm:$0xf]
      %v350 = vld [vmem:[%s5] sm:$0xf]
      %v351 = vld [vmem:[%s5 + $0x4] sm:$0xf]
      %v352 = vld [vmem:[%s5 + $0x8] sm:$0xf]
      %v353 = vld [vmem:[%s5 + $0xc] sm:$0xf]
      %v354 = vld [vmem:[%s6] sm:$0x1]
      %v355 = vlaneseq
      %v356 = vand.u32 %v355, 127
      %vm357 = vcmp.lt.s32.totalorder %v356, 32
      %v358 = vld [vmem:[%s296] sm:$0xff]
      %v359 = vld [vmem:[%s296 + $0x8] sm:$0xff]
      %v360 = vld [vmem:[%s296 + $0x10] sm:$0xff]
      %v361 = vld [vmem:[%s296 + $0x18] sm:$0xff]
      %v362 = vld [vmem:[%s296 + $0x20] sm:$0xff]
      %v363 = vld [vmem:[%s296 + $0x28] sm:$0xff]
      %v364 = vld [vmem:[%s296 + $0x30] sm:$0xff]
      %v365 = vld [vmem:[%s296 + $0x38] sm:$0xff]
      %v366 = vld [vmem:[%s296 + $0x40] sm:$0xff]
      %v367 = vld [vmem:[%s296 + $0x48] sm:$0xff]
      %v368 = vld [vmem:[%s296 + $0x50] sm:$0xff]
      %v369 = vld [vmem:[%s296 + $0x58] sm:$0xff]
      %v370 = vld [vmem:[%s296 + $0x60] sm:$0xff]
      %v371 = vld [vmem:[%s296 + $0x68] sm:$0xff]
      %v372 = vld [vmem:[%s296 + $0x70] sm:$0xff]
      %v373 = vld [vmem:[%s296 + $0x78] sm:$0xff]
      %v374 = vld [vmem:[%s296 + $0x80] sm:$0xff]
      %v375 = vld [vmem:[%s296 + $0x88] sm:$0xff]
      %v376 = vld [vmem:[%s296 + $0x90] sm:$0xff]
      %v377 = vld [vmem:[%s296 + $0x98] sm:$0xff]
      %v378 = vld [vmem:[%s296 + $0xa0] sm:$0xff]
      %v379 = vld [vmem:[%s296 + $0xa8] sm:$0xff]
      %v380 = vld [vmem:[%s296 + $0xb0] sm:$0xff]
      %v381 = vld [vmem:[%s296 + $0xb8] sm:$0xff]
      %v382 = vld [vmem:[%s296 + $0xc0] sm:$0xff]
      %v383 = vld [vmem:[%s296 + $0xc8] sm:$0xff]
      %v384 = vld [vmem:[%s296 + $0xd0] sm:$0xff]
      %v385 = vld [vmem:[%s296 + $0xd8] sm:$0xff]
      %v386 = vld [vmem:[%s296 + $0xe0] sm:$0xff]
      %v387 = vld [vmem:[%s296 + $0xe8] sm:$0xff]
      %v388 = vld [vmem:[%s296 + $0xf0] sm:$0xff]
      %v389 = vld [vmem:[%s296 + $0xf8] sm:$0xff]
      %v390 = vpack.c.bf16 %v359, %v358
      %v391 = vpack.c.bf16 %v361, %v360
      %v392 = vpack.c.bf16 %v363, %v362
      %v393 = vpack.c.bf16 %v365, %v364
      %v394 = vpack.c.bf16 %v367, %v366
      %v395 = vpack.c.bf16 %v369, %v368
      %v396 = vpack.c.bf16 %v371, %v370
      %v397 = vpack.c.bf16 %v373, %v372
      %v398 = vpack.c.bf16 %v375, %v374
      %v399 = vpack.c.bf16 %v377, %v376
      %v400 = vpack.c.bf16 %v379, %v378
      %v401 = vpack.c.bf16 %v381, %v380
      %v402 = vpack.c.bf16 %v383, %v382
      %v403 = vpack.c.bf16 %v385, %v384
      %v404 = vpack.c.bf16 %v387, %v386
      %v405 = vpack.c.bf16 %v389, %v388
      %v407 = vperm.slane %v341, 0
      %v413 = vunpack.c.l.b16 %v337
      %v414 = vunpack.c.l.b16 %v338
      %v415 = vunpack.c.l.b16 %v339
      %v416 = vunpack.c.l.b16 %v340
      %v417 = vpack.c.b16 %v414, %v413
      %v418 = vpack.c.b16 %v416, %v415
      %vm421 = vcmask 261120
      %v423 = vsel %vm421, %v390, 0
      %v426 = vsel %vm421, %v391, 0
      %v429 = vsel %vm421, %v392, 0
      %v432 = vsel %vm421, %v393, 0
      %v435 = vsel %vm421, %v394, 0
      %v438 = vsel %vm421, %v395, 0
      %v441 = vsel %vm421, %v396, 0
      %v444 = vsel %vm421, %v397, 0
      %v447 = vsel %vm421, %v398, 0
      %v450 = vsel %vm421, %v399, 0
      %v453 = vsel %vm421, %v400, 0
      %v456 = vsel %vm421, %v401, 0
      %v459 = vsel %vm421, %v402, 0
      %v462 = vsel %vm421, %v403, 0
      %v465 = vsel %vm421, %v404, 0
      %v468 = vsel %vm421, %v405, 0
      %470 = vmatpush.bf16.msra.mxu0 0
      %471 = vmatpush.bf16.msra.mxu0 0
      %472 = vmatpush.bf16.msra.mxu0 0
      %473 = vmatpush.bf16.msra.mxu0 0
      %474 = vmatpush.bf16.msra.mxu0 0
      %475 = vmatpush.bf16.msra.mxu0 0
      %476 = vmatpush.bf16.msra.mxu0 %v418
      %477 = vmatpush.bf16.msra.mxu0 %v417
      %478 = vmatmul.bf16.gmra.mxu0 %v423
      %v479 = vpop.f32.mrf.mxu0
      %v480 = vadd.f32 %v407, %v479
      %v481 = vpop.f32.mrf.mxu0
      %v482 = vadd.f32 %v407, %v481
      %483 = vmatmul.bf16.gmra.mxu0 %v426
      %v484 = vpop.f32.mrf.mxu0
      %v485 = vadd.f32 %v407, %v484
      %v486 = vpop.f32.mrf.mxu0
      %v487 = vadd.f32 %v407, %v486
      %488 = vmatmul.bf16.gmra.mxu0 %v429
      %v489 = vpop.f32.mrf.mxu0
      %v490 = vadd.f32 %v407, %v489
      %v491 = vpop.f32.mrf.mxu0
      %v492 = vadd.f32 %v407, %v491
      %493 = vmatmul.bf16.gmra.mxu0 %v432
      %v494 = vpop.f32.mrf.mxu0
      %v495 = vadd.f32 %v407, %v494
      %v496 = vpop.f32.mrf.mxu0
      %v497 = vadd.f32 %v407, %v496
      %498 = vmatmul.bf16.gmra.mxu0 %v435
      %v499 = vpop.f32.mrf.mxu0
      %v500 = vadd.f32 %v407, %v499
      %v501 = vpop.f32.mrf.mxu0
      %v502 = vadd.f32 %v407, %v501
      %503 = vmatmul.bf16.gmra.mxu0 %v438
      %v504 = vpop.f32.mrf.mxu0
      %v505 = vadd.f32 %v407, %v504
      %v506 = vpop.f32.mrf.mxu0
      %v507 = vadd.f32 %v407, %v506
      %508 = vmatmul.bf16.gmra.mxu0 %v441
      %v509 = vpop.f32.mrf.mxu0
      %v510 = vadd.f32 %v407, %v509
      %v511 = vpop.f32.mrf.mxu0
      %v512 = vadd.f32 %v407, %v511
      %513 = vmatmul.bf16.gmra.mxu0 %v444
      %v514 = vpop.f32.mrf.mxu0
      %v515 = vadd.f32 %v407, %v514
      %v516 = vpop.f32.mrf.mxu0
      %v517 = vadd.f32 %v407, %v516
      %518 = vmatmul.bf16.gmra.mxu0 %v447
      %v519 = vpop.f32.mrf.mxu0
      %v520 = vadd.f32 %v407, %v519
      %v521 = vpop.f32.mrf.mxu0
      %v522 = vadd.f32 %v407, %v521
      %523 = vmatmul.bf16.gmra.mxu0 %v450
      %v524 = vpop.f32.mrf.mxu0
      %v525 = vadd.f32 %v407, %v524
      %v526 = vpop.f32.mrf.mxu0
      %v527 = vadd.f32 %v407, %v526
      %528 = vmatmul.bf16.gmra.mxu0 %v453
      %v529 = vpop.f32.mrf.mxu0
      %v530 = vadd.f32 %v407, %v529
      %v531 = vpop.f32.mrf.mxu0
      %v532 = vadd.f32 %v407, %v531
      %533 = vmatmul.bf16.gmra.mxu0 %v456
      %v534 = vpop.f32.mrf.mxu0
      %v535 = vadd.f32 %v407, %v534
      %v536 = vpop.f32.mrf.mxu0
      %v537 = vadd.f32 %v407, %v536
      %538 = vmatmul.bf16.gmra.mxu0 %v459
      %v539 = vpop.f32.mrf.mxu0
      %v540 = vadd.f32 %v407, %v539
      %v541 = vpop.f32.mrf.mxu0
      %v542 = vadd.f32 %v407, %v541
      %543 = vmatmul.bf16.gmra.mxu0 %v462
      %v544 = vpop.f32.mrf.mxu0
      %v545 = vadd.f32 %v407, %v544
      %v546 = vpop.f32.mrf.mxu0
      %v547 = vadd.f32 %v407, %v546
      %548 = vmatmul.bf16.gmra.mxu0 %v465
      %v549 = vpop.f32.mrf.mxu0
      %v550 = vadd.f32 %v407, %v549
      %v551 = vpop.f32.mrf.mxu0
      %v552 = vadd.f32 %v407, %v551
      %553 = vmatmul.bf16.gmra.mxu0 %v468
      %v554 = vpop.f32.mrf.mxu0
      %v555 = vadd.f32 %v407, %v554
      %v556 = vpop.f32.mrf.mxu0
      %v557 = vadd.f32 %v407, %v556
      %558 = vdwg.mxu0
      %v559 = vsel %vm357, 1, 0
      %vm560 = vcmp.eq.s32.totalorder %v559, 1
      %562 = vset.pattern.permute.xlu0 0
      %563 = vperm.xlu0 %562, %v305
      %v564 = vpop.permute.xlu0 %563
      %567 = vset.pattern.permute.xlu0 0
      %568 = vperm.xlu0 %567, %v306
      %v569 = vpop.permute.xlu0 %568
      %572 = vset.pattern.permute.xlu0 0
      %573 = vperm.xlu0 %572, %v307
      %v574 = vpop.permute.xlu0 %573
      %577 = vset.pattern.permute.xlu0 0
      %578 = vperm.xlu0 %577, %v308
      %v579 = vpop.permute.xlu0 %578
      %582 = vset.pattern.permute.xlu0 0
      %583 = vperm.xlu0 %582, %v309
      %v584 = vpop.permute.xlu0 %583
      %587 = vset.pattern.permute.xlu0 0
      %588 = vperm.xlu0 %587, %v310
      %v589 = vpop.permute.xlu0 %588
      %592 = vset.pattern.permute.xlu0 0
      %593 = vperm.xlu0 %592, %v311
      %v594 = vpop.permute.xlu0 %593
      %597 = vset.pattern.permute.xlu0 0
      %598 = vperm.xlu0 %597, %v312
      %v599 = vpop.permute.xlu0 %598
      %602 = vset.pattern.permute.xlu0 0
      %603 = vperm.xlu0 %602, %v313
      %v604 = vpop.permute.xlu0 %603
      %607 = vset.pattern.permute.xlu0 0
      %608 = vperm.xlu0 %607, %v314
      %v609 = vpop.permute.xlu0 %608
      %612 = vset.pattern.permute.xlu0 0
      %613 = vperm.xlu0 %612, %v315
      %v614 = vpop.permute.xlu0 %613
      %617 = vset.pattern.permute.xlu0 0
      %618 = vperm.xlu0 %617, %v316
      %v619 = vpop.permute.xlu0 %618
      %622 = vset.pattern.permute.xlu0 0
      %623 = vperm.xlu0 %622, %v317
      %v624 = vpop.permute.xlu0 %623
      %627 = vset.pattern.permute.xlu0 0
      %628 = vperm.xlu0 %627, %v318
      %v629 = vpop.permute.xlu0 %628
      %632 = vset.pattern.permute.xlu0 0
      %633 = vperm.xlu0 %632, %v319
      %v634 = vpop.permute.xlu0 %633
      %637 = vset.pattern.permute.xlu0 0
      %638 = vperm.xlu0 %637, %v320
      %v639 = vpop.permute.xlu0 %638
      %642 = vset.pattern.permute.xlu0 0
      %643 = vperm.xlu0 %642, %v321
      %v644 = vpop.permute.xlu0 %643
      %647 = vset.pattern.permute.xlu0 0
      %648 = vperm.xlu0 %647, %v322
      %v649 = vpop.permute.xlu0 %648
      %652 = vset.pattern.permute.xlu0 0
      %653 = vperm.xlu0 %652, %v323
      %v654 = vpop.permute.xlu0 %653
      %657 = vset.pattern.permute.xlu0 0
      %658 = vperm.xlu0 %657, %v324
      %v659 = vpop.permute.xlu0 %658
      %662 = vset.pattern.permute.xlu0 0
      %663 = vperm.xlu0 %662, %v325
      %v664 = vpop.permute.xlu0 %663
      %667 = vset.pattern.permute.xlu0 0
      %668 = vperm.xlu0 %667, %v326
      %v669 = vpop.permute.xlu0 %668
      %672 = vset.pattern.permute.xlu0 0
      %673 = vperm.xlu0 %672, %v327
      %v674 = vpop.permute.xlu0 %673
      %677 = vset.pattern.permute.xlu0 0
      %678 = vperm.xlu0 %677, %v328
      %v679 = vpop.permute.xlu0 %678
      %682 = vset.pattern.permute.xlu0 0
      %683 = vperm.xlu0 %682, %v329
      %v684 = vpop.permute.xlu0 %683
      %687 = vset.pattern.permute.xlu0 0
      %688 = vperm.xlu0 %687, %v330
      %v689 = vpop.permute.xlu0 %688
      %692 = vset.pattern.permute.xlu0 0
      %693 = vperm.xlu0 %692, %v331
      %v694 = vpop.permute.xlu0 %693
      %697 = vset.pattern.permute.xlu0 0
      %698 = vperm.xlu0 %697, %v332
      %v699 = vpop.permute.xlu0 %698
      %702 = vset.pattern.permute.xlu0 0
      %703 = vperm.xlu0 %702, %v333
      %v704 = vpop.permute.xlu0 %703
      %707 = vset.pattern.permute.xlu0 0
      %708 = vperm.xlu0 %707, %v334
      %v709 = vpop.permute.xlu0 %708
      %712 = vset.pattern.permute.xlu0 0
      %713 = vperm.xlu0 %712, %v335
      %v714 = vpop.permute.xlu0 %713
      %717 = vset.pattern.permute.xlu0 0
      %718 = vperm.xlu0 %717, %v336
      %v719 = vpop.permute.xlu0 %718
      %721 = vset.pattern.permute.xlu0 8
      %722 = vperm.xlu0 %721, %v305
      %v723 = vpop.permute.xlu0 %722
      %725 = vset.pattern.permute.xlu0 8
      %726 = vperm.xlu0 %725, %v306
      %v727 = vpop.permute.xlu0 %726
      %729 = vset.pattern.permute.xlu0 8
      %730 = vperm.xlu0 %729, %v307
      %v731 = vpop.permute.xlu0 %730
      %733 = vset.pattern.permute.xlu0 8
      %734 = vperm.xlu0 %733, %v308
      %v735 = vpop.permute.xlu0 %734
      %737 = vset.pattern.permute.xlu0 8
      %738 = vperm.xlu0 %737, %v309
      %v739 = vpop.permute.xlu0 %738
      %741 = vset.pattern.permute.xlu0 8
      %742 = vperm.xlu0 %741, %v310
      %v743 = vpop.permute.xlu0 %742
      %745 = vset.pattern.permute.xlu0 8
      %746 = vperm.xlu0 %745, %v311
      %v747 = vpop.permute.xlu0 %746
      %749 = vset.pattern.permute.xlu0 8
      %750 = vperm.xlu0 %749, %v312
      %v751 = vpop.permute.xlu0 %750
      %753 = vset.pattern.permute.xlu0 8
      %754 = vperm.xlu0 %753, %v313
      %v755 = vpop.permute.xlu0 %754
      %757 = vset.pattern.permute.xlu0 8
      %758 = vperm.xlu0 %757, %v314
      %v759 = vpop.permute.xlu0 %758
      %761 = vset.pattern.permute.xlu0 8
      %762 = vperm.xlu0 %761, %v315
      %v763 = vpop.permute.xlu0 %762
      %765 = vset.pattern.permute.xlu0 8
      %766 = vperm.xlu0 %765, %v316
      %v767 = vpop.permute.xlu0 %766
      %769 = vset.pattern.permute.xlu0 8
      %770 = vperm.xlu0 %769, %v317
      %v771 = vpop.permute.xlu0 %770
      %773 = vset.pattern.permute.xlu0 8
      %774 = vperm.xlu0 %773, %v318
      %v775 = vpop.permute.xlu0 %774
      %777 = vset.pattern.permute.xlu0 8
      %778 = vperm.xlu0 %777, %v319
      %v779 = vpop.permute.xlu0 %778
      %781 = vset.pattern.permute.xlu0 8
      %782 = vperm.xlu0 %781, %v320
      %v783 = vpop.permute.xlu0 %782
      %785 = vset.pattern.permute.xlu0 8
      %786 = vperm.xlu0 %785, %v321
      %v787 = vpop.permute.xlu0 %786
      %789 = vset.pattern.permute.xlu0 8
      %790 = vperm.xlu0 %789, %v322
      %v791 = vpop.permute.xlu0 %790
      %793 = vset.pattern.permute.xlu0 8
      %794 = vperm.xlu0 %793, %v323
      %v795 = vpop.permute.xlu0 %794
      %797 = vset.pattern.permute.xlu0 8
      %798 = vperm.xlu0 %797, %v324
      %v799 = vpop.permute.xlu0 %798
      %801 = vset.pattern.permute.xlu0 8
      %802 = vperm.xlu0 %801, %v325
      %v803 = vpop.permute.xlu0 %802
      %805 = vset.pattern.permute.xlu0 8
      %806 = vperm.xlu0 %805, %v326
      %v807 = vpop.permute.xlu0 %806
      %809 = vset.pattern.permute.xlu0 8
      %810 = vperm.xlu0 %809, %v327
      %v811 = vpop.permute.xlu0 %810
      %813 = vset.pattern.permute.xlu0 8
      %814 = vperm.xlu0 %813, %v328
      %v815 = vpop.permute.xlu0 %814
      %817 = vset.pattern.permute.xlu0 8
      %818 = vperm.xlu0 %817, %v329
      %v819 = vpop.permute.xlu0 %818
      %821 = vset.pattern.permute.xlu0 8
      %822 = vperm.xlu0 %821, %v330
      %v823 = vpop.permute.xlu0 %822
      %825 = vset.pattern.permute.xlu0 8
      %826 = vperm.xlu0 %825, %v331
      %v827 = vpop.permute.xlu0 %826
      %829 = vset.pattern.permute.xlu0 8
      %830 = vperm.xlu0 %829, %v332
      %v831 = vpop.permute.xlu0 %830
      %833 = vset.pattern.permute.xlu0 8
      %834 = vperm.xlu0 %833, %v333
      %v835 = vpop.permute.xlu0 %834
      %837 = vset.pattern.permute.xlu0 8
      %838 = vperm.xlu0 %837, %v334
      %v839 = vpop.permute.xlu0 %838
      %841 = vset.pattern.permute.xlu0 8
      %842 = vperm.xlu0 %841, %v335
      %v843 = vpop.permute.xlu0 %842
      %845 = vset.pattern.permute.xlu0 8
      %846 = vperm.xlu0 %845, %v336
      %v847 = vpop.permute.xlu0 %846
      %v849 = vsel %vm560, %v564, %v723
      %v850 = vsel %vm560, %v569, %v727
      %v851 = vsel %vm560, %v574, %v731
      %v852 = vsel %vm560, %v579, %v735
      %v853 = vsel %vm560, %v584, %v739
      %v854 = vsel %vm560, %v589, %v743
      %v855 = vsel %vm560, %v594, %v747
      %v856 = vsel %vm560, %v599, %v751
      %v857 = vsel %vm560, %v604, %v755
      %v858 = vsel %vm560, %v609, %v759
      %v859 = vsel %vm560, %v614, %v763
      %v860 = vsel %vm560, %v619, %v767
      %v861 = vsel %vm560, %v624, %v771
      %v862 = vsel %vm560, %v629, %v775
      %v863 = vsel %vm560, %v634, %v779
      %v864 = vsel %vm560, %v639, %v783
      %v865 = vsel %vm560, %v644, %v787
      %v866 = vsel %vm560, %v649, %v791
      %v867 = vsel %vm560, %v654, %v795
      %v868 = vsel %vm560, %v659, %v799
      %v869 = vsel %vm560, %v664, %v803
      %v870 = vsel %vm560, %v669, %v807
      %v871 = vsel %vm560, %v674, %v811
      %v872 = vsel %vm560, %v679, %v815
      %v873 = vsel %vm560, %v684, %v819
      %v874 = vsel %vm560, %v689, %v823
      %v875 = vsel %vm560, %v694, %v827
      %v876 = vsel %vm560, %v699, %v831
      %v877 = vsel %vm560, %v704, %v835
      %v878 = vsel %vm560, %v709, %v839
      %v879 = vsel %vm560, %v714, %v843
      %v880 = vsel %vm560, %v719, %v847
      %v881 = vperm.slane %v480, 0
      %v882 = vperm.slane %v482, 0
      %v883 = vperm.slane %v485, 0
      %v884 = vperm.slane %v487, 0
      %v885 = vperm.slane %v490, 0
      %v886 = vperm.slane %v492, 0
      %v887 = vperm.slane %v495, 0
      %v888 = vperm.slane %v497, 0
      %v889 = vperm.slane %v500, 0
      %v890 = vperm.slane %v502, 0
      %v891 = vperm.slane %v505, 0
      %v892 = vperm.slane %v507, 0
      %v893 = vperm.slane %v510, 0
      %v894 = vperm.slane %v512, 0
      %v895 = vperm.slane %v515, 0
      %v896 = vperm.slane %v517, 0
      %v897 = vperm.slane %v520, 0
      %v898 = vperm.slane %v522, 0
      %v899 = vperm.slane %v525, 0
      %v900 = vperm.slane %v527, 0
      %v901 = vperm.slane %v530, 0
      %v902 = vperm.slane %v532, 0
      %v903 = vperm.slane %v535, 0
      %v904 = vperm.slane %v537, 0
      %v905 = vperm.slane %v540, 0
      %v906 = vperm.slane %v542, 0
      %v907 = vperm.slane %v545, 0
      %v908 = vperm.slane %v547, 0
      %v909 = vperm.slane %v550, 0
      %v910 = vperm.slane %v552, 0
      %v911 = vperm.slane %v555, 0
      %v912 = vperm.slane %v557, 0
      %v913 = vmul.f32 %v849, %v881
      %v914 = vmul.f32 %v850, %v882
      %v915 = vmul.f32 %v851, %v883
      %v916 = vmul.f32 %v852, %v884
      %v917 = vmul.f32 %v853, %v885
      %v918 = vmul.f32 %v854, %v886
      %v919 = vmul.f32 %v855, %v887
      %v920 = vmul.f32 %v856, %v888
      %v921 = vmul.f32 %v857, %v889
      %v922 = vmul.f32 %v858, %v890
      %v923 = vmul.f32 %v859, %v891
      %v924 = vmul.f32 %v860, %v892
      %v925 = vmul.f32 %v861, %v893
      %v926 = vmul.f32 %v862, %v894
      %v927 = vmul.f32 %v863, %v895
      %v928 = vmul.f32 %v864, %v896
      %v929 = vmul.f32 %v865, %v897
      %v930 = vmul.f32 %v866, %v898
      %v931 = vmul.f32 %v867, %v899
      %v932 = vmul.f32 %v868, %v900
      %v933 = vmul.f32 %v869, %v901
      %v934 = vmul.f32 %v870, %v902
      %v935 = vmul.f32 %v871, %v903
      %v936 = vmul.f32 %v872, %v904
      %v937 = vmul.f32 %v873, %v905
      %v938 = vmul.f32 %v874, %v906
      %v939 = vmul.f32 %v875, %v907
      %v940 = vmul.f32 %v876, %v908
      %v941 = vmul.f32 %v877, %v909
      %v942 = vmul.f32 %v878, %v910
      %v943 = vmul.f32 %v879, %v911
      %v944 = vmul.f32 %v880, %v912
      %945 = vset.pattern.permute.xlu0 1
      %946 = vperm.xlu0 %945, %v305
      %v947 = vpop.permute.xlu0 %946
      %949 = vset.pattern.permute.xlu0 1
      %950 = vperm.xlu0 %949, %v306
      %v951 = vpop.permute.xlu0 %950
      %953 = vset.pattern.permute.xlu0 1
      %954 = vperm.xlu0 %953, %v307
      %v955 = vpop.permute.xlu0 %954
      %957 = vset.pattern.permute.xlu0 1
      %958 = vperm.xlu0 %957, %v308
      %v959 = vpop.permute.xlu0 %958
      %961 = vset.pattern.permute.xlu0 1
      %962 = vperm.xlu0 %961, %v309
      %v963 = vpop.permute.xlu0 %962
      %965 = vset.pattern.permute.xlu0 1
      %966 = vperm.xlu0 %965, %v310
      %v967 = vpop.permute.xlu0 %966
      %969 = vset.pattern.permute.xlu0 1
      %970 = vperm.xlu0 %969, %v311
      %v971 = vpop.permute.xlu0 %970
      %973 = vset.pattern.permute.xlu0 1
      %974 = vperm.xlu0 %973, %v312
      %v975 = vpop.permute.xlu0 %974
      %977 = vset.pattern.permute.xlu0 1
      %978 = vperm.xlu0 %977, %v313
      %v979 = vpop.permute.xlu0 %978
      %981 = vset.pattern.permute.xlu0 1
      %982 = vperm.xlu0 %981, %v314
      %v983 = vpop.permute.xlu0 %982
      %985 = vset.pattern.permute.xlu0 1
      %986 = vperm.xlu0 %985, %v315
      %v987 = vpop.permute.xlu0 %986
      %989 = vset.pattern.permute.xlu0 1
      %990 = vperm.xlu0 %989, %v316
      %v991 = vpop.permute.xlu0 %990
      %993 = vset.pattern.permute.xlu0 1
      %994 = vperm.xlu0 %993, %v317
      %v995 = vpop.permute.xlu0 %994
      %997 = vset.pattern.permute.xlu0 1
      %998 = vperm.xlu0 %997, %v318
      %v999 = vpop.permute.xlu0 %998
      %1001 = vset.pattern.permute.xlu0 1
      %1002 = vperm.xlu0 %1001, %v319
      %v1003 = vpop.permute.xlu0 %1002
      %1005 = vset.pattern.permute.xlu0 1
      %1006 = vperm.xlu0 %1005, %v320
      %v1007 = vpop.permute.xlu0 %1006
      %1009 = vset.pattern.permute.xlu0 1
      %1010 = vperm.xlu0 %1009, %v321
      %v1011 = vpop.permute.xlu0 %1010
      %1013 = vset.pattern.permute.xlu0 1
      %1014 = vperm.xlu0 %1013, %v322
      %v1015 = vpop.permute.xlu0 %1014
      %1017 = vset.pattern.permute.xlu0 1
      %1018 = vperm.xlu0 %1017, %v323
      %v1019 = vpop.permute.xlu0 %1018
      %1021 = vset.pattern.permute.xlu0 1
      %1022 = vperm.xlu0 %1021, %v324
      %v1023 = vpop.permute.xlu0 %1022
      %1025 = vset.pattern.permute.xlu0 1
      %1026 = vperm.xlu0 %1025, %v325
      %v1027 = vpop.permute.xlu0 %1026
      %1029 = vset.pattern.permute.xlu0 1
      %1030 = vperm.xlu0 %1029, %v326
      %v1031 = vpop.permute.xlu0 %1030
      %1033 = vset.pattern.permute.xlu0 1
      %1034 = vperm.xlu0 %1033, %v327
      %v1035 = vpop.permute.xlu0 %1034
      %1037 = vset.pattern.permute.xlu0 1
      %1038 = vperm.xlu0 %1037, %v328
      %v1039 = vpop.permute.xlu0 %1038
      %1041 = vset.pattern.permute.xlu0 1
      %1042 = vperm.xlu0 %1041, %v329
      %v1043 = vpop.permute.xlu0 %1042
      %1045 = vset.pattern.permute.xlu0 1
      %1046 = vperm.xlu0 %1045, %v330
      %v1047 = vpop.permute.xlu0 %1046
      %1049 = vset.pattern.permute.xlu0 1
      %1050 = vperm.xlu0 %1049, %v331
      %v1051 = vpop.permute.xlu0 %1050
      %1053 = vset.pattern.permute.xlu0 1
      %1054 = vperm.xlu0 %1053, %v332
      %v1055 = vpop.permute.xlu0 %1054
      %1057 = vset.pattern.permute.xlu0 1
      %1058 = vperm.xlu0 %1057, %v333
      %v1059 = vpop.permute.xlu0 %1058
      %1061 = vset.pattern.permute.xlu0 1
      %1062 = vperm.xlu0 %1061, %v334
      %v1063 = vpop.permute.xlu0 %1062
      %1065 = vset.pattern.permute.xlu0 1
      %1066 = vperm.xlu0 %1065, %v335
      %v1067 = vpop.permute.xlu0 %1066
      %1069 = vset.pattern.permute.xlu0 1
      %1070 = vperm.xlu0 %1069, %v336
      %v1071 = vpop.permute.xlu0 %1070
      %1073 = vset.pattern.permute.xlu0 9
      %1074 = vperm.xlu0 %1073, %v305
      %v1075 = vpop.permute.xlu0 %1074
      %1077 = vset.pattern.permute.xlu0 9
      %1078 = vperm.xlu0 %1077, %v306
      %v1079 = vpop.permute.xlu0 %1078
      %1081 = vset.pattern.permute.xlu0 9
      %1082 = vperm.xlu0 %1081, %v307
      %v1083 = vpop.permute.xlu0 %1082
      %1085 = vset.pattern.permute.xlu0 9
      %1086 = vperm.xlu0 %1085, %v308
      %v1087 = vpop.permute.xlu0 %1086
      %1089 = vset.pattern.permute.xlu0 9
      %1090 = vperm.xlu0 %1089, %v309
      %v1091 = vpop.permute.xlu0 %1090
      %1093 = vset.pattern.permute.xlu0 9
      %1094 = vperm.xlu0 %1093, %v310
      %v1095 = vpop.permute.xlu0 %1094
      %1097 = vset.pattern.permute.xlu0 9
      %1098 = vperm.xlu0 %1097, %v311
      %v1099 = vpop.permute.xlu0 %1098
      %1101 = vset.pattern.permute.xlu0 9
      %1102 = vperm.xlu0 %1101, %v312
      %v1103 = vpop.permute.xlu0 %1102
      %1105 = vset.pattern.permute.xlu0 9
      %1106 = vperm.xlu0 %1105, %v313
      %v1107 = vpop.permute.xlu0 %1106
      %1109 = vset.pattern.permute.xlu0 9
      %1110 = vperm.xlu0 %1109, %v314
      %v1111 = vpop.permute.xlu0 %1110
      %1113 = vset.pattern.permute.xlu0 9
      %1114 = vperm.xlu0 %1113, %v315
      %v1115 = vpop.permute.xlu0 %1114
      %1117 = vset.pattern.permute.xlu0 9
      %1118 = vperm.xlu0 %1117, %v316
      %v1119 = vpop.permute.xlu0 %1118
      %1121 = vset.pattern.permute.xlu0 9
      %1122 = vperm.xlu0 %1121, %v317
      %v1123 = vpop.permute.xlu0 %1122
      %1125 = vset.pattern.permute.xlu0 9
      %1126 = vperm.xlu0 %1125, %v318
      %v1127 = vpop.permute.xlu0 %1126
      %1129 = vset.pattern.permute.xlu0 9
      %1130 = vperm.xlu0 %1129, %v319
      %v1131 = vpop.permute.xlu0 %1130
      %1133 = vset.pattern.permute.xlu0 9
      %1134 = vperm.xlu0 %1133, %v320
      %v1135 = vpop.permute.xlu0 %1134
      %1137 = vset.pattern.permute.xlu0 9
      %1138 = vperm.xlu0 %1137, %v321
      %v1139 = vpop.permute.xlu0 %1138
      %1141 = vset.pattern.permute.xlu0 9
      %1142 = vperm.xlu0 %1141, %v322
      %v1143 = vpop.permute.xlu0 %1142
      %1145 = vset.pattern.permute.xlu0 9
      %1146 = vperm.xlu0 %1145, %v323
      %v1147 = vpop.permute.xlu0 %1146
      %1149 = vset.pattern.permute.xlu0 9
      %1150 = vperm.xlu0 %1149, %v324
      %v1151 = vpop.permute.xlu0 %1150
      %1153 = vset.pattern.permute.xlu0 9
      %1154 = vperm.xlu0 %1153, %v325
      %v1155 = vpop.permute.xlu0 %1154
      %1157 = vset.pattern.permute.xlu0 9
      %1158 = vperm.xlu0 %1157, %v326
      %v1159 = vpop.permute.xlu0 %1158
      %1161 = vset.pattern.permute.xlu0 9
      %1162 = vperm.xlu0 %1161, %v327
      %v1163 = vpop.permute.xlu0 %1162
      %1165 = vset.pattern.permute.xlu0 9
      %1166 = vperm.xlu0 %1165, %v328
      %v1167 = vpop.permute.xlu0 %1166
      %1169 = vset.pattern.permute.xlu0 9
      %1170 = vperm.xlu0 %1169, %v329
      %v1171 = vpop.permute.xlu0 %1170
      %1173 = vset.pattern.permute.xlu0 9
      %1174 = vperm.xlu0 %1173, %v330
      %v1175 = vpop.permute.xlu0 %1174
      %1177 = vset.pattern.permute.xlu0 9
      %1178 = vperm.xlu0 %1177, %v331
      %v1179 = vpop.permute.xlu0 %1178
      %1181 = vset.pattern.permute.xlu0 9
      %1182 = vperm.xlu0 %1181, %v332
      %v1183 = vpop.permute.xlu0 %1182
      %1185 = vset.pattern.permute.xlu0 9
      %1186 = vperm.xlu0 %1185, %v333
      %v1187 = vpop.permute.xlu0 %1186
      %1189 = vset.pattern.permute.xlu0 9
      %1190 = vperm.xlu0 %1189, %v334
      %v1191 = vpop.permute.xlu0 %1190
      %1193 = vset.pattern.permute.xlu0 9
      %1194 = vperm.xlu0 %1193, %v335
      %v1195 = vpop.permute.xlu0 %1194
      %1197 = vset.pattern.permute.xlu0 9
      %1198 = vperm.xlu0 %1197, %v336
      %v1199 = vpop.permute.xlu0 %1198
      %v1201 = vsel %vm560, %v947, %v1075
      %v1202 = vsel %vm560, %v951, %v1079
      %v1203 = vsel %vm560, %v955, %v1083
      %v1204 = vsel %vm560, %v959, %v1087
      %v1205 = vsel %vm560, %v963, %v1091
      %v1206 = vsel %vm560, %v967, %v1095
      %v1207 = vsel %vm560, %v971, %v1099
      %v1208 = vsel %vm560, %v975, %v1103
      %v1209 = vsel %vm560, %v979, %v1107
      %v1210 = vsel %vm560, %v983, %v1111
      %v1211 = vsel %vm560, %v987, %v1115
      %v1212 = vsel %vm560, %v991, %v1119
      %v1213 = vsel %vm560, %v995, %v1123
      %v1214 = vsel %vm560, %v999, %v1127
      %v1215 = vsel %vm560, %v1003, %v1131
      %v1216 = vsel %vm560, %v1007, %v1135
      %v1217 = vsel %vm560, %v1011, %v1139
      %v1218 = vsel %vm560, %v1015, %v1143
      %v1219 = vsel %vm560, %v1019, %v1147
      %v1220 = vsel %vm560, %v1023, %v1151
      %v1221 = vsel %vm560, %v1027, %v1155
      %v1222 = vsel %vm560, %v1031, %v1159
      %v1223 = vsel %vm560, %v1035, %v1163
      %v1224 = vsel %vm560, %v1039, %v1167
      %v1225 = vsel %vm560, %v1043, %v1171
      %v1226 = vsel %vm560, %v1047, %v1175
      %v1227 = vsel %vm560, %v1051, %v1179
      %v1228 = vsel %vm560, %v1055, %v1183
      %v1229 = vsel %vm560, %v1059, %v1187
      %v1230 = vsel %vm560, %v1063, %v1191
      %v1231 = vsel %vm560, %v1067, %v1195
      %v1232 = vsel %vm560, %v1071, %v1199
      %v1233 = vperm.slane %v480, 1
      %v1234 = vperm.slane %v482, 1
      %v1235 = vperm.slane %v485, 1
      %v1236 = vperm.slane %v487, 1
      %v1237 = vperm.slane %v490, 1
      %v1238 = vperm.slane %v492, 1
      %v1239 = vperm.slane %v495, 1
      %v1240 = vperm.slane %v497, 1
      %v1241 = vperm.slane %v500, 1
      %v1242 = vperm.slane %v502, 1
      %v1243 = vperm.slane %v505, 1
      %v1244 = vperm.slane %v507, 1
      %v1245 = vperm.slane %v510, 1
      %v1246 = vperm.slane %v512, 1
      %v1247 = vperm.slane %v515, 1
      %v1248 = vperm.slane %v517, 1
      %v1249 = vperm.slane %v520, 1
      %v1250 = vperm.slane %v522, 1
      %v1251 = vperm.slane %v525, 1
      %v1252 = vperm.slane %v527, 1
      %v1253 = vperm.slane %v530, 1
      %v1254 = vperm.slane %v532, 1
      %v1255 = vperm.slane %v535, 1
      %v1256 = vperm.slane %v537, 1
      %v1257 = vperm.slane %v540, 1
      %v1258 = vperm.slane %v542, 1
      %v1259 = vperm.slane %v545, 1
      %v1260 = vperm.slane %v547, 1
      %v1261 = vperm.slane %v550, 1
      %v1262 = vperm.slane %v552, 1
      %v1263 = vperm.slane %v555, 1
      %v1264 = vperm.slane %v557, 1
      %v1265 = vmul.f32 %v1201, %v1233
      %v1266 = vmul.f32 %v1202, %v1234
      %v1267 = vmul.f32 %v1203, %v1235
      %v1268 = vmul.f32 %v1204, %v1236
      %v1269 = vmul.f32 %v1205, %v1237
      %v1270 = vmul.f32 %v1206, %v1238
      %v1271 = vmul.f32 %v1207, %v1239
      %v1272 = vmul.f32 %v1208, %v1240
      %v1273 = vmul.f32 %v1209, %v1241
      %v1274 = vmul.f32 %v1210, %v1242
      %v1275 = vmul.f32 %v1211, %v1243
      %v1276 = vmul.f32 %v1212, %v1244
      %v1277 = vmul.f32 %v1213, %v1245
      %v1278 = vmul.f32 %v1214, %v1246
      %v1279 = vmul.f32 %v1215, %v1247
      %v1280 = vmul.f32 %v1216, %v1248
      %v1281 = vmul.f32 %v1217, %v1249
      %v1282 = vmul.f32 %v1218, %v1250
      %v1283 = vmul.f32 %v1219, %v1251
      %v1284 = vmul.f32 %v1220, %v1252
      %v1285 = vmul.f32 %v1221, %v1253
      %v1286 = vmul.f32 %v1222, %v1254
      %v1287 = vmul.f32 %v1223, %v1255
      %v1288 = vmul.f32 %v1224, %v1256
      %v1289 = vmul.f32 %v1225, %v1257
      %v1290 = vmul.f32 %v1226, %v1258
      %v1291 = vmul.f32 %v1227, %v1259
      %v1292 = vmul.f32 %v1228, %v1260
      %v1293 = vmul.f32 %v1229, %v1261
      %v1294 = vmul.f32 %v1230, %v1262
      %v1295 = vmul.f32 %v1231, %v1263
      %v1296 = vmul.f32 %v1232, %v1264
      %v1297 = vadd.f32 %v913, %v1265
      %v1298 = vadd.f32 %v914, %v1266
      %v1299 = vadd.f32 %v915, %v1267
      %v1300 = vadd.f32 %v916, %v1268
      %v1301 = vadd.f32 %v917, %v1269
      %v1302 = vadd.f32 %v918, %v1270
      %v1303 = vadd.f32 %v919, %v1271
      %v1304 = vadd.f32 %v920, %v1272
      %v1305 = vadd.f32 %v921, %v1273
      %v1306 = vadd.f32 %v922, %v1274
      %v1307 = vadd.f32 %v923, %v1275
      %v1308 = vadd.f32 %v924, %v1276
      %v1309 = vadd.f32 %v925, %v1277
      %v1310 = vadd.f32 %v926, %v1278
      %v1311 = vadd.f32 %v927, %v1279
      %v1312 = vadd.f32 %v928, %v1280
      %v1313 = vadd.f32 %v929, %v1281
      %v1314 = vadd.f32 %v930, %v1282
      %v1315 = vadd.f32 %v931, %v1283
      %v1316 = vadd.f32 %v932, %v1284
      %v1317 = vadd.f32 %v933, %v1285
      %v1318 = vadd.f32 %v934, %v1286
      %v1319 = vadd.f32 %v935, %v1287
      %v1320 = vadd.f32 %v936, %v1288
      %v1321 = vadd.f32 %v937, %v1289
      %v1322 = vadd.f32 %v938, %v1290
      %v1323 = vadd.f32 %v939, %v1291
      %v1324 = vadd.f32 %v940, %v1292
      %v1325 = vadd.f32 %v941, %v1293
      %v1326 = vadd.f32 %v942, %v1294
      %v1327 = vadd.f32 %v943, %v1295
      %v1328 = vadd.f32 %v944, %v1296
      %1329 = vset.pattern.permute.xlu0 2
      %1330 = vperm.xlu0 %1329, %v305
      %v1331 = vpop.permute.xlu0 %1330
      %1333 = vset.pattern.permute.xlu0 2
      %1334 = vperm.xlu0 %1333, %v306
      %v1335 = vpop.permute.xlu0 %1334
      %1337 = vset.pattern.permute.xlu0 2
      %1338 = vperm.xlu0 %1337, %v307
      %v1339 = vpop.permute.xlu0 %1338
      %1341 = vset.pattern.permute.xlu0 2
      %1342 = vperm.xlu0 %1341, %v308
      %v1343 = vpop.permute.xlu0 %1342
      %1345 = vset.pattern.permute.xlu0 2
      %1346 = vperm.xlu0 %1345, %v309
      %v1347 = vpop.permute.xlu0 %1346
      %1349 = vset.pattern.permute.xlu0 2
      %1350 = vperm.xlu0 %1349, %v310
      %v1351 = vpop.permute.xlu0 %1350
      %1353 = vset.pattern.permute.xlu0 2
      %1354 = vperm.xlu0 %1353, %v311
      %v1355 = vpop.permute.xlu0 %1354
      %1357 = vset.pattern.permute.xlu0 2
      %1358 = vperm.xlu0 %1357, %v312
      %v1359 = vpop.permute.xlu0 %1358
      %1361 = vset.pattern.permute.xlu0 2
      %1362 = vperm.xlu0 %1361, %v313
      %v1363 = vpop.permute.xlu0 %1362
      %1365 = vset.pattern.permute.xlu0 2
      %1366 = vperm.xlu0 %1365, %v314
      %v1367 = vpop.permute.xlu0 %1366
      %1369 = vset.pattern.permute.xlu0 2
      %1370 = vperm.xlu0 %1369, %v315
      %v1371 = vpop.permute.xlu0 %1370
      %1373 = vset.pattern.permute.xlu0 2
      %1374 = vperm.xlu0 %1373, %v316
      %v1375 = vpop.permute.xlu0 %1374
      %1377 = vset.pattern.permute.xlu0 2
      %1378 = vperm.xlu0 %1377, %v317
      %v1379 = vpop.permute.xlu0 %1378
      %1381 = vset.pattern.permute.xlu0 2
      %1382 = vperm.xlu0 %1381, %v318
      %v1383 = vpop.permute.xlu0 %1382
      %1385 = vset.pattern.permute.xlu0 2
      %1386 = vperm.xlu0 %1385, %v319
      %v1387 = vpop.permute.xlu0 %1386
      %1389 = vset.pattern.permute.xlu0 2
      %1390 = vperm.xlu0 %1389, %v320
      %v1391 = vpop.permute.xlu0 %1390
      %1393 = vset.pattern.permute.xlu0 2
      %1394 = vperm.xlu0 %1393, %v321
      %v1395 = vpop.permute.xlu0 %1394
      %1397 = vset.pattern.permute.xlu0 2
      %1398 = vperm.xlu0 %1397, %v322
      %v1399 = vpop.permute.xlu0 %1398
      %1401 = vset.pattern.permute.xlu0 2
      %1402 = vperm.xlu0 %1401, %v323
      %v1403 = vpop.permute.xlu0 %1402
      %1405 = vset.pattern.permute.xlu0 2
      %1406 = vperm.xlu0 %1405, %v324
      %v1407 = vpop.permute.xlu0 %1406
      %1409 = vset.pattern.permute.xlu0 2
      %1410 = vperm.xlu0 %1409, %v325
      %v1411 = vpop.permute.xlu0 %1410
      %1413 = vset.pattern.permute.xlu0 2
      %1414 = vperm.xlu0 %1413, %v326
      %v1415 = vpop.permute.xlu0 %1414
      %1417 = vset.pattern.permute.xlu0 2
      %1418 = vperm.xlu0 %1417, %v327
      %v1419 = vpop.permute.xlu0 %1418
      %1421 = vset.pattern.permute.xlu0 2
      %1422 = vperm.xlu0 %1421, %v328
      %v1423 = vpop.permute.xlu0 %1422
      %1425 = vset.pattern.permute.xlu0 2
      %1426 = vperm.xlu0 %1425, %v329
      %v1427 = vpop.permute.xlu0 %1426
      %1429 = vset.pattern.permute.xlu0 2
      %1430 = vperm.xlu0 %1429, %v330
      %v1431 = vpop.permute.xlu0 %1430
      %1433 = vset.pattern.permute.xlu0 2
      %1434 = vperm.xlu0 %1433, %v331
      %v1435 = vpop.permute.xlu0 %1434
      %1437 = vset.pattern.permute.xlu0 2
      %1438 = vperm.xlu0 %1437, %v332
      %v1439 = vpop.permute.xlu0 %1438
      %1441 = vset.pattern.permute.xlu0 2
      %1442 = vperm.xlu0 %1441, %v333
      %v1443 = vpop.permute.xlu0 %1442
      %1445 = vset.pattern.permute.xlu0 2
      %1446 = vperm.xlu0 %1445, %v334
      %v1447 = vpop.permute.xlu0 %1446
      %1449 = vset.pattern.permute.xlu0 2
      %1450 = vperm.xlu0 %1449, %v335
      %v1451 = vpop.permute.xlu0 %1450
      %1453 = vset.pattern.permute.xlu0 2
      %1454 = vperm.xlu0 %1453, %v336
      %v1455 = vpop.permute.xlu0 %1454
      %1457 = vset.pattern.permute.xlu0 10
      %1458 = vperm.xlu0 %1457, %v305
      %v1459 = vpop.permute.xlu0 %1458
      %1461 = vset.pattern.permute.xlu0 10
      %1462 = vperm.xlu0 %1461, %v306
      %v1463 = vpop.permute.xlu0 %1462
      %1465 = vset.pattern.permute.xlu0 10
      %1466 = vperm.xlu0 %1465, %v307
      %v1467 = vpop.permute.xlu0 %1466
      %1469 = vset.pattern.permute.xlu0 10
      %1470 = vperm.xlu0 %1469, %v308
      %v1471 = vpop.permute.xlu0 %1470
      %1473 = vset.pattern.permute.xlu0 10
      %1474 = vperm.xlu0 %1473, %v309
      %v1475 = vpop.permute.xlu0 %1474
      %1477 = vset.pattern.permute.xlu0 10
      %1478 = vperm.xlu0 %1477, %v310
      %v1479 = vpop.permute.xlu0 %1478
      %1481 = vset.pattern.permute.xlu0 10
      %1482 = vperm.xlu0 %1481, %v311
      %v1483 = vpop.permute.xlu0 %1482
      %1485 = vset.pattern.permute.xlu0 10
      %1486 = vperm.xlu0 %1485, %v312
      %v1487 = vpop.permute.xlu0 %1486
      %1489 = vset.pattern.permute.xlu0 10
      %1490 = vperm.xlu0 %1489, %v313
      %v1491 = vpop.permute.xlu0 %1490
      %1493 = vset.pattern.permute.xlu0 10
      %1494 = vperm.xlu0 %1493, %v314
      %v1495 = vpop.permute.xlu0 %1494
      %1497 = vset.pattern.permute.xlu0 10
      %1498 = vperm.xlu0 %1497, %v315
      %v1499 = vpop.permute.xlu0 %1498
      %1501 = vset.pattern.permute.xlu0 10
      %1502 = vperm.xlu0 %1501, %v316
      %v1503 = vpop.permute.xlu0 %1502
      %1505 = vset.pattern.permute.xlu0 10
      %1506 = vperm.xlu0 %1505, %v317
      %v1507 = vpop.permute.xlu0 %1506
      %1509 = vset.pattern.permute.xlu0 10
      %1510 = vperm.xlu0 %1509, %v318
      %v1511 = vpop.permute.xlu0 %1510
      %1513 = vset.pattern.permute.xlu0 10
      %1514 = vperm.xlu0 %1513, %v319
      %v1515 = vpop.permute.xlu0 %1514
      %1517 = vset.pattern.permute.xlu0 10
      %1518 = vperm.xlu0 %1517, %v320
      %v1519 = vpop.permute.xlu0 %1518
      %1521 = vset.pattern.permute.xlu0 10
      %1522 = vperm.xlu0 %1521, %v321
      %v1523 = vpop.permute.xlu0 %1522
      %1525 = vset.pattern.permute.xlu0 10
      %1526 = vperm.xlu0 %1525, %v322
      %v1527 = vpop.permute.xlu0 %1526
      %1529 = vset.pattern.permute.xlu0 10
      %1530 = vperm.xlu0 %1529, %v323
      %v1531 = vpop.permute.xlu0 %1530
      %1533 = vset.pattern.permute.xlu0 10
      %1534 = vperm.xlu0 %1533, %v324
      %v1535 = vpop.permute.xlu0 %1534
      %1537 = vset.pattern.permute.xlu0 10
      %1538 = vperm.xlu0 %1537, %v325
      %v1539 = vpop.permute.xlu0 %1538
      %1541 = vset.pattern.permute.xlu0 10
      %1542 = vperm.xlu0 %1541, %v326
      %v1543 = vpop.permute.xlu0 %1542
      %1545 = vset.pattern.permute.xlu0 10
      %1546 = vperm.xlu0 %1545, %v327
      %v1547 = vpop.permute.xlu0 %1546
      %1549 = vset.pattern.permute.xlu0 10
      %1550 = vperm.xlu0 %1549, %v328
      %v1551 = vpop.permute.xlu0 %1550
      %1553 = vset.pattern.permute.xlu0 10
      %1554 = vperm.xlu0 %1553, %v329
      %v1555 = vpop.permute.xlu0 %1554
      %1557 = vset.pattern.permute.xlu0 10
      %1558 = vperm.xlu0 %1557, %v330
      %v1559 = vpop.permute.xlu0 %1558
      %1561 = vset.pattern.permute.xlu0 10
      %1562 = vperm.xlu0 %1561, %v331
      %v1563 = vpop.permute.xlu0 %1562
      %1565 = vset.pattern.permute.xlu0 10
      %1566 = vperm.xlu0 %1565, %v332
      %v1567 = vpop.permute.xlu0 %1566
      %1569 = vset.pattern.permute.xlu0 10
      %1570 = vperm.xlu0 %1569, %v333
      %v1571 = vpop.permute.xlu0 %1570
      %1573 = vset.pattern.permute.xlu0 10
      %1574 = vperm.xlu0 %1573, %v334
      %v1575 = vpop.permute.xlu0 %1574
      %1577 = vset.pattern.permute.xlu0 10
      %1578 = vperm.xlu0 %1577, %v335
      %v1579 = vpop.permute.xlu0 %1578
      %1581 = vset.pattern.permute.xlu0 10
      %1582 = vperm.xlu0 %1581, %v336
      %v1583 = vpop.permute.xlu0 %1582
      %v1585 = vsel %vm560, %v1331, %v1459
      %v1586 = vsel %vm560, %v1335, %v1463
      %v1587 = vsel %vm560, %v1339, %v1467
      %v1588 = vsel %vm560, %v1343, %v1471
      %v1589 = vsel %vm560, %v1347, %v1475
      %v1590 = vsel %vm560, %v1351, %v1479
      %v1591 = vsel %vm560, %v1355, %v1483
      %v1592 = vsel %vm560, %v1359, %v1487
      %v1593 = vsel %vm560, %v1363, %v1491
      %v1594 = vsel %vm560, %v1367, %v1495
      %v1595 = vsel %vm560, %v1371, %v1499
      %v1596 = vsel %vm560, %v1375, %v1503
      %v1597 = vsel %vm560, %v1379, %v1507
      %v1598 = vsel %vm560, %v1383, %v1511
      %v1599 = vsel %vm560, %v1387, %v1515
      %v1600 = vsel %vm560, %v1391, %v1519
      %v1601 = vsel %vm560, %v1395, %v1523
      %v1602 = vsel %vm560, %v1399, %v1527
      %v1603 = vsel %vm560, %v1403, %v1531
      %v1604 = vsel %vm560, %v1407, %v1535
      %v1605 = vsel %vm560, %v1411, %v1539
      %v1606 = vsel %vm560, %v1415, %v1543
      %v1607 = vsel %vm560, %v1419, %v1547
      %v1608 = vsel %vm560, %v1423, %v1551
      %v1609 = vsel %vm560, %v1427, %v1555
      %v1610 = vsel %vm560, %v1431, %v1559
      %v1611 = vsel %vm560, %v1435, %v1563
      %v1612 = vsel %vm560, %v1439, %v1567
      %v1613 = vsel %vm560, %v1443, %v1571
      %v1614 = vsel %vm560, %v1447, %v1575
      %v1615 = vsel %vm560, %v1451, %v1579
      %v1616 = vsel %vm560, %v1455, %v1583
      %v1617 = vperm.slane %v480, 2
      %v1618 = vperm.slane %v482, 2
      %v1619 = vperm.slane %v485, 2
      %v1620 = vperm.slane %v487, 2
      %v1621 = vperm.slane %v490, 2
      %v1622 = vperm.slane %v492, 2
      %v1623 = vperm.slane %v495, 2
      %v1624 = vperm.slane %v497, 2
      %v1625 = vperm.slane %v500, 2
      %v1626 = vperm.slane %v502, 2
      %v1627 = vperm.slane %v505, 2
      %v1628 = vperm.slane %v507, 2
      %v1629 = vperm.slane %v510, 2
      %v1630 = vperm.slane %v512, 2
      %v1631 = vperm.slane %v515, 2
      %v1632 = vperm.slane %v517, 2
      %v1633 = vperm.slane %v520, 2
      %v1634 = vperm.slane %v522, 2
      %v1635 = vperm.slane %v525, 2
      %v1636 = vperm.slane %v527, 2
      %v1637 = vperm.slane %v530, 2
      %v1638 = vperm.slane %v532, 2
      %v1639 = vperm.slane %v535, 2
      %v1640 = vperm.slane %v537, 2
      %v1641 = vperm.slane %v540, 2
      %v1642 = vperm.slane %v542, 2
      %v1643 = vperm.slane %v545, 2
      %v1644 = vperm.slane %v547, 2
      %v1645 = vperm.slane %v550, 2
      %v1646 = vperm.slane %v552, 2
      %v1647 = vperm.slane %v555, 2
      %v1648 = vperm.slane %v557, 2
      %v1649 = vmul.f32 %v1585, %v1617
      %v1650 = vmul.f32 %v1586, %v1618
      %v1651 = vmul.f32 %v1587, %v1619
      %v1652 = vmul.f32 %v1588, %v1620
      %v1653 = vmul.f32 %v1589, %v1621
      %v1654 = vmul.f32 %v1590, %v1622
      %v1655 = vmul.f32 %v1591, %v1623
      %v1656 = vmul.f32 %v1592, %v1624
      %v1657 = vmul.f32 %v1593, %v1625
      %v1658 = vmul.f32 %v1594, %v1626
      %v1659 = vmul.f32 %v1595, %v1627
      %v1660 = vmul.f32 %v1596, %v1628
      %v1661 = vmul.f32 %v1597, %v1629
      %v1662 = vmul.f32 %v1598, %v1630
      %v1663 = vmul.f32 %v1599, %v1631
      %v1664 = vmul.f32 %v1600, %v1632
      %v1665 = vmul.f32 %v1601, %v1633
      %v1666 = vmul.f32 %v1602, %v1634
      %v1667 = vmul.f32 %v1603, %v1635
      %v1668 = vmul.f32 %v1604, %v1636
      %v1669 = vmul.f32 %v1605, %v1637
      %v1670 = vmul.f32 %v1606, %v1638
      %v1671 = vmul.f32 %v1607, %v1639
      %v1672 = vmul.f32 %v1608, %v1640
      %v1673 = vmul.f32 %v1609, %v1641
      %v1674 = vmul.f32 %v1610, %v1642
      %v1675 = vmul.f32 %v1611, %v1643
      %v1676 = vmul.f32 %v1612, %v1644
      %v1677 = vmul.f32 %v1613, %v1645
      %v1678 = vmul.f32 %v1614, %v1646
      %v1679 = vmul.f32 %v1615, %v1647
      %v1680 = vmul.f32 %v1616, %v1648
      %v1681 = vadd.f32 %v1297, %v1649
      %v1682 = vadd.f32 %v1298, %v1650
      %v1683 = vadd.f32 %v1299, %v1651
      %v1684 = vadd.f32 %v1300, %v1652
      %v1685 = vadd.f32 %v1301, %v1653
      %v1686 = vadd.f32 %v1302, %v1654
      %v1687 = vadd.f32 %v1303, %v1655
      %v1688 = vadd.f32 %v1304, %v1656
      %v1689 = vadd.f32 %v1305, %v1657
      %v1690 = vadd.f32 %v1306, %v1658
      %v1691 = vadd.f32 %v1307, %v1659
      %v1692 = vadd.f32 %v1308, %v1660
      %v1693 = vadd.f32 %v1309, %v1661
      %v1694 = vadd.f32 %v1310, %v1662
      %v1695 = vadd.f32 %v1311, %v1663
      %v1696 = vadd.f32 %v1312, %v1664
      %v1697 = vadd.f32 %v1313, %v1665
      %v1698 = vadd.f32 %v1314, %v1666
      %v1699 = vadd.f32 %v1315, %v1667
      %v1700 = vadd.f32 %v1316, %v1668
      %v1701 = vadd.f32 %v1317, %v1669
      %v1702 = vadd.f32 %v1318, %v1670
      %v1703 = vadd.f32 %v1319, %v1671
      %v1704 = vadd.f32 %v1320, %v1672
      %v1705 = vadd.f32 %v1321, %v1673
      %v1706 = vadd.f32 %v1322, %v1674
      %v1707 = vadd.f32 %v1323, %v1675
      %v1708 = vadd.f32 %v1324, %v1676
      %v1709 = vadd.f32 %v1325, %v1677
      %v1710 = vadd.f32 %v1326, %v1678
      %v1711 = vadd.f32 %v1327, %v1679
      %v1712 = vadd.f32 %v1328, %v1680
      %1713 = vset.pattern.permute.xlu0 3
      %1714 = vperm.xlu0 %1713, %v305
      %v1715 = vpop.permute.xlu0 %1714
      %1717 = vset.pattern.permute.xlu0 3
      %1718 = vperm.xlu0 %1717, %v306
      %v1719 = vpop.permute.xlu0 %1718
      %1721 = vset.pattern.permute.xlu0 3
      %1722 = vperm.xlu0 %1721, %v307
      %v1723 = vpop.permute.xlu0 %1722
      %1725 = vset.pattern.permute.xlu0 3
      %1726 = vperm.xlu0 %1725, %v308
      %v1727 = vpop.permute.xlu0 %1726
      %1729 = vset.pattern.permute.xlu0 3
      %1730 = vperm.xlu0 %1729, %v309
      %v1731 = vpop.permute.xlu0 %1730
      %1733 = vset.pattern.permute.xlu0 3
      %1734 = vperm.xlu0 %1733, %v310
      %v1735 = vpop.permute.xlu0 %1734
      %1737 = vset.pattern.permute.xlu0 3
      %1738 = vperm.xlu0 %1737, %v311
      %v1739 = vpop.permute.xlu0 %1738
      %1741 = vset.pattern.permute.xlu0 3
      %1742 = vperm.xlu0 %1741, %v312
      %v1743 = vpop.permute.xlu0 %1742
      %1745 = vset.pattern.permute.xlu0 3
      %1746 = vperm.xlu0 %1745, %v313
      %v1747 = vpop.permute.xlu0 %1746
      %1749 = vset.pattern.permute.xlu0 3
      %1750 = vperm.xlu0 %1749, %v314
      %v1751 = vpop.permute.xlu0 %1750
      %1753 = vset.pattern.permute.xlu0 3
      %1754 = vperm.xlu0 %1753, %v315
      %v1755 = vpop.permute.xlu0 %1754
      %1757 = vset.pattern.permute.xlu0 3
      %1758 = vperm.xlu0 %1757, %v316
      %v1759 = vpop.permute.xlu0 %1758
      %1761 = vset.pattern.permute.xlu0 3
      %1762 = vperm.xlu0 %1761, %v317
      %v1763 = vpop.permute.xlu0 %1762
      %1765 = vset.pattern.permute.xlu0 3
      %1766 = vperm.xlu0 %1765, %v318
      %v1767 = vpop.permute.xlu0 %1766
      %1769 = vset.pattern.permute.xlu0 3
      %1770 = vperm.xlu0 %1769, %v319
      %v1771 = vpop.permute.xlu0 %1770
      %1773 = vset.pattern.permute.xlu0 3
      %1774 = vperm.xlu0 %1773, %v320
      %v1775 = vpop.permute.xlu0 %1774
      %1777 = vset.pattern.permute.xlu0 3
      %1778 = vperm.xlu0 %1777, %v321
      %v1779 = vpop.permute.xlu0 %1778
      %1781 = vset.pattern.permute.xlu0 3
      %1782 = vperm.xlu0 %1781, %v322
      %v1783 = vpop.permute.xlu0 %1782
      %1785 = vset.pattern.permute.xlu0 3
      %1786 = vperm.xlu0 %1785, %v323
      %v1787 = vpop.permute.xlu0 %1786
      %1789 = vset.pattern.permute.xlu0 3
      %1790 = vperm.xlu0 %1789, %v324
      %v1791 = vpop.permute.xlu0 %1790
      %1793 = vset.pattern.permute.xlu0 3
      %1794 = vperm.xlu0 %1793, %v325
      %v1795 = vpop.permute.xlu0 %1794
      %1797 = vset.pattern.permute.xlu0 3
      %1798 = vperm.xlu0 %1797, %v326
      %v1799 = vpop.permute.xlu0 %1798
      %1801 = vset.pattern.permute.xlu0 3
      %1802 = vperm.xlu0 %1801, %v327
      %v1803 = vpop.permute.xlu0 %1802
      %1805 = vset.pattern.permute.xlu0 3
      %1806 = vperm.xlu0 %1805, %v328
      %v1807 = vpop.permute.xlu0 %1806
      %1809 = vset.pattern.permute.xlu0 3
      %1810 = vperm.xlu0 %1809, %v329
      %v1811 = vpop.permute.xlu0 %1810
      %1813 = vset.pattern.permute.xlu0 3
      %1814 = vperm.xlu0 %1813, %v330
      %v1815 = vpop.permute.xlu0 %1814
      %1817 = vset.pattern.permute.xlu0 3
      %1818 = vperm.xlu0 %1817, %v331
      %v1819 = vpop.permute.xlu0 %1818
      %1821 = vset.pattern.permute.xlu0 3
      %1822 = vperm.xlu0 %1821, %v332
      %v1823 = vpop.permute.xlu0 %1822
      %1825 = vset.pattern.permute.xlu0 3
      %1826 = vperm.xlu0 %1825, %v333
      %v1827 = vpop.permute.xlu0 %1826
      %1829 = vset.pattern.permute.xlu0 3
      %1830 = vperm.xlu0 %1829, %v334
      %v1831 = vpop.permute.xlu0 %1830
      %1833 = vset.pattern.permute.xlu0 3
      %1834 = vperm.xlu0 %1833, %v335
      %v1835 = vpop.permute.xlu0 %1834
      %1837 = vset.pattern.permute.xlu0 3
      %1838 = vperm.xlu0 %1837, %v336
      %v1839 = vpop.permute.xlu0 %1838
      %1841 = vset.pattern.permute.xlu0 11
      %1842 = vperm.xlu0 %1841, %v305
      %v1843 = vpop.permute.xlu0 %1842
      %1845 = vset.pattern.permute.xlu0 11
      %1846 = vperm.xlu0 %1845, %v306
      %v1847 = vpop.permute.xlu0 %1846
      %1849 = vset.pattern.permute.xlu0 11
      %1850 = vperm.xlu0 %1849, %v307
      %v1851 = vpop.permute.xlu0 %1850
      %1853 = vset.pattern.permute.xlu0 11
      %1854 = vperm.xlu0 %1853, %v308
      %v1855 = vpop.permute.xlu0 %1854
      %1857 = vset.pattern.permute.xlu0 11
      %1858 = vperm.xlu0 %1857, %v309
      %v1859 = vpop.permute.xlu0 %1858
      %1861 = vset.pattern.permute.xlu0 11
      %1862 = vperm.xlu0 %1861, %v310
      %v1863 = vpop.permute.xlu0 %1862
      %1865 = vset.pattern.permute.xlu0 11
      %1866 = vperm.xlu0 %1865, %v311
      %v1867 = vpop.permute.xlu0 %1866
      %1869 = vset.pattern.permute.xlu0 11
      %1870 = vperm.xlu0 %1869, %v312
      %v1871 = vpop.permute.xlu0 %1870
      %1873 = vset.pattern.permute.xlu0 11
      %1874 = vperm.xlu0 %1873, %v313
      %v1875 = vpop.permute.xlu0 %1874
      %1877 = vset.pattern.permute.xlu0 11
      %1878 = vperm.xlu0 %1877, %v314
      %v1879 = vpop.permute.xlu0 %1878
      %1881 = vset.pattern.permute.xlu0 11
      %1882 = vperm.xlu0 %1881, %v315
      %v1883 = vpop.permute.xlu0 %1882
      %1885 = vset.pattern.permute.xlu0 11
      %1886 = vperm.xlu0 %1885, %v316
      %v1887 = vpop.permute.xlu0 %1886
      %1889 = vset.pattern.permute.xlu0 11
      %1890 = vperm.xlu0 %1889, %v317
      %v1891 = vpop.permute.xlu0 %1890
      %1893 = vset.pattern.permute.xlu0 11
      %1894 = vperm.xlu0 %1893, %v318
      %v1895 = vpop.permute.xlu0 %1894
      %1897 = vset.pattern.permute.xlu0 11
      %1898 = vperm.xlu0 %1897, %v319
      %v1899 = vpop.permute.xlu0 %1898
      %1901 = vset.pattern.permute.xlu0 11
      %1902 = vperm.xlu0 %1901, %v320
      %v1903 = vpop.permute.xlu0 %1902
      %1905 = vset.pattern.permute.xlu0 11
      %1906 = vperm.xlu0 %1905, %v321
      %v1907 = vpop.permute.xlu0 %1906
      %1909 = vset.pattern.permute.xlu0 11
      %1910 = vperm.xlu0 %1909, %v322
      %v1911 = vpop.permute.xlu0 %1910
      %1913 = vset.pattern.permute.xlu0 11
      %1914 = vperm.xlu0 %1913, %v323
      %v1915 = vpop.permute.xlu0 %1914
      %1917 = vset.pattern.permute.xlu0 11
      %1918 = vperm.xlu0 %1917, %v324
      %v1919 = vpop.permute.xlu0 %1918
      %1921 = vset.pattern.permute.xlu0 11
      %1922 = vperm.xlu0 %1921, %v325
      %v1923 = vpop.permute.xlu0 %1922
      %1925 = vset.pattern.permute.xlu0 11
      %1926 = vperm.xlu0 %1925, %v326
      %v1927 = vpop.permute.xlu0 %1926
      %1929 = vset.pattern.permute.xlu0 11
      %1930 = vperm.xlu0 %1929, %v327
      %v1931 = vpop.permute.xlu0 %1930
      %1933 = vset.pattern.permute.xlu0 11
      %1934 = vperm.xlu0 %1933, %v328
      %v1935 = vpop.permute.xlu0 %1934
      %1937 = vset.pattern.permute.xlu0 11
      %1938 = vperm.xlu0 %1937, %v329
      %v1939 = vpop.permute.xlu0 %1938
      %1941 = vset.pattern.permute.xlu0 11
      %1942 = vperm.xlu0 %1941, %v330
      %v1943 = vpop.permute.xlu0 %1942
      %1945 = vset.pattern.permute.xlu0 11
      %1946 = vperm.xlu0 %1945, %v331
      %v1947 = vpop.permute.xlu0 %1946
      %1949 = vset.pattern.permute.xlu0 11
      %1950 = vperm.xlu0 %1949, %v332
      %v1951 = vpop.permute.xlu0 %1950
      %1953 = vset.pattern.permute.xlu0 11
      %1954 = vperm.xlu0 %1953, %v333
      %v1955 = vpop.permute.xlu0 %1954
      %1957 = vset.pattern.permute.xlu0 11
      %1958 = vperm.xlu0 %1957, %v334
      %v1959 = vpop.permute.xlu0 %1958
      %1961 = vset.pattern.permute.xlu0 11
      %1962 = vperm.xlu0 %1961, %v335
      %v1963 = vpop.permute.xlu0 %1962
      %1965 = vset.pattern.permute.xlu0 11
      %1966 = vperm.xlu0 %1965, %v336
      %v1967 = vpop.permute.xlu0 %1966
      %v1969 = vsel %vm560, %v1715, %v1843
      %v1970 = vsel %vm560, %v1719, %v1847
      %v1971 = vsel %vm560, %v1723, %v1851
      %v1972 = vsel %vm560, %v1727, %v1855
      %v1973 = vsel %vm560, %v1731, %v1859
      %v1974 = vsel %vm560, %v1735, %v1863
      %v1975 = vsel %vm560, %v1739, %v1867
      %v1976 = vsel %vm560, %v1743, %v1871
      %v1977 = vsel %vm560, %v1747, %v1875
      %v1978 = vsel %vm560, %v1751, %v1879
      %v1979 = vsel %vm560, %v1755, %v1883
      %v1980 = vsel %vm560, %v1759, %v1887
      %v1981 = vsel %vm560, %v1763, %v1891
      %v1982 = vsel %vm560, %v1767, %v1895
      %v1983 = vsel %vm560, %v1771, %v1899
      %v1984 = vsel %vm560, %v1775, %v1903
      %v1985 = vsel %vm560, %v1779, %v1907
      %v1986 = vsel %vm560, %v1783, %v1911
      %v1987 = vsel %vm560, %v1787, %v1915
      %v1988 = vsel %vm560, %v1791, %v1919
      %v1989 = vsel %vm560, %v1795, %v1923
      %v1990 = vsel %vm560, %v1799, %v1927
      %v1991 = vsel %vm560, %v1803, %v1931
      %v1992 = vsel %vm560, %v1807, %v1935
      %v1993 = vsel %vm560, %v1811, %v1939
      %v1994 = vsel %vm560, %v1815, %v1943
      %v1995 = vsel %vm560, %v1819, %v1947
      %v1996 = vsel %vm560, %v1823, %v1951
      %v1997 = vsel %vm560, %v1827, %v1955
      %v1998 = vsel %vm560, %v1831, %v1959
      %v1999 = vsel %vm560, %v1835, %v1963
      %v2000 = vsel %vm560, %v1839, %v1967
      %v2001 = vperm.slane %v480, 3
      %v2002 = vperm.slane %v482, 3
      %v2003 = vperm.slane %v485, 3
      %v2004 = vperm.slane %v487, 3
      %v2005 = vperm.slane %v490, 3
      %v2006 = vperm.slane %v492, 3
      %v2007 = vperm.slane %v495, 3
      %v2008 = vperm.slane %v497, 3
      %v2009 = vperm.slane %v500, 3
      %v2010 = vperm.slane %v502, 3
      %v2011 = vperm.slane %v505, 3
      %v2012 = vperm.slane %v507, 3
      %v2013 = vperm.slane %v510, 3
      %v2014 = vperm.slane %v512, 3
      %v2015 = vperm.slane %v515, 3
      %v2016 = vperm.slane %v517, 3
      %v2017 = vperm.slane %v520, 3
      %v2018 = vperm.slane %v522, 3
      %v2019 = vperm.slane %v525, 3
      %v2020 = vperm.slane %v527, 3
      %v2021 = vperm.slane %v530, 3
      %v2022 = vperm.slane %v532, 3
      %v2023 = vperm.slane %v535, 3
      %v2024 = vperm.slane %v537, 3
      %v2025 = vperm.slane %v540, 3
      %v2026 = vperm.slane %v542, 3
      %v2027 = vperm.slane %v545, 3
      %v2028 = vperm.slane %v547, 3
      %v2029 = vperm.slane %v550, 3
      %v2030 = vperm.slane %v552, 3
      %v2031 = vperm.slane %v555, 3
      %v2032 = vperm.slane %v557, 3
      %v2033 = vmul.f32 %v1969, %v2001
      %v2034 = vmul.f32 %v1970, %v2002
      %v2035 = vmul.f32 %v1971, %v2003
      %v2036 = vmul.f32 %v1972, %v2004
      %v2037 = vmul.f32 %v1973, %v2005
      %v2038 = vmul.f32 %v1974, %v2006
      %v2039 = vmul.f32 %v1975, %v2007
      %v2040 = vmul.f32 %v1976, %v2008
      %v2041 = vmul.f32 %v1977, %v2009
      %v2042 = vmul.f32 %v1978, %v2010
      %v2043 = vmul.f32 %v1979, %v2011
      %v2044 = vmul.f32 %v1980, %v2012
      %v2045 = vmul.f32 %v1981, %v2013
      %v2046 = vmul.f32 %v1982, %v2014
      %v2047 = vmul.f32 %v1983, %v2015
      %v2048 = vmul.f32 %v1984, %v2016
      %v2049 = vmul.f32 %v1985, %v2017
      %v2050 = vmul.f32 %v1986, %v2018
      %v2051 = vmul.f32 %v1987, %v2019
      %v2052 = vmul.f32 %v1988, %v2020
      %v2053 = vmul.f32 %v1989, %v2021
      %v2054 = vmul.f32 %v1990, %v2022
      %v2055 = vmul.f32 %v1991, %v2023
      %v2056 = vmul.f32 %v1992, %v2024
      %v2057 = vmul.f32 %v1993, %v2025
      %v2058 = vmul.f32 %v1994, %v2026
      %v2059 = vmul.f32 %v1995, %v2027
      %v2060 = vmul.f32 %v1996, %v2028
      %v2061 = vmul.f32 %v1997, %v2029
      %v2062 = vmul.f32 %v1998, %v2030
      %v2063 = vmul.f32 %v1999, %v2031
      %v2064 = vmul.f32 %v2000, %v2032
      %v2065 = vadd.f32 %v1681, %v2033
      %v2066 = vadd.f32 %v1682, %v2034
      %v2067 = vadd.f32 %v1683, %v2035
      %v2068 = vadd.f32 %v1684, %v2036
      %v2069 = vadd.f32 %v1685, %v2037
      %v2070 = vadd.f32 %v1686, %v2038
      %v2071 = vadd.f32 %v1687, %v2039
      %v2072 = vadd.f32 %v1688, %v2040
      %v2073 = vadd.f32 %v1689, %v2041
      %v2074 = vadd.f32 %v1690, %v2042
      %v2075 = vadd.f32 %v1691, %v2043
      %v2076 = vadd.f32 %v1692, %v2044
      %v2077 = vadd.f32 %v1693, %v2045
      %v2078 = vadd.f32 %v1694, %v2046
      %v2079 = vadd.f32 %v1695, %v2047
      %v2080 = vadd.f32 %v1696, %v2048
      %v2081 = vadd.f32 %v1697, %v2049
      %v2082 = vadd.f32 %v1698, %v2050
      %v2083 = vadd.f32 %v1699, %v2051
      %v2084 = vadd.f32 %v1700, %v2052
      %v2085 = vadd.f32 %v1701, %v2053
      %v2086 = vadd.f32 %v1702, %v2054
      %v2087 = vadd.f32 %v1703, %v2055
      %v2088 = vadd.f32 %v1704, %v2056
      %v2089 = vadd.f32 %v1705, %v2057
      %v2090 = vadd.f32 %v1706, %v2058
      %v2091 = vadd.f32 %v1707, %v2059
      %v2092 = vadd.f32 %v1708, %v2060
      %v2093 = vadd.f32 %v1709, %v2061
      %v2094 = vadd.f32 %v1710, %v2062
      %v2095 = vadd.f32 %v1711, %v2063
      %v2096 = vadd.f32 %v1712, %v2064
      %2097 = vset.pattern.permute.xlu0 4
      %2098 = vperm.xlu0 %2097, %v305
      %v2099 = vpop.permute.xlu0 %2098
      %2101 = vset.pattern.permute.xlu0 4
      %2102 = vperm.xlu0 %2101, %v306
      %v2103 = vpop.permute.xlu0 %2102
      %2105 = vset.pattern.permute.xlu0 4
      %2106 = vperm.xlu0 %2105, %v307
      %v2107 = vpop.permute.xlu0 %2106
      %2109 = vset.pattern.permute.xlu0 4
      %2110 = vperm.xlu0 %2109, %v308
      %v2111 = vpop.permute.xlu0 %2110
      %2113 = vset.pattern.permute.xlu0 4
      %2114 = vperm.xlu0 %2113, %v309
      %v2115 = vpop.permute.xlu0 %2114
      %2117 = vset.pattern.permute.xlu0 4
      %2118 = vperm.xlu0 %2117, %v310
      %v2119 = vpop.permute.xlu0 %2118
      %2121 = vset.pattern.permute.xlu0 4
      %2122 = vperm.xlu0 %2121, %v311
      %v2123 = vpop.permute.xlu0 %2122
      %2125 = vset.pattern.permute.xlu0 4
      %2126 = vperm.xlu0 %2125, %v312
      %v2127 = vpop.permute.xlu0 %2126
      %2129 = vset.pattern.permute.xlu0 4
      %2130 = vperm.xlu0 %2129, %v313
      %v2131 = vpop.permute.xlu0 %2130
      %2133 = vset.pattern.permute.xlu0 4
      %2134 = vperm.xlu0 %2133, %v314
      %v2135 = vpop.permute.xlu0 %2134
      %2137 = vset.pattern.permute.xlu0 4
      %2138 = vperm.xlu0 %2137, %v315
      %v2139 = vpop.permute.xlu0 %2138
      %2141 = vset.pattern.permute.xlu0 4
      %2142 = vperm.xlu0 %2141, %v316
      %v2143 = vpop.permute.xlu0 %2142
      %2145 = vset.pattern.permute.xlu0 4
      %2146 = vperm.xlu0 %2145, %v317
      %v2147 = vpop.permute.xlu0 %2146
      %2149 = vset.pattern.permute.xlu0 4
      %2150 = vperm.xlu0 %2149, %v318
      %v2151 = vpop.permute.xlu0 %2150
      %2153 = vset.pattern.permute.xlu0 4
      %2154 = vperm.xlu0 %2153, %v319
      %v2155 = vpop.permute.xlu0 %2154
      %2157 = vset.pattern.permute.xlu0 4
      %2158 = vperm.xlu0 %2157, %v320
      %v2159 = vpop.permute.xlu0 %2158
      %2161 = vset.pattern.permute.xlu0 4
      %2162 = vperm.xlu0 %2161, %v321
      %v2163 = vpop.permute.xlu0 %2162
      %2165 = vset.pattern.permute.xlu0 4
      %2166 = vperm.xlu0 %2165, %v322
      %v2167 = vpop.permute.xlu0 %2166
      %2169 = vset.pattern.permute.xlu0 4
      %2170 = vperm.xlu0 %2169, %v323
      %v2171 = vpop.permute.xlu0 %2170
      %2173 = vset.pattern.permute.xlu0 4
      %2174 = vperm.xlu0 %2173, %v324
      %v2175 = vpop.permute.xlu0 %2174
      %2177 = vset.pattern.permute.xlu0 4
      %2178 = vperm.xlu0 %2177, %v325
      %v2179 = vpop.permute.xlu0 %2178
      %2181 = vset.pattern.permute.xlu0 4
      %2182 = vperm.xlu0 %2181, %v326
      %v2183 = vpop.permute.xlu0 %2182
      %2185 = vset.pattern.permute.xlu0 4
      %2186 = vperm.xlu0 %2185, %v327
      %v2187 = vpop.permute.xlu0 %2186
      %2189 = vset.pattern.permute.xlu0 4
      %2190 = vperm.xlu0 %2189, %v328
      %v2191 = vpop.permute.xlu0 %2190
      %2193 = vset.pattern.permute.xlu0 4
      %2194 = vperm.xlu0 %2193, %v329
      %v2195 = vpop.permute.xlu0 %2194
      %2197 = vset.pattern.permute.xlu0 4
      %2198 = vperm.xlu0 %2197, %v330
      %v2199 = vpop.permute.xlu0 %2198
      %2201 = vset.pattern.permute.xlu0 4
      %2202 = vperm.xlu0 %2201, %v331
      %v2203 = vpop.permute.xlu0 %2202
      %2205 = vset.pattern.permute.xlu0 4
      %2206 = vperm.xlu0 %2205, %v332
      %v2207 = vpop.permute.xlu0 %2206
      %2209 = vset.pattern.permute.xlu0 4
      %2210 = vperm.xlu0 %2209, %v333
      %v2211 = vpop.permute.xlu0 %2210
      %2213 = vset.pattern.permute.xlu0 4
      %2214 = vperm.xlu0 %2213, %v334
      %v2215 = vpop.permute.xlu0 %2214
      %2217 = vset.pattern.permute.xlu0 4
      %2218 = vperm.xlu0 %2217, %v335
      %v2219 = vpop.permute.xlu0 %2218
      %2221 = vset.pattern.permute.xlu0 4
      %2222 = vperm.xlu0 %2221, %v336
      %v2223 = vpop.permute.xlu0 %2222
      %2225 = vset.pattern.permute.xlu0 12
      %2226 = vperm.xlu0 %2225, %v305
      %v2227 = vpop.permute.xlu0 %2226
      %2229 = vset.pattern.permute.xlu0 12
      %2230 = vperm.xlu0 %2229, %v306
      %v2231 = vpop.permute.xlu0 %2230
      %2233 = vset.pattern.permute.xlu0 12
      %2234 = vperm.xlu0 %2233, %v307
      %v2235 = vpop.permute.xlu0 %2234
      %2237 = vset.pattern.permute.xlu0 12
      %2238 = vperm.xlu0 %2237, %v308
      %v2239 = vpop.permute.xlu0 %2238
      %2241 = vset.pattern.permute.xlu0 12
      %2242 = vperm.xlu0 %2241, %v309
      %v2243 = vpop.permute.xlu0 %2242
      %2245 = vset.pattern.permute.xlu0 12
      %2246 = vperm.xlu0 %2245, %v310
      %v2247 = vpop.permute.xlu0 %2246
      %2249 = vset.pattern.permute.xlu0 12
      %2250 = vperm.xlu0 %2249, %v311
      %v2251 = vpop.permute.xlu0 %2250
      %2253 = vset.pattern.permute.xlu0 12
      %2254 = vperm.xlu0 %2253, %v312
      %v2255 = vpop.permute.xlu0 %2254
      %2257 = vset.pattern.permute.xlu0 12
      %2258 = vperm.xlu0 %2257, %v313
      %v2259 = vpop.permute.xlu0 %2258
      %2261 = vset.pattern.permute.xlu0 12
      %2262 = vperm.xlu0 %2261, %v314
      %v2263 = vpop.permute.xlu0 %2262
      %2265 = vset.pattern.permute.xlu0 12
      %2266 = vperm.xlu0 %2265, %v315
      %v2267 = vpop.permute.xlu0 %2266
      %2269 = vset.pattern.permute.xlu0 12
      %2270 = vperm.xlu0 %2269, %v316
      %v2271 = vpop.permute.xlu0 %2270
      %2273 = vset.pattern.permute.xlu0 12
      %2274 = vperm.xlu0 %2273, %v317
      %v2275 = vpop.permute.xlu0 %2274
      %2277 = vset.pattern.permute.xlu0 12
      %2278 = vperm.xlu0 %2277, %v318
      %v2279 = vpop.permute.xlu0 %2278
      %2281 = vset.pattern.permute.xlu0 12
      %2282 = vperm.xlu0 %2281, %v319
      %v2283 = vpop.permute.xlu0 %2282
      %2285 = vset.pattern.permute.xlu0 12
      %2286 = vperm.xlu0 %2285, %v320
      %v2287 = vpop.permute.xlu0 %2286
      %2289 = vset.pattern.permute.xlu0 12
      %2290 = vperm.xlu0 %2289, %v321
      %v2291 = vpop.permute.xlu0 %2290
      %2293 = vset.pattern.permute.xlu0 12
      %2294 = vperm.xlu0 %2293, %v322
      %v2295 = vpop.permute.xlu0 %2294
      %2297 = vset.pattern.permute.xlu0 12
      %2298 = vperm.xlu0 %2297, %v323
      %v2299 = vpop.permute.xlu0 %2298
      %2301 = vset.pattern.permute.xlu0 12
      %2302 = vperm.xlu0 %2301, %v324
      %v2303 = vpop.permute.xlu0 %2302
      %2305 = vset.pattern.permute.xlu0 12
      %2306 = vperm.xlu0 %2305, %v325
      %v2307 = vpop.permute.xlu0 %2306
      %2309 = vset.pattern.permute.xlu0 12
      %2310 = vperm.xlu0 %2309, %v326
      %v2311 = vpop.permute.xlu0 %2310
      %2313 = vset.pattern.permute.xlu0 12
      %2314 = vperm.xlu0 %2313, %v327
      %v2315 = vpop.permute.xlu0 %2314
      %2317 = vset.pattern.permute.xlu0 12
      %2318 = vperm.xlu0 %2317, %v328
      %v2319 = vpop.permute.xlu0 %2318
      %2321 = vset.pattern.permute.xlu0 12
      %2322 = vperm.xlu0 %2321, %v329
      %v2323 = vpop.permute.xlu0 %2322
      %2325 = vset.pattern.permute.xlu0 12
      %2326 = vperm.xlu0 %2325, %v330
      %v2327 = vpop.permute.xlu0 %2326
      %2329 = vset.pattern.permute.xlu0 12
      %2330 = vperm.xlu0 %2329, %v331
      %v2331 = vpop.permute.xlu0 %2330
      %2333 = vset.pattern.permute.xlu0 12
      %2334 = vperm.xlu0 %2333, %v332
      %v2335 = vpop.permute.xlu0 %2334
      %2337 = vset.pattern.permute.xlu0 12
      %2338 = vperm.xlu0 %2337, %v333
      %v2339 = vpop.permute.xlu0 %2338
      %2341 = vset.pattern.permute.xlu0 12
      %2342 = vperm.xlu0 %2341, %v334
      %v2343 = vpop.permute.xlu0 %2342
      %2345 = vset.pattern.permute.xlu0 12
      %2346 = vperm.xlu0 %2345, %v335
      %v2347 = vpop.permute.xlu0 %2346
      %2349 = vset.pattern.permute.xlu0 12
      %2350 = vperm.xlu0 %2349, %v336
      %v2351 = vpop.permute.xlu0 %2350
      %v2353 = vsel %vm560, %v2099, %v2227
      %v2354 = vsel %vm560, %v2103, %v2231
      %v2355 = vsel %vm560, %v2107, %v2235
      %v2356 = vsel %vm560, %v2111, %v2239
      %v2357 = vsel %vm560, %v2115, %v2243
      %v2358 = vsel %vm560, %v2119, %v2247
      %v2359 = vsel %vm560, %v2123, %v2251
      %v2360 = vsel %vm560, %v2127, %v2255
      %v2361 = vsel %vm560, %v2131, %v2259
      %v2362 = vsel %vm560, %v2135, %v2263
      %v2363 = vsel %vm560, %v2139, %v2267
      %v2364 = vsel %vm560, %v2143, %v2271
      %v2365 = vsel %vm560, %v2147, %v2275
      %v2366 = vsel %vm560, %v2151, %v2279
      %v2367 = vsel %vm560, %v2155, %v2283
      %v2368 = vsel %vm560, %v2159, %v2287
      %v2369 = vsel %vm560, %v2163, %v2291
      %v2370 = vsel %vm560, %v2167, %v2295
      %v2371 = vsel %vm560, %v2171, %v2299
      %v2372 = vsel %vm560, %v2175, %v2303
      %v2373 = vsel %vm560, %v2179, %v2307
      %v2374 = vsel %vm560, %v2183, %v2311
      %v2375 = vsel %vm560, %v2187, %v2315
      %v2376 = vsel %vm560, %v2191, %v2319
      %v2377 = vsel %vm560, %v2195, %v2323
      %v2378 = vsel %vm560, %v2199, %v2327
      %v2379 = vsel %vm560, %v2203, %v2331
      %v2380 = vsel %vm560, %v2207, %v2335
      %v2381 = vsel %vm560, %v2211, %v2339
      %v2382 = vsel %vm560, %v2215, %v2343
      %v2383 = vsel %vm560, %v2219, %v2347
      %v2384 = vsel %vm560, %v2223, %v2351
      %v2385 = vperm.slane %v480, 4
      %v2386 = vperm.slane %v482, 4
      %v2387 = vperm.slane %v485, 4
      %v2388 = vperm.slane %v487, 4
      %v2389 = vperm.slane %v490, 4
      %v2390 = vperm.slane %v492, 4
      %v2391 = vperm.slane %v495, 4
      %v2392 = vperm.slane %v497, 4
      %v2393 = vperm.slane %v500, 4
      %v2394 = vperm.slane %v502, 4
      %v2395 = vperm.slane %v505, 4
      %v2396 = vperm.slane %v507, 4
      %v2397 = vperm.slane %v510, 4
      %v2398 = vperm.slane %v512, 4
      %v2399 = vperm.slane %v515, 4
      %v2400 = vperm.slane %v517, 4
      %v2401 = vperm.slane %v520, 4
      %v2402 = vperm.slane %v522, 4
      %v2403 = vperm.slane %v525, 4
      %v2404 = vperm.slane %v527, 4
      %v2405 = vperm.slane %v530, 4
      %v2406 = vperm.slane %v532, 4
      %v2407 = vperm.slane %v535, 4
      %v2408 = vperm.slane %v537, 4
      %v2409 = vperm.slane %v540, 4
      %v2410 = vperm.slane %v542, 4
      %v2411 = vperm.slane %v545, 4
      %v2412 = vperm.slane %v547, 4
      %v2413 = vperm.slane %v550, 4
      %v2414 = vperm.slane %v552, 4
      %v2415 = vperm.slane %v555, 4
      %v2416 = vperm.slane %v557, 4
      %v2417 = vmul.f32 %v2353, %v2385
      %v2418 = vmul.f32 %v2354, %v2386
      %v2419 = vmul.f32 %v2355, %v2387
      %v2420 = vmul.f32 %v2356, %v2388
      %v2421 = vmul.f32 %v2357, %v2389
      %v2422 = vmul.f32 %v2358, %v2390
      %v2423 = vmul.f32 %v2359, %v2391
      %v2424 = vmul.f32 %v2360, %v2392
      %v2425 = vmul.f32 %v2361, %v2393
      %v2426 = vmul.f32 %v2362, %v2394
      %v2427 = vmul.f32 %v2363, %v2395
      %v2428 = vmul.f32 %v2364, %v2396
      %v2429 = vmul.f32 %v2365, %v2397
      %v2430 = vmul.f32 %v2366, %v2398
      %v2431 = vmul.f32 %v2367, %v2399
      %v2432 = vmul.f32 %v2368, %v2400
      %v2433 = vmul.f32 %v2369, %v2401
      %v2434 = vmul.f32 %v2370, %v2402
      %v2435 = vmul.f32 %v2371, %v2403
      %v2436 = vmul.f32 %v2372, %v2404
      %v2437 = vmul.f32 %v2373, %v2405
      %v2438 = vmul.f32 %v2374, %v2406
      %v2439 = vmul.f32 %v2375, %v2407
      %v2440 = vmul.f32 %v2376, %v2408
      %v2441 = vmul.f32 %v2377, %v2409
      %v2442 = vmul.f32 %v2378, %v2410
      %v2443 = vmul.f32 %v2379, %v2411
      %v2444 = vmul.f32 %v2380, %v2412
      %v2445 = vmul.f32 %v2381, %v2413
      %v2446 = vmul.f32 %v2382, %v2414
      %v2447 = vmul.f32 %v2383, %v2415
      %v2448 = vmul.f32 %v2384, %v2416
      %v2449 = vadd.f32 %v2065, %v2417
      %v2450 = vadd.f32 %v2066, %v2418
      %v2451 = vadd.f32 %v2067, %v2419
      %v2452 = vadd.f32 %v2068, %v2420
      %v2453 = vadd.f32 %v2069, %v2421
      %v2454 = vadd.f32 %v2070, %v2422
      %v2455 = vadd.f32 %v2071, %v2423
      %v2456 = vadd.f32 %v2072, %v2424
      %v2457 = vadd.f32 %v2073, %v2425
      %v2458 = vadd.f32 %v2074, %v2426
      %v2459 = vadd.f32 %v2075, %v2427
      %v2460 = vadd.f32 %v2076, %v2428
      %v2461 = vadd.f32 %v2077, %v2429
      %v2462 = vadd.f32 %v2078, %v2430
      %v2463 = vadd.f32 %v2079, %v2431
      %v2464 = vadd.f32 %v2080, %v2432
      %v2465 = vadd.f32 %v2081, %v2433
      %v2466 = vadd.f32 %v2082, %v2434
      %v2467 = vadd.f32 %v2083, %v2435
      %v2468 = vadd.f32 %v2084, %v2436
      %v2469 = vadd.f32 %v2085, %v2437
      %v2470 = vadd.f32 %v2086, %v2438
      %v2471 = vadd.f32 %v2087, %v2439
      %v2472 = vadd.f32 %v2088, %v2440
      %v2473 = vadd.f32 %v2089, %v2441
      %v2474 = vadd.f32 %v2090, %v2442
      %v2475 = vadd.f32 %v2091, %v2443
      %v2476 = vadd.f32 %v2092, %v2444
      %v2477 = vadd.f32 %v2093, %v2445
      %v2478 = vadd.f32 %v2094, %v2446
      %v2479 = vadd.f32 %v2095, %v2447
      %v2480 = vadd.f32 %v2096, %v2448
      %2481 = vset.pattern.permute.xlu0 5
      %2482 = vperm.xlu0 %2481, %v305
      %v2483 = vpop.permute.xlu0 %2482
      %2485 = vset.pattern.permute.xlu0 5
      %2486 = vperm.xlu0 %2485, %v306
      %v2487 = vpop.permute.xlu0 %2486
      %2489 = vset.pattern.permute.xlu0 5
      %2490 = vperm.xlu0 %2489, %v307
      %v2491 = vpop.permute.xlu0 %2490
      %2493 = vset.pattern.permute.xlu0 5
      %2494 = vperm.xlu0 %2493, %v308
      %v2495 = vpop.permute.xlu0 %2494
      %2497 = vset.pattern.permute.xlu0 5
      %2498 = vperm.xlu0 %2497, %v309
      %v2499 = vpop.permute.xlu0 %2498
      %2501 = vset.pattern.permute.xlu0 5
      %2502 = vperm.xlu0 %2501, %v310
      %v2503 = vpop.permute.xlu0 %2502
      %2505 = vset.pattern.permute.xlu0 5
      %2506 = vperm.xlu0 %2505, %v311
      %v2507 = vpop.permute.xlu0 %2506
      %2509 = vset.pattern.permute.xlu0 5
      %2510 = vperm.xlu0 %2509, %v312
      %v2511 = vpop.permute.xlu0 %2510
      %2513 = vset.pattern.permute.xlu0 5
      %2514 = vperm.xlu0 %2513, %v313
      %v2515 = vpop.permute.xlu0 %2514
      %2517 = vset.pattern.permute.xlu0 5
      %2518 = vperm.xlu0 %2517, %v314
      %v2519 = vpop.permute.xlu0 %2518
      %2521 = vset.pattern.permute.xlu0 5
      %2522 = vperm.xlu0 %2521, %v315
      %v2523 = vpop.permute.xlu0 %2522
      %2525 = vset.pattern.permute.xlu0 5
      %2526 = vperm.xlu0 %2525, %v316
      %v2527 = vpop.permute.xlu0 %2526
      %2529 = vset.pattern.permute.xlu0 5
      %2530 = vperm.xlu0 %2529, %v317
      %v2531 = vpop.permute.xlu0 %2530
      %2533 = vset.pattern.permute.xlu0 5
      %2534 = vperm.xlu0 %2533, %v318
      %v2535 = vpop.permute.xlu0 %2534
      %2537 = vset.pattern.permute.xlu0 5
      %2538 = vperm.xlu0 %2537, %v319
      %v2539 = vpop.permute.xlu0 %2538
      %2541 = vset.pattern.permute.xlu0 5
      %2542 = vperm.xlu0 %2541, %v320
      %v2543 = vpop.permute.xlu0 %2542
      %2545 = vset.pattern.permute.xlu0 5
      %2546 = vperm.xlu0 %2545, %v321
      %v2547 = vpop.permute.xlu0 %2546
      %2549 = vset.pattern.permute.xlu0 5
      %2550 = vperm.xlu0 %2549, %v322
      %v2551 = vpop.permute.xlu0 %2550
      %2553 = vset.pattern.permute.xlu0 5
      %2554 = vperm.xlu0 %2553, %v323
      %v2555 = vpop.permute.xlu0 %2554
      %2557 = vset.pattern.permute.xlu0 5
      %2558 = vperm.xlu0 %2557, %v324
      %v2559 = vpop.permute.xlu0 %2558
      %2561 = vset.pattern.permute.xlu0 5
      %2562 = vperm.xlu0 %2561, %v325
      %v2563 = vpop.permute.xlu0 %2562
      %2565 = vset.pattern.permute.xlu0 5
      %2566 = vperm.xlu0 %2565, %v326
      %v2567 = vpop.permute.xlu0 %2566
      %2569 = vset.pattern.permute.xlu0 5
      %2570 = vperm.xlu0 %2569, %v327
      %v2571 = vpop.permute.xlu0 %2570
      %2573 = vset.pattern.permute.xlu0 5
      %2574 = vperm.xlu0 %2573, %v328
      %v2575 = vpop.permute.xlu0 %2574
      %2577 = vset.pattern.permute.xlu0 5
      %2578 = vperm.xlu0 %2577, %v329
      %v2579 = vpop.permute.xlu0 %2578
      %2581 = vset.pattern.permute.xlu0 5
      %2582 = vperm.xlu0 %2581, %v330
      %v2583 = vpop.permute.xlu0 %2582
      %2585 = vset.pattern.permute.xlu0 5
      %2586 = vperm.xlu0 %2585, %v331
      %v2587 = vpop.permute.xlu0 %2586
      %2589 = vset.pattern.permute.xlu0 5
      %2590 = vperm.xlu0 %2589, %v332
      %v2591 = vpop.permute.xlu0 %2590
      %2593 = vset.pattern.permute.xlu0 5
      %2594 = vperm.xlu0 %2593, %v333
      %v2595 = vpop.permute.xlu0 %2594
      %2597 = vset.pattern.permute.xlu0 5
      %2598 = vperm.xlu0 %2597, %v334
      %v2599 = vpop.permute.xlu0 %2598
      %2601 = vset.pattern.permute.xlu0 5
      %2602 = vperm.xlu0 %2601, %v335
      %v2603 = vpop.permute.xlu0 %2602
      %2605 = vset.pattern.permute.xlu0 5
      %2606 = vperm.xlu0 %2605, %v336
      %v2607 = vpop.permute.xlu0 %2606
      %2609 = vset.pattern.permute.xlu0 13
      %2610 = vperm.xlu0 %2609, %v305
      %v2611 = vpop.permute.xlu0 %2610
      %2613 = vset.pattern.permute.xlu0 13
      %2614 = vperm.xlu0 %2613, %v306
      %v2615 = vpop.permute.xlu0 %2614
      %2617 = vset.pattern.permute.xlu0 13
      %2618 = vperm.xlu0 %2617, %v307
      %v2619 = vpop.permute.xlu0 %2618
      %2621 = vset.pattern.permute.xlu0 13
      %2622 = vperm.xlu0 %2621, %v308
      %v2623 = vpop.permute.xlu0 %2622
      %2625 = vset.pattern.permute.xlu0 13
      %2626 = vperm.xlu0 %2625, %v309
      %v2627 = vpop.permute.xlu0 %2626
      %2629 = vset.pattern.permute.xlu0 13
      %2630 = vperm.xlu0 %2629, %v310
      %v2631 = vpop.permute.xlu0 %2630
      %2633 = vset.pattern.permute.xlu0 13
      %2634 = vperm.xlu0 %2633, %v311
      %v2635 = vpop.permute.xlu0 %2634
      %2637 = vset.pattern.permute.xlu0 13
      %2638 = vperm.xlu0 %2637, %v312
      %v2639 = vpop.permute.xlu0 %2638
      %2641 = vset.pattern.permute.xlu0 13
      %2642 = vperm.xlu0 %2641, %v313
      %v2643 = vpop.permute.xlu0 %2642
      %2645 = vset.pattern.permute.xlu0 13
      %2646 = vperm.xlu0 %2645, %v314
      %v2647 = vpop.permute.xlu0 %2646
      %2649 = vset.pattern.permute.xlu0 13
      %2650 = vperm.xlu0 %2649, %v315
      %v2651 = vpop.permute.xlu0 %2650
      %2653 = vset.pattern.permute.xlu0 13
      %2654 = vperm.xlu0 %2653, %v316
      %v2655 = vpop.permute.xlu0 %2654
      %2657 = vset.pattern.permute.xlu0 13
      %2658 = vperm.xlu0 %2657, %v317
      %v2659 = vpop.permute.xlu0 %2658
      %2661 = vset.pattern.permute.xlu0 13
      %2662 = vperm.xlu0 %2661, %v318
      %v2663 = vpop.permute.xlu0 %2662
      %2665 = vset.pattern.permute.xlu0 13
      %2666 = vperm.xlu0 %2665, %v319
      %v2667 = vpop.permute.xlu0 %2666
      %2669 = vset.pattern.permute.xlu0 13
      %2670 = vperm.xlu0 %2669, %v320
      %v2671 = vpop.permute.xlu0 %2670
      %2673 = vset.pattern.permute.xlu0 13
      %2674 = vperm.xlu0 %2673, %v321
      %v2675 = vpop.permute.xlu0 %2674
      %2677 = vset.pattern.permute.xlu0 13
      %2678 = vperm.xlu0 %2677, %v322
      %v2679 = vpop.permute.xlu0 %2678
      %2681 = vset.pattern.permute.xlu0 13
      %2682 = vperm.xlu0 %2681, %v323
      %v2683 = vpop.permute.xlu0 %2682
      %2685 = vset.pattern.permute.xlu0 13
      %2686 = vperm.xlu0 %2685, %v324
      %v2687 = vpop.permute.xlu0 %2686
      %2689 = vset.pattern.permute.xlu0 13
      %2690 = vperm.xlu0 %2689, %v325
      %v2691 = vpop.permute.xlu0 %2690
      %2693 = vset.pattern.permute.xlu0 13
      %2694 = vperm.xlu0 %2693, %v326
      %v2695 = vpop.permute.xlu0 %2694
      %2697 = vset.pattern.permute.xlu0 13
      %2698 = vperm.xlu0 %2697, %v327
      %v2699 = vpop.permute.xlu0 %2698
      %2701 = vset.pattern.permute.xlu0 13
      %2702 = vperm.xlu0 %2701, %v328
      %v2703 = vpop.permute.xlu0 %2702
      %2705 = vset.pattern.permute.xlu0 13
      %2706 = vperm.xlu0 %2705, %v329
      %v2707 = vpop.permute.xlu0 %2706
      %2709 = vset.pattern.permute.xlu0 13
      %2710 = vperm.xlu0 %2709, %v330
      %v2711 = vpop.permute.xlu0 %2710
      %2713 = vset.pattern.permute.xlu0 13
      %2714 = vperm.xlu0 %2713, %v331
      %v2715 = vpop.permute.xlu0 %2714
      %2717 = vset.pattern.permute.xlu0 13
      %2718 = vperm.xlu0 %2717, %v332
      %v2719 = vpop.permute.xlu0 %2718
      %2721 = vset.pattern.permute.xlu0 13
      %2722 = vperm.xlu0 %2721, %v333
      %v2723 = vpop.permute.xlu0 %2722
      %2725 = vset.pattern.permute.xlu0 13
      %2726 = vperm.xlu0 %2725, %v334
      %v2727 = vpop.permute.xlu0 %2726
      %2729 = vset.pattern.permute.xlu0 13
      %2730 = vperm.xlu0 %2729, %v335
      %v2731 = vpop.permute.xlu0 %2730
      %2733 = vset.pattern.permute.xlu0 13
      %2734 = vperm.xlu0 %2733, %v336
      %v2735 = vpop.permute.xlu0 %2734
      %v2737 = vsel %vm560, %v2483, %v2611
      %v2738 = vsel %vm560, %v2487, %v2615
      %v2739 = vsel %vm560, %v2491, %v2619
      %v2740 = vsel %vm560, %v2495, %v2623
      %v2741 = vsel %vm560, %v2499, %v2627
      %v2742 = vsel %vm560, %v2503, %v2631
      %v2743 = vsel %vm560, %v2507, %v2635
      %v2744 = vsel %vm560, %v2511, %v2639
      %v2745 = vsel %vm560, %v2515, %v2643
      %v2746 = vsel %vm560, %v2519, %v2647
      %v2747 = vsel %vm560, %v2523, %v2651
      %v2748 = vsel %vm560, %v2527, %v2655
      %v2749 = vsel %vm560, %v2531, %v2659
      %v2750 = vsel %vm560, %v2535, %v2663
      %v2751 = vsel %vm560, %v2539, %v2667
      %v2752 = vsel %vm560, %v2543, %v2671
      %v2753 = vsel %vm560, %v2547, %v2675
      %v2754 = vsel %vm560, %v2551, %v2679
      %v2755 = vsel %vm560, %v2555, %v2683
      %v2756 = vsel %vm560, %v2559, %v2687
      %v2757 = vsel %vm560, %v2563, %v2691
      %v2758 = vsel %vm560, %v2567, %v2695
      %v2759 = vsel %vm560, %v2571, %v2699
      %v2760 = vsel %vm560, %v2575, %v2703
      %v2761 = vsel %vm560, %v2579, %v2707
      %v2762 = vsel %vm560, %v2583, %v2711
      %v2763 = vsel %vm560, %v2587, %v2715
      %v2764 = vsel %vm560, %v2591, %v2719
      %v2765 = vsel %vm560, %v2595, %v2723
      %v2766 = vsel %vm560, %v2599, %v2727
      %v2767 = vsel %vm560, %v2603, %v2731
      %v2768 = vsel %vm560, %v2607, %v2735
      %v2769 = vperm.slane %v480, 5
      %v2770 = vperm.slane %v482, 5
      %v2771 = vperm.slane %v485, 5
      %v2772 = vperm.slane %v487, 5
      %v2773 = vperm.slane %v490, 5
      %v2774 = vperm.slane %v492, 5
      %v2775 = vperm.slane %v495, 5
      %v2776 = vperm.slane %v497, 5
      %v2777 = vperm.slane %v500, 5
      %v2778 = vperm.slane %v502, 5
      %v2779 = vperm.slane %v505, 5
      %v2780 = vperm.slane %v507, 5
      %v2781 = vperm.slane %v510, 5
      %v2782 = vperm.slane %v512, 5
      %v2783 = vperm.slane %v515, 5
      %v2784 = vperm.slane %v517, 5
      %v2785 = vperm.slane %v520, 5
      %v2786 = vperm.slane %v522, 5
      %v2787 = vperm.slane %v525, 5
      %v2788 = vperm.slane %v527, 5
      %v2789 = vperm.slane %v530, 5
      %v2790 = vperm.slane %v532, 5
      %v2791 = vperm.slane %v535, 5
      %v2792 = vperm.slane %v537, 5
      %v2793 = vperm.slane %v540, 5
      %v2794 = vperm.slane %v542, 5
      %v2795 = vperm.slane %v545, 5
      %v2796 = vperm.slane %v547, 5
      %v2797 = vperm.slane %v550, 5
      %v2798 = vperm.slane %v552, 5
      %v2799 = vperm.slane %v555, 5
      %v2800 = vperm.slane %v557, 5
      %v2801 = vmul.f32 %v2737, %v2769
      %v2802 = vmul.f32 %v2738, %v2770
      %v2803 = vmul.f32 %v2739, %v2771
      %v2804 = vmul.f32 %v2740, %v2772
      %v2805 = vmul.f32 %v2741, %v2773
      %v2806 = vmul.f32 %v2742, %v2774
      %v2807 = vmul.f32 %v2743, %v2775
      %v2808 = vmul.f32 %v2744, %v2776
      %v2809 = vmul.f32 %v2745, %v2777
      %v2810 = vmul.f32 %v2746, %v2778
      %v2811 = vmul.f32 %v2747, %v2779
      %v2812 = vmul.f32 %v2748, %v2780
      %v2813 = vmul.f32 %v2749, %v2781
      %v2814 = vmul.f32 %v2750, %v2782
      %v2815 = vmul.f32 %v2751, %v2783
      %v2816 = vmul.f32 %v2752, %v2784
      %v2817 = vmul.f32 %v2753, %v2785
      %v2818 = vmul.f32 %v2754, %v2786
      %v2819 = vmul.f32 %v2755, %v2787
      %v2820 = vmul.f32 %v2756, %v2788
      %v2821 = vmul.f32 %v2757, %v2789
      %v2822 = vmul.f32 %v2758, %v2790
      %v2823 = vmul.f32 %v2759, %v2791
      %v2824 = vmul.f32 %v2760, %v2792
      %v2825 = vmul.f32 %v2761, %v2793
      %v2826 = vmul.f32 %v2762, %v2794
      %v2827 = vmul.f32 %v2763, %v2795
      %v2828 = vmul.f32 %v2764, %v2796
      %v2829 = vmul.f32 %v2765, %v2797
      %v2830 = vmul.f32 %v2766, %v2798
      %v2831 = vmul.f32 %v2767, %v2799
      %v2832 = vmul.f32 %v2768, %v2800
      %v2833 = vadd.f32 %v2449, %v2801
      %v2834 = vadd.f32 %v2450, %v2802
      %v2835 = vadd.f32 %v2451, %v2803
      %v2836 = vadd.f32 %v2452, %v2804
      %v2837 = vadd.f32 %v2453, %v2805
      %v2838 = vadd.f32 %v2454, %v2806
      %v2839 = vadd.f32 %v2455, %v2807
      %v2840 = vadd.f32 %v2456, %v2808
      %v2841 = vadd.f32 %v2457, %v2809
      %v2842 = vadd.f32 %v2458, %v2810
      %v2843 = vadd.f32 %v2459, %v2811
      %v2844 = vadd.f32 %v2460, %v2812
      %v2845 = vadd.f32 %v2461, %v2813
      %v2846 = vadd.f32 %v2462, %v2814
      %v2847 = vadd.f32 %v2463, %v2815
      %v2848 = vadd.f32 %v2464, %v2816
      %v2849 = vadd.f32 %v2465, %v2817
      %v2850 = vadd.f32 %v2466, %v2818
      %v2851 = vadd.f32 %v2467, %v2819
      %v2852 = vadd.f32 %v2468, %v2820
      %v2853 = vadd.f32 %v2469, %v2821
      %v2854 = vadd.f32 %v2470, %v2822
      %v2855 = vadd.f32 %v2471, %v2823
      %v2856 = vadd.f32 %v2472, %v2824
      %v2857 = vadd.f32 %v2473, %v2825
      %v2858 = vadd.f32 %v2474, %v2826
      %v2859 = vadd.f32 %v2475, %v2827
      %v2860 = vadd.f32 %v2476, %v2828
      %v2861 = vadd.f32 %v2477, %v2829
      %v2862 = vadd.f32 %v2478, %v2830
      %v2863 = vadd.f32 %v2479, %v2831
      %v2864 = vadd.f32 %v2480, %v2832
      %2865 = vset.pattern.permute.xlu0 6
      %2866 = vperm.xlu0 %2865, %v305
      %v2867 = vpop.permute.xlu0 %2866
      %2869 = vset.pattern.permute.xlu0 6
      %2870 = vperm.xlu0 %2869, %v306
      %v2871 = vpop.permute.xlu0 %2870
      %2873 = vset.pattern.permute.xlu0 6
      %2874 = vperm.xlu0 %2873, %v307
      %v2875 = vpop.permute.xlu0 %2874
      %2877 = vset.pattern.permute.xlu0 6
      %2878 = vperm.xlu0 %2877, %v308
      %v2879 = vpop.permute.xlu0 %2878
      %2881 = vset.pattern.permute.xlu0 6
      %2882 = vperm.xlu0 %2881, %v309
      %v2883 = vpop.permute.xlu0 %2882
      %2885 = vset.pattern.permute.xlu0 6
      %2886 = vperm.xlu0 %2885, %v310
      %v2887 = vpop.permute.xlu0 %2886
      %2889 = vset.pattern.permute.xlu0 6
      %2890 = vperm.xlu0 %2889, %v311
      %v2891 = vpop.permute.xlu0 %2890
      %2893 = vset.pattern.permute.xlu0 6
      %2894 = vperm.xlu0 %2893, %v312
      %v2895 = vpop.permute.xlu0 %2894
      %2897 = vset.pattern.permute.xlu0 6
      %2898 = vperm.xlu0 %2897, %v313
      %v2899 = vpop.permute.xlu0 %2898
      %2901 = vset.pattern.permute.xlu0 6
      %2902 = vperm.xlu0 %2901, %v314
      %v2903 = vpop.permute.xlu0 %2902
      %2905 = vset.pattern.permute.xlu0 6
      %2906 = vperm.xlu0 %2905, %v315
      %v2907 = vpop.permute.xlu0 %2906
      %2909 = vset.pattern.permute.xlu0 6
      %2910 = vperm.xlu0 %2909, %v316
      %v2911 = vpop.permute.xlu0 %2910
      %2913 = vset.pattern.permute.xlu0 6
      %2914 = vperm.xlu0 %2913, %v317
      %v2915 = vpop.permute.xlu0 %2914
      %2917 = vset.pattern.permute.xlu0 6
      %2918 = vperm.xlu0 %2917, %v318
      %v2919 = vpop.permute.xlu0 %2918
      %2921 = vset.pattern.permute.xlu0 6
      %2922 = vperm.xlu0 %2921, %v319
      %v2923 = vpop.permute.xlu0 %2922
      %2925 = vset.pattern.permute.xlu0 6
      %2926 = vperm.xlu0 %2925, %v320
      %v2927 = vpop.permute.xlu0 %2926
      %2929 = vset.pattern.permute.xlu0 6
      %2930 = vperm.xlu0 %2929, %v321
      %v2931 = vpop.permute.xlu0 %2930
      %2933 = vset.pattern.permute.xlu0 6
      %2934 = vperm.xlu0 %2933, %v322
      %v2935 = vpop.permute.xlu0 %2934
      %2937 = vset.pattern.permute.xlu0 6
      %2938 = vperm.xlu0 %2937, %v323
      %v2939 = vpop.permute.xlu0 %2938
      %2941 = vset.pattern.permute.xlu0 6
      %2942 = vperm.xlu0 %2941, %v324
      %v2943 = vpop.permute.xlu0 %2942
      %2945 = vset.pattern.permute.xlu0 6
      %2946 = vperm.xlu0 %2945, %v325
      %v2947 = vpop.permute.xlu0 %2946
      %2949 = vset.pattern.permute.xlu0 6
      %2950 = vperm.xlu0 %2949, %v326
      %v2951 = vpop.permute.xlu0 %2950
      %2953 = vset.pattern.permute.xlu0 6
      %2954 = vperm.xlu0 %2953, %v327
      %v2955 = vpop.permute.xlu0 %2954
      %2957 = vset.pattern.permute.xlu0 6
      %2958 = vperm.xlu0 %2957, %v328
      %v2959 = vpop.permute.xlu0 %2958
      %2961 = vset.pattern.permute.xlu0 6
      %2962 = vperm.xlu0 %2961, %v329
      %v2963 = vpop.permute.xlu0 %2962
      %2965 = vset.pattern.permute.xlu0 6
      %2966 = vperm.xlu0 %2965, %v330
      %v2967 = vpop.permute.xlu0 %2966
      %2969 = vset.pattern.permute.xlu0 6
      %2970 = vperm.xlu0 %2969, %v331
      %v2971 = vpop.permute.xlu0 %2970
      %2973 = vset.pattern.permute.xlu0 6
      %2974 = vperm.xlu0 %2973, %v332
      %v2975 = vpop.permute.xlu0 %2974
      %2977 = vset.pattern.permute.xlu0 6
      %2978 = vperm.xlu0 %2977, %v333
      %v2979 = vpop.permute.xlu0 %2978
      %2981 = vset.pattern.permute.xlu0 6
      %2982 = vperm.xlu0 %2981, %v334
      %v2983 = vpop.permute.xlu0 %2982
      %2985 = vset.pattern.permute.xlu0 6
      %2986 = vperm.xlu0 %2985, %v335
      %v2987 = vpop.permute.xlu0 %2986
      %2989 = vset.pattern.permute.xlu0 6
      %2990 = vperm.xlu0 %2989, %v336
      %v2991 = vpop.permute.xlu0 %2990
      %2993 = vset.pattern.permute.xlu0 14
      %2994 = vperm.xlu0 %2993, %v305
      %v2995 = vpop.permute.xlu0 %2994
      %2997 = vset.pattern.permute.xlu0 14
      %2998 = vperm.xlu0 %2997, %v306
      %v2999 = vpop.permute.xlu0 %2998
      %3001 = vset.pattern.permute.xlu0 14
      %3002 = vperm.xlu0 %3001, %v307
      %v3003 = vpop.permute.xlu0 %3002
      %3005 = vset.pattern.permute.xlu0 14
      %3006 = vperm.xlu0 %3005, %v308
      %v3007 = vpop.permute.xlu0 %3006
      %3009 = vset.pattern.permute.xlu0 14
      %3010 = vperm.xlu0 %3009, %v309
      %v3011 = vpop.permute.xlu0 %3010
      %3013 = vset.pattern.permute.xlu0 14
      %3014 = vperm.xlu0 %3013, %v310
      %v3015 = vpop.permute.xlu0 %3014
      %3017 = vset.pattern.permute.xlu0 14
      %3018 = vperm.xlu0 %3017, %v311
      %v3019 = vpop.permute.xlu0 %3018
      %3021 = vset.pattern.permute.xlu0 14
      %3022 = vperm.xlu0 %3021, %v312
      %v3023 = vpop.permute.xlu0 %3022
      %3025 = vset.pattern.permute.xlu0 14
      %3026 = vperm.xlu0 %3025, %v313
      %v3027 = vpop.permute.xlu0 %3026
      %3029 = vset.pattern.permute.xlu0 14
      %3030 = vperm.xlu0 %3029, %v314
      %v3031 = vpop.permute.xlu0 %3030
      %3033 = vset.pattern.permute.xlu0 14
      %3034 = vperm.xlu0 %3033, %v315
      %v3035 = vpop.permute.xlu0 %3034
      %3037 = vset.pattern.permute.xlu0 14
      %3038 = vperm.xlu0 %3037, %v316
      %v3039 = vpop.permute.xlu0 %3038
      %3041 = vset.pattern.permute.xlu0 14
      %3042 = vperm.xlu0 %3041, %v317
      %v3043 = vpop.permute.xlu0 %3042
      %3045 = vset.pattern.permute.xlu0 14
      %3046 = vperm.xlu0 %3045, %v318
      %v3047 = vpop.permute.xlu0 %3046
      %3049 = vset.pattern.permute.xlu0 14
      %3050 = vperm.xlu0 %3049, %v319
      %v3051 = vpop.permute.xlu0 %3050
      %3053 = vset.pattern.permute.xlu0 14
      %3054 = vperm.xlu0 %3053, %v320
      %v3055 = vpop.permute.xlu0 %3054
      %3057 = vset.pattern.permute.xlu0 14
      %3058 = vperm.xlu0 %3057, %v321
      %v3059 = vpop.permute.xlu0 %3058
      %3061 = vset.pattern.permute.xlu0 14
      %3062 = vperm.xlu0 %3061, %v322
      %v3063 = vpop.permute.xlu0 %3062
      %3065 = vset.pattern.permute.xlu0 14
      %3066 = vperm.xlu0 %3065, %v323
      %v3067 = vpop.permute.xlu0 %3066
      %3069 = vset.pattern.permute.xlu0 14
      %3070 = vperm.xlu0 %3069, %v324
      %v3071 = vpop.permute.xlu0 %3070
      %3073 = vset.pattern.permute.xlu0 14
      %3074 = vperm.xlu0 %3073, %v325
      %v3075 = vpop.permute.xlu0 %3074
      %3077 = vset.pattern.permute.xlu0 14
      %3078 = vperm.xlu0 %3077, %v326
      %v3079 = vpop.permute.xlu0 %3078
      %3081 = vset.pattern.permute.xlu0 14
      %3082 = vperm.xlu0 %3081, %v327
      %v3083 = vpop.permute.xlu0 %3082
      %3085 = vset.pattern.permute.xlu0 14
      %3086 = vperm.xlu0 %3085, %v328
      %v3087 = vpop.permute.xlu0 %3086
      %3089 = vset.pattern.permute.xlu0 14
      %3090 = vperm.xlu0 %3089, %v329
      %v3091 = vpop.permute.xlu0 %3090
      %3093 = vset.pattern.permute.xlu0 14
      %3094 = vperm.xlu0 %3093, %v330
      %v3095 = vpop.permute.xlu0 %3094
      %3097 = vset.pattern.permute.xlu0 14
      %3098 = vperm.xlu0 %3097, %v331
      %v3099 = vpop.permute.xlu0 %3098
      %3101 = vset.pattern.permute.xlu0 14
      %3102 = vperm.xlu0 %3101, %v332
      %v3103 = vpop.permute.xlu0 %3102
      %3105 = vset.pattern.permute.xlu0 14
      %3106 = vperm.xlu0 %3105, %v333
      %v3107 = vpop.permute.xlu0 %3106
      %3109 = vset.pattern.permute.xlu0 14
      %3110 = vperm.xlu0 %3109, %v334
      %v3111 = vpop.permute.xlu0 %3110
      %3113 = vset.pattern.permute.xlu0 14
      %3114 = vperm.xlu0 %3113, %v335
      %v3115 = vpop.permute.xlu0 %3114
      %3117 = vset.pattern.permute.xlu0 14
      %3118 = vperm.xlu0 %3117, %v336
      %v3119 = vpop.permute.xlu0 %3118
      %v3121 = vsel %vm560, %v2867, %v2995
      %v3122 = vsel %vm560, %v2871, %v2999
      %v3123 = vsel %vm560, %v2875, %v3003
      %v3124 = vsel %vm560, %v2879, %v3007
      %v3125 = vsel %vm560, %v2883, %v3011
      %v3126 = vsel %vm560, %v2887, %v3015
      %v3127 = vsel %vm560, %v2891, %v3019
      %v3128 = vsel %vm560, %v2895, %v3023
      %v3129 = vsel %vm560, %v2899, %v3027
      %v3130 = vsel %vm560, %v2903, %v3031
      %v3131 = vsel %vm560, %v2907, %v3035
      %v3132 = vsel %vm560, %v2911, %v3039
      %v3133 = vsel %vm560, %v2915, %v3043
      %v3134 = vsel %vm560, %v2919, %v3047
      %v3135 = vsel %vm560, %v2923, %v3051
      %v3136 = vsel %vm560, %v2927, %v3055
      %v3137 = vsel %vm560, %v2931, %v3059
      %v3138 = vsel %vm560, %v2935, %v3063
      %v3139 = vsel %vm560, %v2939, %v3067
      %v3140 = vsel %vm560, %v2943, %v3071
      %v3141 = vsel %vm560, %v2947, %v3075
      %v3142 = vsel %vm560, %v2951, %v3079
      %v3143 = vsel %vm560, %v2955, %v3083
      %v3144 = vsel %vm560, %v2959, %v3087
      %v3145 = vsel %vm560, %v2963, %v3091
      %v3146 = vsel %vm560, %v2967, %v3095
      %v3147 = vsel %vm560, %v2971, %v3099
      %v3148 = vsel %vm560, %v2975, %v3103
      %v3149 = vsel %vm560, %v2979, %v3107
      %v3150 = vsel %vm560, %v2983, %v3111
      %v3151 = vsel %vm560, %v2987, %v3115
      %v3152 = vsel %vm560, %v2991, %v3119
      %v3153 = vperm.slane %v480, 6
      %v3154 = vperm.slane %v482, 6
      %v3155 = vperm.slane %v485, 6
      %v3156 = vperm.slane %v487, 6
      %v3157 = vperm.slane %v490, 6
      %v3158 = vperm.slane %v492, 6
      %v3159 = vperm.slane %v495, 6
      %v3160 = vperm.slane %v497, 6
      %v3161 = vperm.slane %v500, 6
      %v3162 = vperm.slane %v502, 6
      %v3163 = vperm.slane %v505, 6
      %v3164 = vperm.slane %v507, 6
      %v3165 = vperm.slane %v510, 6
      %v3166 = vperm.slane %v512, 6
      %v3167 = vperm.slane %v515, 6
      %v3168 = vperm.slane %v517, 6
      %v3169 = vperm.slane %v520, 6
      %v3170 = vperm.slane %v522, 6
      %v3171 = vperm.slane %v525, 6
      %v3172 = vperm.slane %v527, 6
      %v3173 = vperm.slane %v530, 6
      %v3174 = vperm.slane %v532, 6
      %v3175 = vperm.slane %v535, 6
      %v3176 = vperm.slane %v537, 6
      %v3177 = vperm.slane %v540, 6
      %v3178 = vperm.slane %v542, 6
      %v3179 = vperm.slane %v545, 6
      %v3180 = vperm.slane %v547, 6
      %v3181 = vperm.slane %v550, 6
      %v3182 = vperm.slane %v552, 6
      %v3183 = vperm.slane %v555, 6
      %v3184 = vperm.slane %v557, 6
      %v3185 = vmul.f32 %v3121, %v3153
      %v3186 = vmul.f32 %v3122, %v3154
      %v3187 = vmul.f32 %v3123, %v3155
      %v3188 = vmul.f32 %v3124, %v3156
      %v3189 = vmul.f32 %v3125, %v3157
      %v3190 = vmul.f32 %v3126, %v3158
      %v3191 = vmul.f32 %v3127, %v3159
      %v3192 = vmul.f32 %v3128, %v3160
      %v3193 = vmul.f32 %v3129, %v3161
      %v3194 = vmul.f32 %v3130, %v3162
      %v3195 = vmul.f32 %v3131, %v3163
      %v3196 = vmul.f32 %v3132, %v3164
      %v3197 = vmul.f32 %v3133, %v3165
      %v3198 = vmul.f32 %v3134, %v3166
      %v3199 = vmul.f32 %v3135, %v3167
      %v3200 = vmul.f32 %v3136, %v3168
      %v3201 = vmul.f32 %v3137, %v3169
      %v3202 = vmul.f32 %v3138, %v3170
      %v3203 = vmul.f32 %v3139, %v3171
      %v3204 = vmul.f32 %v3140, %v3172
      %v3205 = vmul.f32 %v3141, %v3173
      %v3206 = vmul.f32 %v3142, %v3174
      %v3207 = vmul.f32 %v3143, %v3175
      %v3208 = vmul.f32 %v3144, %v3176
      %v3209 = vmul.f32 %v3145, %v3177
      %v3210 = vmul.f32 %v3146, %v3178
      %v3211 = vmul.f32 %v3147, %v3179
      %v3212 = vmul.f32 %v3148, %v3180
      %v3213 = vmul.f32 %v3149, %v3181
      %v3214 = vmul.f32 %v3150, %v3182
      %v3215 = vmul.f32 %v3151, %v3183
      %v3216 = vmul.f32 %v3152, %v3184
      %v3217 = vadd.f32 %v2833, %v3185
      %v3218 = vadd.f32 %v2834, %v3186
      %v3219 = vadd.f32 %v2835, %v3187
      %v3220 = vadd.f32 %v2836, %v3188
      %v3221 = vadd.f32 %v2837, %v3189
      %v3222 = vadd.f32 %v2838, %v3190
      %v3223 = vadd.f32 %v2839, %v3191
      %v3224 = vadd.f32 %v2840, %v3192
      %v3225 = vadd.f32 %v2841, %v3193
      %v3226 = vadd.f32 %v2842, %v3194
      %v3227 = vadd.f32 %v2843, %v3195
      %v3228 = vadd.f32 %v2844, %v3196
      %v3229 = vadd.f32 %v2845, %v3197
      %v3230 = vadd.f32 %v2846, %v3198
      %v3231 = vadd.f32 %v2847, %v3199
      %v3232 = vadd.f32 %v2848, %v3200
      %v3233 = vadd.f32 %v2849, %v3201
      %v3234 = vadd.f32 %v2850, %v3202
      %v3235 = vadd.f32 %v2851, %v3203
      %v3236 = vadd.f32 %v2852, %v3204
      %v3237 = vadd.f32 %v2853, %v3205
      %v3238 = vadd.f32 %v2854, %v3206
      %v3239 = vadd.f32 %v2855, %v3207
      %v3240 = vadd.f32 %v2856, %v3208
      %v3241 = vadd.f32 %v2857, %v3209
      %v3242 = vadd.f32 %v2858, %v3210
      %v3243 = vadd.f32 %v2859, %v3211
      %v3244 = vadd.f32 %v2860, %v3212
      %v3245 = vadd.f32 %v2861, %v3213
      %v3246 = vadd.f32 %v2862, %v3214
      %v3247 = vadd.f32 %v2863, %v3215
      %v3248 = vadd.f32 %v2864, %v3216
      %3249 = vset.pattern.permute.xlu0 7
      %3250 = vperm.xlu0 %3249, %v305
      %v3251 = vpop.permute.xlu0 %3250
      %3253 = vset.pattern.permute.xlu0 7
      %3254 = vperm.xlu0 %3253, %v306
      %v3255 = vpop.permute.xlu0 %3254
      %3257 = vset.pattern.permute.xlu0 7
      %3258 = vperm.xlu0 %3257, %v307
      %v3259 = vpop.permute.xlu0 %3258
      %3261 = vset.pattern.permute.xlu0 7
      %3262 = vperm.xlu0 %3261, %v308
      %v3263 = vpop.permute.xlu0 %3262
      %3265 = vset.pattern.permute.xlu0 7
      %3266 = vperm.xlu0 %3265, %v309
      %v3267 = vpop.permute.xlu0 %3266
      %3269 = vset.pattern.permute.xlu0 7
      %3270 = vperm.xlu0 %3269, %v310
      %v3271 = vpop.permute.xlu0 %3270
      %3273 = vset.pattern.permute.xlu0 7
      %3274 = vperm.xlu0 %3273, %v311
      %v3275 = vpop.permute.xlu0 %3274
      %3277 = vset.pattern.permute.xlu0 7
      %3278 = vperm.xlu0 %3277, %v312
      %v3279 = vpop.permute.xlu0 %3278
      %3281 = vset.pattern.permute.xlu0 7
      %3282 = vperm.xlu0 %3281, %v313
      %v3283 = vpop.permute.xlu0 %3282
      %3285 = vset.pattern.permute.xlu0 7
      %3286 = vperm.xlu0 %3285, %v314
      %v3287 = vpop.permute.xlu0 %3286
      %3289 = vset.pattern.permute.xlu0 7
      %3290 = vperm.xlu0 %3289, %v315
      %v3291 = vpop.permute.xlu0 %3290
      %3293 = vset.pattern.permute.xlu0 7
      %3294 = vperm.xlu0 %3293, %v316
      %v3295 = vpop.permute.xlu0 %3294
      %3297 = vset.pattern.permute.xlu0 7
      %3298 = vperm.xlu0 %3297, %v317
      %v3299 = vpop.permute.xlu0 %3298
      %3301 = vset.pattern.permute.xlu0 7
      %3302 = vperm.xlu0 %3301, %v318
      %v3303 = vpop.permute.xlu0 %3302
      %3305 = vset.pattern.permute.xlu0 7
      %3306 = vperm.xlu0 %3305, %v319
      %v3307 = vpop.permute.xlu0 %3306
      %3309 = vset.pattern.permute.xlu0 7
      %3310 = vperm.xlu0 %3309, %v320
      %v3311 = vpop.permute.xlu0 %3310
      %3313 = vset.pattern.permute.xlu0 7
      %3314 = vperm.xlu0 %3313, %v321
      %v3315 = vpop.permute.xlu0 %3314
      %3317 = vset.pattern.permute.xlu0 7
      %3318 = vperm.xlu0 %3317, %v322
      %v3319 = vpop.permute.xlu0 %3318
      %3321 = vset.pattern.permute.xlu0 7
      %3322 = vperm.xlu0 %3321, %v323
      %v3323 = vpop.permute.xlu0 %3322
      %3325 = vset.pattern.permute.xlu0 7
      %3326 = vperm.xlu0 %3325, %v324
      %v3327 = vpop.permute.xlu0 %3326
      %3329 = vset.pattern.permute.xlu0 7
      %3330 = vperm.xlu0 %3329, %v325
      %v3331 = vpop.permute.xlu0 %3330
      %3333 = vset.pattern.permute.xlu0 7
      %3334 = vperm.xlu0 %3333, %v326
      %v3335 = vpop.permute.xlu0 %3334
      %3337 = vset.pattern.permute.xlu0 7
      %3338 = vperm.xlu0 %3337, %v327
      %v3339 = vpop.permute.xlu0 %3338
      %3341 = vset.pattern.permute.xlu0 7
      %3342 = vperm.xlu0 %3341, %v328
      %v3343 = vpop.permute.xlu0 %3342
      %3345 = vset.pattern.permute.xlu0 7
      %3346 = vperm.xlu0 %3345, %v329
      %v3347 = vpop.permute.xlu0 %3346
      %3349 = vset.pattern.permute.xlu0 7
      %3350 = vperm.xlu0 %3349, %v330
      %v3351 = vpop.permute.xlu0 %3350
      %3353 = vset.pattern.permute.xlu0 7
      %3354 = vperm.xlu0 %3353, %v331
      %v3355 = vpop.permute.xlu0 %3354
      %3357 = vset.pattern.permute.xlu0 7
      %3358 = vperm.xlu0 %3357, %v332
      %v3359 = vpop.permute.xlu0 %3358
      %3361 = vset.pattern.permute.xlu0 7
      %3362 = vperm.xlu0 %3361, %v333
      %v3363 = vpop.permute.xlu0 %3362
      %3365 = vset.pattern.permute.xlu0 7
      %3366 = vperm.xlu0 %3365, %v334
      %v3367 = vpop.permute.xlu0 %3366
      %3369 = vset.pattern.permute.xlu0 7
      %3370 = vperm.xlu0 %3369, %v335
      %v3371 = vpop.permute.xlu0 %3370
      %3373 = vset.pattern.permute.xlu0 7
      %3374 = vperm.xlu0 %3373, %v336
      %v3375 = vpop.permute.xlu0 %3374
      %3377 = vset.pattern.permute.xlu0 15
      %3378 = vperm.xlu0 %3377, %v305
      %v3379 = vpop.permute.xlu0 %3378
      %3381 = vset.pattern.permute.xlu0 15
      %3382 = vperm.xlu0 %3381, %v306
      %v3383 = vpop.permute.xlu0 %3382
      %3385 = vset.pattern.permute.xlu0 15
      %3386 = vperm.xlu0 %3385, %v307
      %v3387 = vpop.permute.xlu0 %3386
      %3389 = vset.pattern.permute.xlu0 15
      %3390 = vperm.xlu0 %3389, %v308
      %v3391 = vpop.permute.xlu0 %3390
      %3393 = vset.pattern.permute.xlu0 15
      %3394 = vperm.xlu0 %3393, %v309
      %v3395 = vpop.permute.xlu0 %3394
      %3397 = vset.pattern.permute.xlu0 15
      %3398 = vperm.xlu0 %3397, %v310
      %v3399 = vpop.permute.xlu0 %3398
      %3401 = vset.pattern.permute.xlu0 15
      %3402 = vperm.xlu0 %3401, %v311
      %v3403 = vpop.permute.xlu0 %3402
      %3405 = vset.pattern.permute.xlu0 15
      %3406 = vperm.xlu0 %3405, %v312
      %v3407 = vpop.permute.xlu0 %3406
      %3409 = vset.pattern.permute.xlu0 15
      %3410 = vperm.xlu0 %3409, %v313
      %v3411 = vpop.permute.xlu0 %3410
      %3413 = vset.pattern.permute.xlu0 15
      %3414 = vperm.xlu0 %3413, %v314
      %v3415 = vpop.permute.xlu0 %3414
      %3417 = vset.pattern.permute.xlu0 15
      %3418 = vperm.xlu0 %3417, %v315
      %v3419 = vpop.permute.xlu0 %3418
      %3421 = vset.pattern.permute.xlu0 15
      %3422 = vperm.xlu0 %3421, %v316
      %v3423 = vpop.permute.xlu0 %3422
      %3425 = vset.pattern.permute.xlu0 15
      %3426 = vperm.xlu0 %3425, %v317
      %v3427 = vpop.permute.xlu0 %3426
      %3429 = vset.pattern.permute.xlu0 15
      %3430 = vperm.xlu0 %3429, %v318
      %v3431 = vpop.permute.xlu0 %3430
      %3433 = vset.pattern.permute.xlu0 15
      %3434 = vperm.xlu0 %3433, %v319
      %v3435 = vpop.permute.xlu0 %3434
      %3437 = vset.pattern.permute.xlu0 15
      %3438 = vperm.xlu0 %3437, %v320
      %v3439 = vpop.permute.xlu0 %3438
      %3441 = vset.pattern.permute.xlu0 15
      %3442 = vperm.xlu0 %3441, %v321
      %v3443 = vpop.permute.xlu0 %3442
      %3445 = vset.pattern.permute.xlu0 15
      %3446 = vperm.xlu0 %3445, %v322
      %v3447 = vpop.permute.xlu0 %3446
      %3449 = vset.pattern.permute.xlu0 15
      %3450 = vperm.xlu0 %3449, %v323
      %v3451 = vpop.permute.xlu0 %3450
      %3453 = vset.pattern.permute.xlu0 15
      %3454 = vperm.xlu0 %3453, %v324
      %v3455 = vpop.permute.xlu0 %3454
      %3457 = vset.pattern.permute.xlu0 15
      %3458 = vperm.xlu0 %3457, %v325
      %v3459 = vpop.permute.xlu0 %3458
      %3461 = vset.pattern.permute.xlu0 15
      %3462 = vperm.xlu0 %3461, %v326
      %v3463 = vpop.permute.xlu0 %3462
      %3465 = vset.pattern.permute.xlu0 15
      %3466 = vperm.xlu0 %3465, %v327
      %v3467 = vpop.permute.xlu0 %3466
      %3469 = vset.pattern.permute.xlu0 15
      %3470 = vperm.xlu0 %3469, %v328
      %v3471 = vpop.permute.xlu0 %3470
      %3473 = vset.pattern.permute.xlu0 15
      %3474 = vperm.xlu0 %3473, %v329
      %v3475 = vpop.permute.xlu0 %3474
      %3477 = vset.pattern.permute.xlu0 15
      %3478 = vperm.xlu0 %3477, %v330
      %v3479 = vpop.permute.xlu0 %3478
      %3481 = vset.pattern.permute.xlu0 15
      %3482 = vperm.xlu0 %3481, %v331
      %v3483 = vpop.permute.xlu0 %3482
      %3485 = vset.pattern.permute.xlu0 15
      %3486 = vperm.xlu0 %3485, %v332
      %v3487 = vpop.permute.xlu0 %3486
      %3489 = vset.pattern.permute.xlu0 15
      %3490 = vperm.xlu0 %3489, %v333
      %v3491 = vpop.permute.xlu0 %3490
      %3493 = vset.pattern.permute.xlu0 15
      %3494 = vperm.xlu0 %3493, %v334
      %v3495 = vpop.permute.xlu0 %3494
      %3497 = vset.pattern.permute.xlu0 15
      %3498 = vperm.xlu0 %3497, %v335
      %v3499 = vpop.permute.xlu0 %3498
      %3501 = vset.pattern.permute.xlu0 15
      %3502 = vperm.xlu0 %3501, %v336
      %v3503 = vpop.permute.xlu0 %3502
      %v3505 = vsel %vm560, %v3251, %v3379
      %v3506 = vsel %vm560, %v3255, %v3383
      %v3507 = vsel %vm560, %v3259, %v3387
      %v3508 = vsel %vm560, %v3263, %v3391
      %v3509 = vsel %vm560, %v3267, %v3395
      %v3510 = vsel %vm560, %v3271, %v3399
      %v3511 = vsel %vm560, %v3275, %v3403
      %v3512 = vsel %vm560, %v3279, %v3407
      %v3513 = vsel %vm560, %v3283, %v3411
      %v3514 = vsel %vm560, %v3287, %v3415
      %v3515 = vsel %vm560, %v3291, %v3419
      %v3516 = vsel %vm560, %v3295, %v3423
      %v3517 = vsel %vm560, %v3299, %v3427
      %v3518 = vsel %vm560, %v3303, %v3431
      %v3519 = vsel %vm560, %v3307, %v3435
      %v3520 = vsel %vm560, %v3311, %v3439
      %v3521 = vsel %vm560, %v3315, %v3443
      %v3522 = vsel %vm560, %v3319, %v3447
      %v3523 = vsel %vm560, %v3323, %v3451
      %v3524 = vsel %vm560, %v3327, %v3455
      %v3525 = vsel %vm560, %v3331, %v3459
      %v3526 = vsel %vm560, %v3335, %v3463
      %v3527 = vsel %vm560, %v3339, %v3467
      %v3528 = vsel %vm560, %v3343, %v3471
      %v3529 = vsel %vm560, %v3347, %v3475
      %v3530 = vsel %vm560, %v3351, %v3479
      %v3531 = vsel %vm560, %v3355, %v3483
      %v3532 = vsel %vm560, %v3359, %v3487
      %v3533 = vsel %vm560, %v3363, %v3491
      %v3534 = vsel %vm560, %v3367, %v3495
      %v3535 = vsel %vm560, %v3371, %v3499
      %v3536 = vsel %vm560, %v3375, %v3503
      %v3537 = vperm.slane %v480, 7
      %v3538 = vperm.slane %v482, 7
      %v3539 = vperm.slane %v485, 7
      %v3540 = vperm.slane %v487, 7
      %v3541 = vperm.slane %v490, 7
      %v3542 = vperm.slane %v492, 7
      %v3543 = vperm.slane %v495, 7
      %v3544 = vperm.slane %v497, 7
      %v3545 = vperm.slane %v500, 7
      %v3546 = vperm.slane %v502, 7
      %v3547 = vperm.slane %v505, 7
      %v3548 = vperm.slane %v507, 7
      %v3549 = vperm.slane %v510, 7
      %v3550 = vperm.slane %v512, 7
      %v3551 = vperm.slane %v515, 7
      %v3552 = vperm.slane %v517, 7
      %v3553 = vperm.slane %v520, 7
      %v3554 = vperm.slane %v522, 7
      %v3555 = vperm.slane %v525, 7
      %v3556 = vperm.slane %v527, 7
      %v3557 = vperm.slane %v530, 7
      %v3558 = vperm.slane %v532, 7
      %v3559 = vperm.slane %v535, 7
      %v3560 = vperm.slane %v537, 7
      %v3561 = vperm.slane %v540, 7
      %v3562 = vperm.slane %v542, 7
      %v3563 = vperm.slane %v545, 7
      %v3564 = vperm.slane %v547, 7
      %v3565 = vperm.slane %v550, 7
      %v3566 = vperm.slane %v552, 7
      %v3567 = vperm.slane %v555, 7
      %v3568 = vperm.slane %v557, 7
      %v3569 = vmul.f32 %v3505, %v3537
      %v3570 = vmul.f32 %v3506, %v3538
      %v3571 = vmul.f32 %v3507, %v3539
      %v3572 = vmul.f32 %v3508, %v3540
      %v3573 = vmul.f32 %v3509, %v3541
      %v3574 = vmul.f32 %v3510, %v3542
      %v3575 = vmul.f32 %v3511, %v3543
      %v3576 = vmul.f32 %v3512, %v3544
      %v3577 = vmul.f32 %v3513, %v3545
      %v3578 = vmul.f32 %v3514, %v3546
      %v3579 = vmul.f32 %v3515, %v3547
      %v3580 = vmul.f32 %v3516, %v3548
      %v3581 = vmul.f32 %v3517, %v3549
      %v3582 = vmul.f32 %v3518, %v3550
      %v3583 = vmul.f32 %v3519, %v3551
      %v3584 = vmul.f32 %v3520, %v3552
      %v3585 = vmul.f32 %v3521, %v3553
      %v3586 = vmul.f32 %v3522, %v3554
      %v3587 = vmul.f32 %v3523, %v3555
      %v3588 = vmul.f32 %v3524, %v3556
      %v3589 = vmul.f32 %v3525, %v3557
      %v3590 = vmul.f32 %v3526, %v3558
      %v3591 = vmul.f32 %v3527, %v3559
      %v3592 = vmul.f32 %v3528, %v3560
      %v3593 = vmul.f32 %v3529, %v3561
      %v3594 = vmul.f32 %v3530, %v3562
      %v3595 = vmul.f32 %v3531, %v3563
      %v3596 = vmul.f32 %v3532, %v3564
      %v3597 = vmul.f32 %v3533, %v3565
      %v3598 = vmul.f32 %v3534, %v3566
      %v3599 = vmul.f32 %v3535, %v3567
      %v3600 = vmul.f32 %v3536, %v3568
      %v3601 = vadd.f32 %v3217, %v3569
      %v3602 = vadd.f32 %v3218, %v3570
      %v3603 = vadd.f32 %v3219, %v3571
      %v3604 = vadd.f32 %v3220, %v3572
      %v3605 = vadd.f32 %v3221, %v3573
      %v3606 = vadd.f32 %v3222, %v3574
      %v3607 = vadd.f32 %v3223, %v3575
      %v3608 = vadd.f32 %v3224, %v3576
      %v3609 = vadd.f32 %v3225, %v3577
      %v3610 = vadd.f32 %v3226, %v3578
      %v3611 = vadd.f32 %v3227, %v3579
      %v3612 = vadd.f32 %v3228, %v3580
      %v3613 = vadd.f32 %v3229, %v3581
      %v3614 = vadd.f32 %v3230, %v3582
      %v3615 = vadd.f32 %v3231, %v3583
      %v3616 = vadd.f32 %v3232, %v3584
      %v3617 = vadd.f32 %v3233, %v3585
      %v3618 = vadd.f32 %v3234, %v3586
      %v3619 = vadd.f32 %v3235, %v3587
      %v3620 = vadd.f32 %v3236, %v3588
      %v3621 = vadd.f32 %v3237, %v3589
      %v3622 = vadd.f32 %v3238, %v3590
      %v3623 = vadd.f32 %v3239, %v3591
      %v3624 = vadd.f32 %v3240, %v3592
      %v3625 = vadd.f32 %v3241, %v3593
      %v3626 = vadd.f32 %v3242, %v3594
      %v3627 = vadd.f32 %v3243, %v3595
      %v3628 = vadd.f32 %v3244, %v3596
      %v3629 = vadd.f32 %v3245, %v3597
      %v3630 = vadd.f32 %v3246, %v3598
      %v3631 = vadd.f32 %v3247, %v3599
      %v3632 = vadd.f32 %v3248, %v3600
      %v3633 = vpack.c.bf16 %v3602, %v3601
      %v3634 = vpack.c.bf16 %v3604, %v3603
      %v3635 = vpack.c.bf16 %v3606, %v3605
      %v3636 = vpack.c.bf16 %v3608, %v3607
      %v3637 = vpack.c.bf16 %v3610, %v3609
      %v3638 = vpack.c.bf16 %v3612, %v3611
      %v3639 = vpack.c.bf16 %v3614, %v3613
      %v3640 = vpack.c.bf16 %v3616, %v3615
      %v3641 = vpack.c.bf16 %v3618, %v3617
      %v3642 = vpack.c.bf16 %v3620, %v3619
      %v3643 = vpack.c.bf16 %v3622, %v3621
      %v3644 = vpack.c.bf16 %v3624, %v3623
      %v3645 = vpack.c.bf16 %v3626, %v3625
      %v3646 = vpack.c.bf16 %v3628, %v3627
      %v3647 = vpack.c.bf16 %v3630, %v3629
      %v3648 = vpack.c.bf16 %v3632, %v3631
      %v3653 = vunpack.c.l.b16 %v350
      %v3654 = vunpack.c.l.b16 %v351
      %v3655 = vunpack.c.l.b16 %v352
      %v3656 = vunpack.c.l.b16 %v353
      %v3657 = vpack.c.b16 %v3654, %v3653
      %v3658 = vpack.c.b16 %v3656, %v3655
      %3661 = vmatpush.bf16.msra.mxu0 0
      %3662 = vmatpush.bf16.msra.mxu0 0
      %3663 = vmatpush.bf16.msra.mxu0 0
      %3664 = vmatpush.bf16.msra.mxu0 0
      %3665 = vmatpush.bf16.msra.mxu0 0
      %3666 = vmatpush.bf16.msra.mxu0 0
      %3667 = vmatpush.bf16.msra.mxu0 %v3658
      %3668 = vmatpush.bf16.msra.mxu0 %v3657
      %3669 = vmatmul.bf16.gmra.mxu0 %v423
      %v3670 = vpop.f32.mrf.mxu0
      %v3671 = vadd.f32 0.0, %v3670
      %v3672 = vpop.f32.mrf.mxu0
      %v3673 = vadd.f32 0.0, %v3672
      %3674 = vmatmul.bf16.gmra.mxu0 %v426
      %v3675 = vpop.f32.mrf.mxu0
      %v3676 = vadd.f32 0.0, %v3675
      %v3677 = vpop.f32.mrf.mxu0
      %v3678 = vadd.f32 0.0, %v3677
      %3679 = vmatmul.bf16.gmra.mxu0 %v429
      %v3680 = vpop.f32.mrf.mxu0
      %v3681 = vadd.f32 0.0, %v3680
      %v3682 = vpop.f32.mrf.mxu0
      %v3683 = vadd.f32 0.0, %v3682
      %3684 = vmatmul.bf16.gmra.mxu0 %v432
      %v3685 = vpop.f32.mrf.mxu0
      %v3686 = vadd.f32 0.0, %v3685
      %v3687 = vpop.f32.mrf.mxu0
      %v3688 = vadd.f32 0.0, %v3687
      %3689 = vmatmul.bf16.gmra.mxu0 %v435
      %v3690 = vpop.f32.mrf.mxu0
      %v3691 = vadd.f32 0.0, %v3690
      %v3692 = vpop.f32.mrf.mxu0
      %v3693 = vadd.f32 0.0, %v3692
      %3694 = vmatmul.bf16.gmra.mxu0 %v438
      %v3695 = vpop.f32.mrf.mxu0
      %v3696 = vadd.f32 0.0, %v3695
      %v3697 = vpop.f32.mrf.mxu0
      %v3698 = vadd.f32 0.0, %v3697
      %3699 = vmatmul.bf16.gmra.mxu0 %v441
      %v3700 = vpop.f32.mrf.mxu0
      %v3701 = vadd.f32 0.0, %v3700
      %v3702 = vpop.f32.mrf.mxu0
      %v3703 = vadd.f32 0.0, %v3702
      %3704 = vmatmul.bf16.gmra.mxu0 %v444
      %v3705 = vpop.f32.mrf.mxu0
      %v3706 = vadd.f32 0.0, %v3705
      %v3707 = vpop.f32.mrf.mxu0
      %v3708 = vadd.f32 0.0, %v3707
      %3709 = vmatmul.bf16.gmra.mxu0 %v447
      %v3710 = vpop.f32.mrf.mxu0
      %v3711 = vadd.f32 0.0, %v3710
      %v3712 = vpop.f32.mrf.mxu0
      %v3713 = vadd.f32 0.0, %v3712
      %3714 = vmatmul.bf16.gmra.mxu0 %v450
      %v3715 = vpop.f32.mrf.mxu0
      %v3716 = vadd.f32 0.0, %v3715
      %v3717 = vpop.f32.mrf.mxu0
      %v3718 = vadd.f32 0.0, %v3717
      %3719 = vmatmul.bf16.gmra.mxu0 %v453
      %v3720 = vpop.f32.mrf.mxu0
      %v3721 = vadd.f32 0.0, %v3720
      %v3722 = vpop.f32.mrf.mxu0
      %v3723 = vadd.f32 0.0, %v3722
      %3724 = vmatmul.bf16.gmra.mxu0 %v456
      %v3725 = vpop.f32.mrf.mxu0
      %v3726 = vadd.f32 0.0, %v3725
      %v3727 = vpop.f32.mrf.mxu0
      %v3728 = vadd.f32 0.0, %v3727
      %3729 = vmatmul.bf16.gmra.mxu0 %v459
      %v3730 = vpop.f32.mrf.mxu0
      %v3731 = vadd.f32 0.0, %v3730
      %v3732 = vpop.f32.mrf.mxu0
      %v3733 = vadd.f32 0.0, %v3732
      %3734 = vmatmul.bf16.gmra.mxu0 %v462
      %v3735 = vpop.f32.mrf.mxu0
      %v3736 = vadd.f32 0.0, %v3735
      %v3737 = vpop.f32.mrf.mxu0
      %v3738 = vadd.f32 0.0, %v3737
      %3739 = vmatmul.bf16.gmra.mxu0 %v465
      %v3740 = vpop.f32.mrf.mxu0
      %v3741 = vadd.f32 0.0, %v3740
      %v3742 = vpop.f32.mrf.mxu0
      %v3743 = vadd.f32 0.0, %v3742
      %3744 = vmatmul.bf16.gmra.mxu0 %v468
      %v3745 = vpop.f32.mrf.mxu0
      %v3746 = vadd.f32 0.0, %v3745
      %v3747 = vpop.f32.mrf.mxu0
      %v3748 = vadd.f32 0.0, %v3747
      %3749 = vdwg.mxu0
      %v3758 = vunpack.c.l.b16 %v342
      %v3759 = vunpack.c.l.b16 %v343
      %v3760 = vunpack.c.l.b16 %v344
      %v3761 = vunpack.c.l.b16 %v345
      %v3762 = vunpack.c.l.b16 %v346
      %v3763 = vunpack.c.l.b16 %v347
      %v3764 = vunpack.c.l.b16 %v348
      %v3765 = vunpack.c.l.b16 %v349
      %v3766 = vpack.c.b16 %v3759, %v3758
      %v3767 = vpack.c.b16 %v3761, %v3760
      %v3768 = vpack.c.b16 %v3763, %v3762
      %v3769 = vpack.c.b16 %v3765, %v3764
      %vm3774 = vcmask 523264
      %v3776 = vsel %vm3774, %v3633, 0
      %v3779 = vsel %vm3774, %v3634, 0
      %v3782 = vsel %vm3774, %v3635, 0
      %v3785 = vsel %vm3774, %v3636, 0
      %v3788 = vsel %vm3774, %v3637, 0
      %v3791 = vsel %vm3774, %v3638, 0
      %v3794 = vsel %vm3774, %v3639, 0
      %v3797 = vsel %vm3774, %v3640, 0
      %v3800 = vsel %vm3774, %v3641, 0
      %v3803 = vsel %vm3774, %v3642, 0
      %v3806 = vsel %vm3774, %v3643, 0
      %v3809 = vsel %vm3774, %v3644, 0
      %v3812 = vsel %vm3774, %v3645, 0
      %v3815 = vsel %vm3774, %v3646, 0
      %v3818 = vsel %vm3774, %v3647, 0
      %v3821 = vsel %vm3774, %v3648, 0
      %3823 = vmatpush.bf16.msra.mxu0 0
      %3824 = vmatpush.bf16.msra.mxu0 0
      %3825 = vmatpush.bf16.msra.mxu0 0
      %3826 = vmatpush.bf16.msra.mxu0 0
      %3827 = vmatpush.bf16.msra.mxu0 %v3769
      %3828 = vmatpush.bf16.msra.mxu0 %v3768
      %3829 = vmatpush.bf16.msra.mxu0 %v3767
      %3830 = vmatpush.bf16.msra.mxu0 %v3766
      %3831 = vmatmul.bf16.gmra.mxu0 %v3776
      %v3832 = vpop.f32.mrf.mxu0
      %v3833 = vadd.f32 %v3671, %v3832
      %v3834 = vpop.f32.mrf.mxu0
      %v3835 = vadd.f32 %v3673, %v3834
      %3836 = vmatmul.bf16.gmra.mxu0 %v3779
      %v3837 = vpop.f32.mrf.mxu0
      %v3838 = vadd.f32 %v3676, %v3837
      %v3839 = vpop.f32.mrf.mxu0
      %v3840 = vadd.f32 %v3678, %v3839
      %3841 = vmatmul.bf16.gmra.mxu0 %v3782
      %v3842 = vpop.f32.mrf.mxu0
      %v3843 = vadd.f32 %v3681, %v3842
      %v3844 = vpop.f32.mrf.mxu0
      %v3845 = vadd.f32 %v3683, %v3844
      %3846 = vmatmul.bf16.gmra.mxu0 %v3785
      %v3847 = vpop.f32.mrf.mxu0
      %v3848 = vadd.f32 %v3686, %v3847
      %v3849 = vpop.f32.mrf.mxu0
      %v3850 = vadd.f32 %v3688, %v3849
      %3851 = vmatmul.bf16.gmra.mxu0 %v3788
      %v3852 = vpop.f32.mrf.mxu0
      %v3853 = vadd.f32 %v3691, %v3852
      %v3854 = vpop.f32.mrf.mxu0
      %v3855 = vadd.f32 %v3693, %v3854
      %3856 = vmatmul.bf16.gmra.mxu0 %v3791
      %v3857 = vpop.f32.mrf.mxu0
      %v3858 = vadd.f32 %v3696, %v3857
      %v3859 = vpop.f32.mrf.mxu0
      %v3860 = vadd.f32 %v3698, %v3859
      %3861 = vmatmul.bf16.gmra.mxu0 %v3794
      %v3862 = vpop.f32.mrf.mxu0
      %v3863 = vadd.f32 %v3701, %v3862
      %v3864 = vpop.f32.mrf.mxu0
      %v3865 = vadd.f32 %v3703, %v3864
      %3866 = vmatmul.bf16.gmra.mxu0 %v3797
      %v3867 = vpop.f32.mrf.mxu0
      %v3868 = vadd.f32 %v3706, %v3867
      %v3869 = vpop.f32.mrf.mxu0
      %v3870 = vadd.f32 %v3708, %v3869
      %3871 = vmatmul.bf16.gmra.mxu0 %v3800
      %v3872 = vpop.f32.mrf.mxu0
      %v3873 = vadd.f32 %v3711, %v3872
      %v3874 = vpop.f32.mrf.mxu0
      %v3875 = vadd.f32 %v3713, %v3874
      %3876 = vmatmul.bf16.gmra.mxu0 %v3803
      %v3877 = vpop.f32.mrf.mxu0
      %v3878 = vadd.f32 %v3716, %v3877
      %v3879 = vpop.f32.mrf.mxu0
      %v3880 = vadd.f32 %v3718, %v3879
      %3881 = vmatmul.bf16.gmra.mxu0 %v3806
      %v3882 = vpop.f32.mrf.mxu0
      %v3883 = vadd.f32 %v3721, %v3882
      %v3884 = vpop.f32.mrf.mxu0
      %v3885 = vadd.f32 %v3723, %v3884
      %3886 = vmatmul.bf16.gmra.mxu0 %v3809
      %v3887 = vpop.f32.mrf.mxu0
      %v3888 = vadd.f32 %v3726, %v3887
      %v3889 = vpop.f32.mrf.mxu0
      %v3890 = vadd.f32 %v3728, %v3889
      %3891 = vmatmul.bf16.gmra.mxu0 %v3812
      %v3892 = vpop.f32.mrf.mxu0
      %v3893 = vadd.f32 %v3731, %v3892
      %v3894 = vpop.f32.mrf.mxu0
      %v3895 = vadd.f32 %v3733, %v3894
      %3896 = vmatmul.bf16.gmra.mxu0 %v3815
      %v3897 = vpop.f32.mrf.mxu0
      %v3898 = vadd.f32 %v3736, %v3897
      %v3899 = vpop.f32.mrf.mxu0
      %v3900 = vadd.f32 %v3738, %v3899
      %3901 = vmatmul.bf16.gmra.mxu0 %v3818
      %v3902 = vpop.f32.mrf.mxu0
      %v3903 = vadd.f32 %v3741, %v3902
      %v3904 = vpop.f32.mrf.mxu0
      %v3905 = vadd.f32 %v3743, %v3904
      %3906 = vmatmul.bf16.gmra.mxu0 %v3821
      %v3907 = vpop.f32.mrf.mxu0
      %v3908 = vadd.f32 %v3746, %v3907
      %v3909 = vpop.f32.mrf.mxu0
      %v3910 = vadd.f32 %v3748, %v3909
      %3911 = vdwg.mxu0
      %v3913 = vperm.slane %v354, 0
      %v3915 = vadd.f32 %v3833, %v3913
      %v3916 = vadd.f32 %v3835, %v3913
      %v3917 = vadd.f32 %v3838, %v3913
      %v3918 = vadd.f32 %v3840, %v3913
      %v3919 = vadd.f32 %v3843, %v3913
      %v3920 = vadd.f32 %v3845, %v3913
      %v3921 = vadd.f32 %v3848, %v3913
      %v3922 = vadd.f32 %v3850, %v3913
      %v3923 = vadd.f32 %v3853, %v3913
      %v3924 = vadd.f32 %v3855, %v3913
      %v3925 = vadd.f32 %v3858, %v3913
      %v3926 = vadd.f32 %v3860, %v3913
      %v3927 = vadd.f32 %v3863, %v3913
      %v3928 = vadd.f32 %v3865, %v3913
      %v3929 = vadd.f32 %v3868, %v3913
      %v3930 = vadd.f32 %v3870, %v3913
      %v3931 = vadd.f32 %v3873, %v3913
      %v3932 = vadd.f32 %v3875, %v3913
      %v3933 = vadd.f32 %v3878, %v3913
      %v3934 = vadd.f32 %v3880, %v3913
      %v3935 = vadd.f32 %v3883, %v3913
      %v3936 = vadd.f32 %v3885, %v3913
      %v3937 = vadd.f32 %v3888, %v3913
      %v3938 = vadd.f32 %v3890, %v3913
      %v3939 = vadd.f32 %v3893, %v3913
      %v3940 = vadd.f32 %v3895, %v3913
      %v3941 = vadd.f32 %v3898, %v3913
      %v3942 = vadd.f32 %v3900, %v3913
      %v3943 = vadd.f32 %v3903, %v3913
      %v3944 = vadd.f32 %v3905, %v3913
      %v3945 = vadd.f32 %v3908, %v3913
      %v3946 = vadd.f32 %v3910, %v3913
      %v3947 = vxor.u32 %v3915, 2147483648
      %v3948 = vxor.u32 %v3916, 2147483648
      %v3949 = vxor.u32 %v3917, 2147483648
      %v3950 = vxor.u32 %v3918, 2147483648
      %v3951 = vxor.u32 %v3919, 2147483648
      %v3952 = vxor.u32 %v3920, 2147483648
      %v3953 = vxor.u32 %v3921, 2147483648
      %v3954 = vxor.u32 %v3922, 2147483648
      %v3955 = vxor.u32 %v3923, 2147483648
      %v3956 = vxor.u32 %v3924, 2147483648
      %v3957 = vxor.u32 %v3925, 2147483648
      %v3958 = vxor.u32 %v3926, 2147483648
      %v3959 = vxor.u32 %v3927, 2147483648
      %v3960 = vxor.u32 %v3928, 2147483648
      %v3961 = vxor.u32 %v3929, 2147483648
      %v3962 = vxor.u32 %v3930, 2147483648
      %v3963 = vxor.u32 %v3931, 2147483648
      %v3964 = vxor.u32 %v3932, 2147483648
      %v3965 = vxor.u32 %v3933, 2147483648
      %v3966 = vxor.u32 %v3934, 2147483648
      %v3967 = vxor.u32 %v3935, 2147483648
      %v3968 = vxor.u32 %v3936, 2147483648
      %v3969 = vxor.u32 %v3937, 2147483648
      %v3970 = vxor.u32 %v3938, 2147483648
      %v3971 = vxor.u32 %v3939, 2147483648
      %v3972 = vxor.u32 %v3940, 2147483648
      %v3973 = vxor.u32 %v3941, 2147483648
      %v3974 = vxor.u32 %v3942, 2147483648
      %v3975 = vxor.u32 %v3943, 2147483648
      %v3976 = vxor.u32 %v3944, 2147483648
      %v3977 = vxor.u32 %v3945, 2147483648
      %v3978 = vxor.u32 %v3946, 2147483648
      %v3979 = vmul.f32 %v3947, 1.442695
      %v3980 = vpow.pop %v3979
      %v3981 = vmul.f32 %v3948, 1.442695
      %v3982 = vpow.pop %v3981
      %v3983 = vmul.f32 %v3949, 1.442695
      %v3984 = vpow.pop %v3983
      %v3985 = vmul.f32 %v3950, 1.442695
      %v3986 = vpow.pop %v3985
      %v3987 = vmul.f32 %v3951, 1.442695
      %v3988 = vpow.pop %v3987
      %v3989 = vmul.f32 %v3952, 1.442695
      %v3990 = vpow.pop %v3989
      %v3991 = vmul.f32 %v3953, 1.442695
      %v3992 = vpow.pop %v3991
      %v3993 = vmul.f32 %v3954, 1.442695
      %v3994 = vpow.pop %v3993
      %v3995 = vmul.f32 %v3955, 1.442695
      %v3996 = vpow.pop %v3995
      %v3997 = vmul.f32 %v3956, 1.442695
      %v3998 = vpow.pop %v3997
      %v3999 = vmul.f32 %v3957, 1.442695
      %v4000 = vpow.pop %v3999
      %v4001 = vmul.f32 %v3958, 1.442695
      %v4002 = vpow.pop %v4001
      %v4003 = vmul.f32 %v3959, 1.442695
      %v4004 = vpow.pop %v4003
      %v4005 = vmul.f32 %v3960, 1.442695
      %v4006 = vpow.pop %v4005
      %v4007 = vmul.f32 %v3961, 1.442695
      %v4008 = vpow.pop %v4007
      %v4009 = vmul.f32 %v3962, 1.442695
      %v4010 = vpow.pop %v4009
      %v4011 = vmul.f32 %v3963, 1.442695
      %v4012 = vpow.pop %v4011
      %v4013 = vmul.f32 %v3964, 1.442695
      %v4014 = vpow.pop %v4013
      %v4015 = vmul.f32 %v3965, 1.442695
      %v4016 = vpow.pop %v4015
      %v4017 = vmul.f32 %v3966, 1.442695
      %v4018 = vpow.pop %v4017
      %v4019 = vmul.f32 %v3967, 1.442695
      %v4020 = vpow.pop %v4019
      %v4021 = vmul.f32 %v3968, 1.442695
      %v4022 = vpow.pop %v4021
      %v4023 = vmul.f32 %v3969, 1.442695
      %v4024 = vpow.pop %v4023
      %v4025 = vmul.f32 %v3970, 1.442695
      %v4026 = vpow.pop %v4025
      %v4027 = vmul.f32 %v3971, 1.442695
      %v4028 = vpow.pop %v4027
      %v4029 = vmul.f32 %v3972, 1.442695
      %v4030 = vpow.pop %v4029
      %v4031 = vmul.f32 %v3973, 1.442695
      %v4032 = vpow.pop %v4031
      %v4033 = vmul.f32 %v3974, 1.442695
      %v4034 = vpow.pop %v4033
      %v4035 = vmul.f32 %v3975, 1.442695
      %v4036 = vpow.pop %v4035
      %v4037 = vmul.f32 %v3976, 1.442695
      %v4038 = vpow.pop %v4037
      %v4039 = vmul.f32 %v3977, 1.442695
      %v4040 = vpow.pop %v4039
      %v4041 = vmul.f32 %v3978, 1.442695
      %v4042 = vpow.pop %v4041
      %v4043 = vadd.f32 %v3980, 1.0
      %v4044 = vadd.f32 %v3982, 1.0
      %v4045 = vadd.f32 %v3984, 1.0
      %v4046 = vadd.f32 %v3986, 1.0
      %v4047 = vadd.f32 %v3988, 1.0
      %v4048 = vadd.f32 %v3990, 1.0
      %v4049 = vadd.f32 %v3992, 1.0
      %v4050 = vadd.f32 %v3994, 1.0
      %v4051 = vadd.f32 %v3996, 1.0
      %v4052 = vadd.f32 %v3998, 1.0
      %v4053 = vadd.f32 %v4000, 1.0
      %v4054 = vadd.f32 %v4002, 1.0
      %v4055 = vadd.f32 %v4004, 1.0
      %v4056 = vadd.f32 %v4006, 1.0
      %v4057 = vadd.f32 %v4008, 1.0
      %v4058 = vadd.f32 %v4010, 1.0
      %v4059 = vadd.f32 %v4012, 1.0
      %v4060 = vadd.f32 %v4014, 1.0
      %v4061 = vadd.f32 %v4016, 1.0
      %v4062 = vadd.f32 %v4018, 1.0
      %v4063 = vadd.f32 %v4020, 1.0
      %v4064 = vadd.f32 %v4022, 1.0
      %v4065 = vadd.f32 %v4024, 1.0
      %v4066 = vadd.f32 %v4026, 1.0
      %v4067 = vadd.f32 %v4028, 1.0
      %v4068 = vadd.f32 %v4030, 1.0
      %v4069 = vadd.f32 %v4032, 1.0
      %v4070 = vadd.f32 %v4034, 1.0
      %v4071 = vadd.f32 %v4036, 1.0
      %v4072 = vadd.f32 %v4038, 1.0
      %v4073 = vadd.f32 %v4040, 1.0
      %v4074 = vadd.f32 %v4042, 1.0
      %v4075 = vrcp.pop %v4043
      %v4076 = vmul.f32 %v4043, %v4075
      %v4077 = vsub.f32 1.0, %v4076
      %v4078 = vmul.f32 %v4075, %v4077
      %v4079 = vadd.f32 %v4075, %v4078
      %vm4080 = vweird.f32 %v4043
      %vm4081 = vweird.f32 %v4075
      %vm4082 = vmor %vm4080, %vm4081
      %v4083 = vsel %vm4082, %v4075, %v4079
      %v4084 = vand.u32 2147483647, %v4043
      %vm4085 = vcmp.eq.f32.partialorder %v4084, 8.507059e+37
      %v4086 = vand.u32 %v4043, 2147483648
      %v4087 = vor.u32 1.1754944e-38, %v4086
      %v4088 = vsel %vm4085, %v4087, %v4083
      %v4089 = vmul.f32 1.0, %v4088
      %v4090 = vrcp.pop %v4044
      %v4091 = vmul.f32 %v4044, %v4090
      %v4092 = vsub.f32 1.0, %v4091
      %v4093 = vmul.f32 %v4090, %v4092
      %v4094 = vadd.f32 %v4090, %v4093
      %vm4095 = vweird.f32 %v4044
      %vm4096 = vweird.f32 %v4090
      %vm4097 = vmor %vm4095, %vm4096
      %v4098 = vsel %vm4097, %v4090, %v4094
      %v4099 = vand.u32 2147483647, %v4044
      %vm4100 = vcmp.eq.f32.partialorder %v4099, 8.507059e+37
      %v4101 = vand.u32 %v4044, 2147483648
      %v4102 = vor.u32 1.1754944e-38, %v4101
      %v4103 = vsel %vm4100, %v4102, %v4098
      %v4104 = vmul.f32 1.0, %v4103
      %v4105 = vrcp.pop %v4045
      %v4106 = vmul.f32 %v4045, %v4105
      %v4107 = vsub.f32 1.0, %v4106
      %v4108 = vmul.f32 %v4105, %v4107
      %v4109 = vadd.f32 %v4105, %v4108
      %vm4110 = vweird.f32 %v4045
      %vm4111 = vweird.f32 %v4105
      %vm4112 = vmor %vm4110, %vm4111
      %v4113 = vsel %vm4112, %v4105, %v4109
      %v4114 = vand.u32 2147483647, %v4045
      %vm4115 = vcmp.eq.f32.partialorder %v4114, 8.507059e+37
      %v4116 = vand.u32 %v4045, 2147483648
      %v4117 = vor.u32 1.1754944e-38, %v4116
      %v4118 = vsel %vm4115, %v4117, %v4113
      %v4119 = vmul.f32 1.0, %v4118
      %v4120 = vrcp.pop %v4046
      %v4121 = vmul.f32 %v4046, %v4120
      %v4122 = vsub.f32 1.0, %v4121
      %v4123 = vmul.f32 %v4120, %v4122
      %v4124 = vadd.f32 %v4120, %v4123
      %vm4125 = vweird.f32 %v4046
      %vm4126 = vweird.f32 %v4120
      %vm4127 = vmor %vm4125, %vm4126
      %v4128 = vsel %vm4127, %v4120, %v4124
      %v4129 = vand.u32 2147483647, %v4046
      %vm4130 = vcmp.eq.f32.partialorder %v4129, 8.507059e+37
      %v4131 = vand.u32 %v4046, 2147483648
      %v4132 = vor.u32 1.1754944e-38, %v4131
      %v4133 = vsel %vm4130, %v4132, %v4128
      %v4134 = vmul.f32 1.0, %v4133
      %v4135 = vrcp.pop %v4047
      %v4136 = vmul.f32 %v4047, %v4135
      %v4137 = vsub.f32 1.0, %v4136
      %v4138 = vmul.f32 %v4135, %v4137
      %v4139 = vadd.f32 %v4135, %v4138
      %vm4140 = vweird.f32 %v4047
      %vm4141 = vweird.f32 %v4135
      %vm4142 = vmor %vm4140, %vm4141
      %v4143 = vsel %vm4142, %v4135, %v4139
      %v4144 = vand.u32 2147483647, %v4047
      %vm4145 = vcmp.eq.f32.partialorder %v4144, 8.507059e+37
      %v4146 = vand.u32 %v4047, 2147483648
      %v4147 = vor.u32 1.1754944e-38, %v4146
      %v4148 = vsel %vm4145, %v4147, %v4143
      %v4149 = vmul.f32 1.0, %v4148
      %v4150 = vrcp.pop %v4048
      %v4151 = vmul.f32 %v4048, %v4150
      %v4152 = vsub.f32 1.0, %v4151
      %v4153 = vmul.f32 %v4150, %v4152
      %v4154 = vadd.f32 %v4150, %v4153
      %vm4155 = vweird.f32 %v4048
      %vm4156 = vweird.f32 %v4150
      %vm4157 = vmor %vm4155, %vm4156
      %v4158 = vsel %vm4157, %v4150, %v4154
      %v4159 = vand.u32 2147483647, %v4048
      %vm4160 = vcmp.eq.f32.partialorder %v4159, 8.507059e+37
      %v4161 = vand.u32 %v4048, 2147483648
      %v4162 = vor.u32 1.1754944e-38, %v4161
      %v4163 = vsel %vm4160, %v4162, %v4158
      %v4164 = vmul.f32 1.0, %v4163
      %v4165 = vrcp.pop %v4049
      %v4166 = vmul.f32 %v4049, %v4165
      %v4167 = vsub.f32 1.0, %v4166
      %v4168 = vmul.f32 %v4165, %v4167
      %v4169 = vadd.f32 %v4165, %v4168
      %vm4170 = vweird.f32 %v4049
      %vm4171 = vweird.f32 %v4165
      %vm4172 = vmor %vm4170, %vm4171
      %v4173 = vsel %vm4172, %v4165, %v4169
      %v4174 = vand.u32 2147483647, %v4049
      %vm4175 = vcmp.eq.f32.partialorder %v4174, 8.507059e+37
      %v4176 = vand.u32 %v4049, 2147483648
      %v4177 = vor.u32 1.1754944e-38, %v4176
      %v4178 = vsel %vm4175, %v4177, %v4173
      %v4179 = vmul.f32 1.0, %v4178
      %v4180 = vrcp.pop %v4050
      %v4181 = vmul.f32 %v4050, %v4180
      %v4182 = vsub.f32 1.0, %v4181
      %v4183 = vmul.f32 %v4180, %v4182
      %v4184 = vadd.f32 %v4180, %v4183
      %vm4185 = vweird.f32 %v4050
      %vm4186 = vweird.f32 %v4180
      %vm4187 = vmor %vm4185, %vm4186
      %v4188 = vsel %vm4187, %v4180, %v4184
      %v4189 = vand.u32 2147483647, %v4050
      %vm4190 = vcmp.eq.f32.partialorder %v4189, 8.507059e+37
      %v4191 = vand.u32 %v4050, 2147483648
      %v4192 = vor.u32 1.1754944e-38, %v4191
      %v4193 = vsel %vm4190, %v4192, %v4188
      %v4194 = vmul.f32 1.0, %v4193
      %v4195 = vrcp.pop %v4051
      %v4196 = vmul.f32 %v4051, %v4195
      %v4197 = vsub.f32 1.0, %v4196
      %v4198 = vmul.f32 %v4195, %v4197
      %v4199 = vadd.f32 %v4195, %v4198
      %vm4200 = vweird.f32 %v4051
      %vm4201 = vweird.f32 %v4195
      %vm4202 = vmor %vm4200, %vm4201
      %v4203 = vsel %vm4202, %v4195, %v4199
      %v4204 = vand.u32 2147483647, %v4051
      %vm4205 = vcmp.eq.f32.partialorder %v4204, 8.507059e+37
      %v4206 = vand.u32 %v4051, 2147483648
      %v4207 = vor.u32 1.1754944e-38, %v4206
      %v4208 = vsel %vm4205, %v4207, %v4203
      %v4209 = vmul.f32 1.0, %v4208
      %v4210 = vrcp.pop %v4052
      %v4211 = vmul.f32 %v4052, %v4210
      %v4212 = vsub.f32 1.0, %v4211
      %v4213 = vmul.f32 %v4210, %v4212
      %v4214 = vadd.f32 %v4210, %v4213
      %vm4215 = vweird.f32 %v4052
      %vm4216 = vweird.f32 %v4210
      %vm4217 = vmor %vm4215, %vm4216
      %v4218 = vsel %vm4217, %v4210, %v4214
      %v4219 = vand.u32 2147483647, %v4052
      %vm4220 = vcmp.eq.f32.partialorder %v4219, 8.507059e+37
      %v4221 = vand.u32 %v4052, 2147483648
      %v4222 = vor.u32 1.1754944e-38, %v4221
      %v4223 = vsel %vm4220, %v4222, %v4218
      %v4224 = vmul.f32 1.0, %v4223
      %v4225 = vrcp.pop %v4053
      %v4226 = vmul.f32 %v4053, %v4225
      %v4227 = vsub.f32 1.0, %v4226
      %v4228 = vmul.f32 %v4225, %v4227
      %v4229 = vadd.f32 %v4225, %v4228
      %vm4230 = vweird.f32 %v4053
      %vm4231 = vweird.f32 %v4225
      %vm4232 = vmor %vm4230, %vm4231
      %v4233 = vsel %vm4232, %v4225, %v4229
      %v4234 = vand.u32 2147483647, %v4053
      %vm4235 = vcmp.eq.f32.partialorder %v4234, 8.507059e+37
      %v4236 = vand.u32 %v4053, 2147483648
      %v4237 = vor.u32 1.1754944e-38, %v4236
      %v4238 = vsel %vm4235, %v4237, %v4233
      %v4239 = vmul.f32 1.0, %v4238
      %v4240 = vrcp.pop %v4054
      %v4241 = vmul.f32 %v4054, %v4240
      %v4242 = vsub.f32 1.0, %v4241
      %v4243 = vmul.f32 %v4240, %v4242
      %v4244 = vadd.f32 %v4240, %v4243
      %vm4245 = vweird.f32 %v4054
      %vm4246 = vweird.f32 %v4240
      %vm4247 = vmor %vm4245, %vm4246
      %v4248 = vsel %vm4247, %v4240, %v4244
      %v4249 = vand.u32 2147483647, %v4054
      %vm4250 = vcmp.eq.f32.partialorder %v4249, 8.507059e+37
      %v4251 = vand.u32 %v4054, 2147483648
      %v4252 = vor.u32 1.1754944e-38, %v4251
      %v4253 = vsel %vm4250, %v4252, %v4248
      %v4254 = vmul.f32 1.0, %v4253
      %v4255 = vrcp.pop %v4055
      %v4256 = vmul.f32 %v4055, %v4255
      %v4257 = vsub.f32 1.0, %v4256
      %v4258 = vmul.f32 %v4255, %v4257
      %v4259 = vadd.f32 %v4255, %v4258
      %vm4260 = vweird.f32 %v4055
      %vm4261 = vweird.f32 %v4255
      %vm4262 = vmor %vm4260, %vm4261
      %v4263 = vsel %vm4262, %v4255, %v4259
      %v4264 = vand.u32 2147483647, %v4055
      %vm4265 = vcmp.eq.f32.partialorder %v4264, 8.507059e+37
      %v4266 = vand.u32 %v4055, 2147483648
      %v4267 = vor.u32 1.1754944e-38, %v4266
      %v4268 = vsel %vm4265, %v4267, %v4263
      %v4269 = vmul.f32 1.0, %v4268
      %v4270 = vrcp.pop %v4056
      %v4271 = vmul.f32 %v4056, %v4270
      %v4272 = vsub.f32 1.0, %v4271
      %v4273 = vmul.f32 %v4270, %v4272
      %v4274 = vadd.f32 %v4270, %v4273
      %vm4275 = vweird.f32 %v4056
      %vm4276 = vweird.f32 %v4270
      %vm4277 = vmor %vm4275, %vm4276
      %v4278 = vsel %vm4277, %v4270, %v4274
      %v4279 = vand.u32 2147483647, %v4056
      %vm4280 = vcmp.eq.f32.partialorder %v4279, 8.507059e+37
      %v4281 = vand.u32 %v4056, 2147483648
      %v4282 = vor.u32 1.1754944e-38, %v4281
      %v4283 = vsel %vm4280, %v4282, %v4278
      %v4284 = vmul.f32 1.0, %v4283
      %v4285 = vrcp.pop %v4057
      %v4286 = vmul.f32 %v4057, %v4285
      %v4287 = vsub.f32 1.0, %v4286
      %v4288 = vmul.f32 %v4285, %v4287
      %v4289 = vadd.f32 %v4285, %v4288
      %vm4290 = vweird.f32 %v4057
      %vm4291 = vweird.f32 %v4285
      %vm4292 = vmor %vm4290, %vm4291
      %v4293 = vsel %vm4292, %v4285, %v4289
      %v4294 = vand.u32 2147483647, %v4057
      %vm4295 = vcmp.eq.f32.partialorder %v4294, 8.507059e+37
      %v4296 = vand.u32 %v4057, 2147483648
      %v4297 = vor.u32 1.1754944e-38, %v4296
      %v4298 = vsel %vm4295, %v4297, %v4293
      %v4299 = vmul.f32 1.0, %v4298
      %v4300 = vrcp.pop %v4058
      %v4301 = vmul.f32 %v4058, %v4300
      %v4302 = vsub.f32 1.0, %v4301
      %v4303 = vmul.f32 %v4300, %v4302
      %v4304 = vadd.f32 %v4300, %v4303
      %vm4305 = vweird.f32 %v4058
      %vm4306 = vweird.f32 %v4300
      %vm4307 = vmor %vm4305, %vm4306
      %v4308 = vsel %vm4307, %v4300, %v4304
      %v4309 = vand.u32 2147483647, %v4058
      %vm4310 = vcmp.eq.f32.partialorder %v4309, 8.507059e+37
      %v4311 = vand.u32 %v4058, 2147483648
      %v4312 = vor.u32 1.1754944e-38, %v4311
      %v4313 = vsel %vm4310, %v4312, %v4308
      %v4314 = vmul.f32 1.0, %v4313
      %v4315 = vrcp.pop %v4059
      %v4316 = vmul.f32 %v4059, %v4315
      %v4317 = vsub.f32 1.0, %v4316
      %v4318 = vmul.f32 %v4315, %v4317
      %v4319 = vadd.f32 %v4315, %v4318
      %vm4320 = vweird.f32 %v4059
      %vm4321 = vweird.f32 %v4315
      %vm4322 = vmor %vm4320, %vm4321
      %v4323 = vsel %vm4322, %v4315, %v4319
      %v4324 = vand.u32 2147483647, %v4059
      %vm4325 = vcmp.eq.f32.partialorder %v4324, 8.507059e+37
      %v4326 = vand.u32 %v4059, 2147483648
      %v4327 = vor.u32 1.1754944e-38, %v4326
      %v4328 = vsel %vm4325, %v4327, %v4323
      %v4329 = vmul.f32 1.0, %v4328
      %v4330 = vrcp.pop %v4060
      %v4331 = vmul.f32 %v4060, %v4330
      %v4332 = vsub.f32 1.0, %v4331
      %v4333 = vmul.f32 %v4330, %v4332
      %v4334 = vadd.f32 %v4330, %v4333
      %vm4335 = vweird.f32 %v4060
      %vm4336 = vweird.f32 %v4330
      %vm4337 = vmor %vm4335, %vm4336
      %v4338 = vsel %vm4337, %v4330, %v4334
      %v4339 = vand.u32 2147483647, %v4060
      %vm4340 = vcmp.eq.f32.partialorder %v4339, 8.507059e+37
      %v4341 = vand.u32 %v4060, 2147483648
      %v4342 = vor.u32 1.1754944e-38, %v4341
      %v4343 = vsel %vm4340, %v4342, %v4338
      %v4344 = vmul.f32 1.0, %v4343
      %v4345 = vrcp.pop %v4061
      %v4346 = vmul.f32 %v4061, %v4345
      %v4347 = vsub.f32 1.0, %v4346
      %v4348 = vmul.f32 %v4345, %v4347
      %v4349 = vadd.f32 %v4345, %v4348
      %vm4350 = vweird.f32 %v4061
      %vm4351 = vweird.f32 %v4345
      %vm4352 = vmor %vm4350, %vm4351
      %v4353 = vsel %vm4352, %v4345, %v4349
      %v4354 = vand.u32 2147483647, %v4061
      %vm4355 = vcmp.eq.f32.partialorder %v4354, 8.507059e+37
      %v4356 = vand.u32 %v4061, 2147483648
      %v4357 = vor.u32 1.1754944e-38, %v4356
      %v4358 = vsel %vm4355, %v4357, %v4353
      %v4359 = vmul.f32 1.0, %v4358
      %v4360 = vrcp.pop %v4062
      %v4361 = vmul.f32 %v4062, %v4360
      %v4362 = vsub.f32 1.0, %v4361
      %v4363 = vmul.f32 %v4360, %v4362
      %v4364 = vadd.f32 %v4360, %v4363
      %vm4365 = vweird.f32 %v4062
      %vm4366 = vweird.f32 %v4360
      %vm4367 = vmor %vm4365, %vm4366
      %v4368 = vsel %vm4367, %v4360, %v4364
      %v4369 = vand.u32 2147483647, %v4062
      %vm4370 = vcmp.eq.f32.partialorder %v4369, 8.507059e+37
      %v4371 = vand.u32 %v4062, 2147483648
      %v4372 = vor.u32 1.1754944e-38, %v4371
      %v4373 = vsel %vm4370, %v4372, %v4368
      %v4374 = vmul.f32 1.0, %v4373
      %v4375 = vrcp.pop %v4063
      %v4376 = vmul.f32 %v4063, %v4375
      %v4377 = vsub.f32 1.0, %v4376
      %v4378 = vmul.f32 %v4375, %v4377
      %v4379 = vadd.f32 %v4375, %v4378
      %vm4380 = vweird.f32 %v4063
      %vm4381 = vweird.f32 %v4375
      %vm4382 = vmor %vm4380, %vm4381
      %v4383 = vsel %vm4382, %v4375, %v4379
      %v4384 = vand.u32 2147483647, %v4063
      %vm4385 = vcmp.eq.f32.partialorder %v4384, 8.507059e+37
      %v4386 = vand.u32 %v4063, 2147483648
      %v4387 = vor.u32 1.1754944e-38, %v4386
      %v4388 = vsel %vm4385, %v4387, %v4383
      %v4389 = vmul.f32 1.0, %v4388
      %v4390 = vrcp.pop %v4064
      %v4391 = vmul.f32 %v4064, %v4390
      %v4392 = vsub.f32 1.0, %v4391
      %v4393 = vmul.f32 %v4390, %v4392
      %v4394 = vadd.f32 %v4390, %v4393
      %vm4395 = vweird.f32 %v4064
      %vm4396 = vweird.f32 %v4390
      %vm4397 = vmor %vm4395, %vm4396
      %v4398 = vsel %vm4397, %v4390, %v4394
      %v4399 = vand.u32 2147483647, %v4064
      %vm4400 = vcmp.eq.f32.partialorder %v4399, 8.507059e+37
      %v4401 = vand.u32 %v4064, 2147483648
      %v4402 = vor.u32 1.1754944e-38, %v4401
      %v4403 = vsel %vm4400, %v4402, %v4398
      %v4404 = vmul.f32 1.0, %v4403
      %v4405 = vrcp.pop %v4065
      %v4406 = vmul.f32 %v4065, %v4405
      %v4407 = vsub.f32 1.0, %v4406
      %v4408 = vmul.f32 %v4405, %v4407
      %v4409 = vadd.f32 %v4405, %v4408
      %vm4410 = vweird.f32 %v4065
      %vm4411 = vweird.f32 %v4405
      %vm4412 = vmor %vm4410, %vm4411
      %v4413 = vsel %vm4412, %v4405, %v4409
      %v4414 = vand.u32 2147483647, %v4065
      %vm4415 = vcmp.eq.f32.partialorder %v4414, 8.507059e+37
      %v4416 = vand.u32 %v4065, 2147483648
      %v4417 = vor.u32 1.1754944e-38, %v4416
      %v4418 = vsel %vm4415, %v4417, %v4413
      %v4419 = vmul.f32 1.0, %v4418
      %v4420 = vrcp.pop %v4066
      %v4421 = vmul.f32 %v4066, %v4420
      %v4422 = vsub.f32 1.0, %v4421
      %v4423 = vmul.f32 %v4420, %v4422
      %v4424 = vadd.f32 %v4420, %v4423
      %vm4425 = vweird.f32 %v4066
      %vm4426 = vweird.f32 %v4420
      %vm4427 = vmor %vm4425, %vm4426
      %v4428 = vsel %vm4427, %v4420, %v4424
      %v4429 = vand.u32 2147483647, %v4066
      %vm4430 = vcmp.eq.f32.partialorder %v4429, 8.507059e+37
      %v4431 = vand.u32 %v4066, 2147483648
      %v4432 = vor.u32 1.1754944e-38, %v4431
      %v4433 = vsel %vm4430, %v4432, %v4428
      %v4434 = vmul.f32 1.0, %v4433
      %v4435 = vrcp.pop %v4067
      %v4436 = vmul.f32 %v4067, %v4435
      %v4437 = vsub.f32 1.0, %v4436
      %v4438 = vmul.f32 %v4435, %v4437
      %v4439 = vadd.f32 %v4435, %v4438
      %vm4440 = vweird.f32 %v4067
      %vm4441 = vweird.f32 %v4435
      %vm4442 = vmor %vm4440, %vm4441
      %v4443 = vsel %vm4442, %v4435, %v4439
      %v4444 = vand.u32 2147483647, %v4067
      %vm4445 = vcmp.eq.f32.partialorder %v4444, 8.507059e+37
      %v4446 = vand.u32 %v4067, 2147483648
      %v4447 = vor.u32 1.1754944e-38, %v4446
      %v4448 = vsel %vm4445, %v4447, %v4443
      %v4449 = vmul.f32 1.0, %v4448
      %v4450 = vrcp.pop %v4068
      %v4451 = vmul.f32 %v4068, %v4450
      %v4452 = vsub.f32 1.0, %v4451
      %v4453 = vmul.f32 %v4450, %v4452
      %v4454 = vadd.f32 %v4450, %v4453
      %vm4455 = vweird.f32 %v4068
      %vm4456 = vweird.f32 %v4450
      %vm4457 = vmor %vm4455, %vm4456
      %v4458 = vsel %vm4457, %v4450, %v4454
      %v4459 = vand.u32 2147483647, %v4068
      %vm4460 = vcmp.eq.f32.partialorder %v4459, 8.507059e+37
      %v4461 = vand.u32 %v4068, 2147483648
      %v4462 = vor.u32 1.1754944e-38, %v4461
      %v4463 = vsel %vm4460, %v4462, %v4458
      %v4464 = vmul.f32 1.0, %v4463
      %v4465 = vrcp.pop %v4069
      %v4466 = vmul.f32 %v4069, %v4465
      %v4467 = vsub.f32 1.0, %v4466
      %v4468 = vmul.f32 %v4465, %v4467
      %v4469 = vadd.f32 %v4465, %v4468
      %vm4470 = vweird.f32 %v4069
      %vm4471 = vweird.f32 %v4465
      %vm4472 = vmor %vm4470, %vm4471
      %v4473 = vsel %vm4472, %v4465, %v4469
      %v4474 = vand.u32 2147483647, %v4069
      %vm4475 = vcmp.eq.f32.partialorder %v4474, 8.507059e+37
      %v4476 = vand.u32 %v4069, 2147483648
      %v4477 = vor.u32 1.1754944e-38, %v4476
      %v4478 = vsel %vm4475, %v4477, %v4473
      %v4479 = vmul.f32 1.0, %v4478
      %v4480 = vrcp.pop %v4070
      %v4481 = vmul.f32 %v4070, %v4480
      %v4482 = vsub.f32 1.0, %v4481
      %v4483 = vmul.f32 %v4480, %v4482
      %v4484 = vadd.f32 %v4480, %v4483
      %vm4485 = vweird.f32 %v4070
      %vm4486 = vweird.f32 %v4480
      %vm4487 = vmor %vm4485, %vm4486
      %v4488 = vsel %vm4487, %v4480, %v4484
      %v4489 = vand.u32 2147483647, %v4070
      %vm4490 = vcmp.eq.f32.partialorder %v4489, 8.507059e+37
      %v4491 = vand.u32 %v4070, 2147483648
      %v4492 = vor.u32 1.1754944e-38, %v4491
      %v4493 = vsel %vm4490, %v4492, %v4488
      %v4494 = vmul.f32 1.0, %v4493
      %v4495 = vrcp.pop %v4071
      %v4496 = vmul.f32 %v4071, %v4495
      %v4497 = vsub.f32 1.0, %v4496
      %v4498 = vmul.f32 %v4495, %v4497
      %v4499 = vadd.f32 %v4495, %v4498
      %vm4500 = vweird.f32 %v4071
      %vm4501 = vweird.f32 %v4495
      %vm4502 = vmor %vm4500, %vm4501
      %v4503 = vsel %vm4502, %v4495, %v4499
      %v4504 = vand.u32 2147483647, %v4071
      %vm4505 = vcmp.eq.f32.partialorder %v4504, 8.507059e+37
      %v4506 = vand.u32 %v4071, 2147483648
      %v4507 = vor.u32 1.1754944e-38, %v4506
      %v4508 = vsel %vm4505, %v4507, %v4503
      %v4509 = vmul.f32 1.0, %v4508
      %v4510 = vrcp.pop %v4072
      %v4511 = vmul.f32 %v4072, %v4510
      %v4512 = vsub.f32 1.0, %v4511
      %v4513 = vmul.f32 %v4510, %v4512
      %v4514 = vadd.f32 %v4510, %v4513
      %vm4515 = vweird.f32 %v4072
      %vm4516 = vweird.f32 %v4510
      %vm4517 = vmor %vm4515, %vm4516
      %v4518 = vsel %vm4517, %v4510, %v4514
      %v4519 = vand.u32 2147483647, %v4072
      %vm4520 = vcmp.eq.f32.partialorder %v4519, 8.507059e+37
      %v4521 = vand.u32 %v4072, 2147483648
      %v4522 = vor.u32 1.1754944e-38, %v4521
      %v4523 = vsel %vm4520, %v4522, %v4518
      %v4524 = vmul.f32 1.0, %v4523
      %v4525 = vrcp.pop %v4073
      %v4526 = vmul.f32 %v4073, %v4525
      %v4527 = vsub.f32 1.0, %v4526
      %v4528 = vmul.f32 %v4525, %v4527
      %v4529 = vadd.f32 %v4525, %v4528
      %vm4530 = vweird.f32 %v4073
      %vm4531 = vweird.f32 %v4525
      %vm4532 = vmor %vm4530, %vm4531
      %v4533 = vsel %vm4532, %v4525, %v4529
      %v4534 = vand.u32 2147483647, %v4073
      %vm4535 = vcmp.eq.f32.partialorder %v4534, 8.507059e+37
      %v4536 = vand.u32 %v4073, 2147483648
      %v4537 = vor.u32 1.1754944e-38, %v4536
      %v4538 = vsel %vm4535, %v4537, %v4533
      %v4539 = vmul.f32 1.0, %v4538
      %v4540 = vrcp.pop %v4074
      %v4541 = vmul.f32 %v4074, %v4540
      %v4542 = vsub.f32 1.0, %v4541
      %v4543 = vmul.f32 %v4540, %v4542
      %v4544 = vadd.f32 %v4540, %v4543
      %vm4545 = vweird.f32 %v4074
      %vm4546 = vweird.f32 %v4540
      %vm4547 = vmor %vm4545, %vm4546
      %v4548 = vsel %vm4547, %v4540, %v4544
      %v4549 = vand.u32 2147483647, %v4074
      %vm4550 = vcmp.eq.f32.partialorder %v4549, 8.507059e+37
      %v4551 = vand.u32 %v4074, 2147483648
      %v4552 = vor.u32 1.1754944e-38, %v4551
      %v4553 = vsel %vm4550, %v4552, %v4548
      %v4554 = vmul.f32 1.0, %v4553
      %4587 = vrot.lane.b32.xlu0 %v3915, 32
      %v4588 = vpop.permute.xlu0 %4587
      %4589 = vrot.lane.b32.xlu0 %v3916, 32
      %v4590 = vpop.permute.xlu0 %4589
      %4591 = vrot.lane.b32.xlu0 %v3917, 32
      %v4592 = vpop.permute.xlu0 %4591
      %4593 = vrot.lane.b32.xlu0 %v3918, 32
      %v4594 = vpop.permute.xlu0 %4593
      %4595 = vrot.lane.b32.xlu0 %v3919, 32
      %v4596 = vpop.permute.xlu0 %4595
      %4597 = vrot.lane.b32.xlu0 %v3920, 32
      %v4598 = vpop.permute.xlu0 %4597
      %4599 = vrot.lane.b32.xlu0 %v3921, 32
      %v4600 = vpop.permute.xlu0 %4599
      %4601 = vrot.lane.b32.xlu0 %v3922, 32
      %v4602 = vpop.permute.xlu0 %4601
      %4603 = vrot.lane.b32.xlu0 %v3923, 32
      %v4604 = vpop.permute.xlu0 %4603
      %4605 = vrot.lane.b32.xlu0 %v3924, 32
      %v4606 = vpop.permute.xlu0 %4605
      %4607 = vrot.lane.b32.xlu0 %v3925, 32
      %v4608 = vpop.permute.xlu0 %4607
      %4609 = vrot.lane.b32.xlu0 %v3926, 32
      %v4610 = vpop.permute.xlu0 %4609
      %4611 = vrot.lane.b32.xlu0 %v3927, 32
      %v4612 = vpop.permute.xlu0 %4611
      %4613 = vrot.lane.b32.xlu0 %v3928, 32
      %v4614 = vpop.permute.xlu0 %4613
      %4615 = vrot.lane.b32.xlu0 %v3929, 32
      %v4616 = vpop.permute.xlu0 %4615
      %4617 = vrot.lane.b32.xlu0 %v3930, 32
      %v4618 = vpop.permute.xlu0 %4617
      %4619 = vrot.lane.b32.xlu0 %v3931, 32
      %v4620 = vpop.permute.xlu0 %4619
      %4621 = vrot.lane.b32.xlu0 %v3932, 32
      %v4622 = vpop.permute.xlu0 %4621
      %4623 = vrot.lane.b32.xlu0 %v3933, 32
      %v4624 = vpop.permute.xlu0 %4623
      %4625 = vrot.lane.b32.xlu0 %v3934, 32
      %v4626 = vpop.permute.xlu0 %4625
      %4627 = vrot.lane.b32.xlu0 %v3935, 32
      %v4628 = vpop.permute.xlu0 %4627
      %4629 = vrot.lane.b32.xlu0 %v3936, 32
      %v4630 = vpop.permute.xlu0 %4629
      %4631 = vrot.lane.b32.xlu0 %v3937, 32
      %v4632 = vpop.permute.xlu0 %4631
      %4633 = vrot.lane.b32.xlu0 %v3938, 32
      %v4634 = vpop.permute.xlu0 %4633
      %4635 = vrot.lane.b32.xlu0 %v3939, 32
      %v4636 = vpop.permute.xlu0 %4635
      %4637 = vrot.lane.b32.xlu0 %v3940, 32
      %v4638 = vpop.permute.xlu0 %4637
      %4639 = vrot.lane.b32.xlu0 %v3941, 32
      %v4640 = vpop.permute.xlu0 %4639
      %4641 = vrot.lane.b32.xlu0 %v3942, 32
      %v4642 = vpop.permute.xlu0 %4641
      %4643 = vrot.lane.b32.xlu0 %v3943, 32
      %v4644 = vpop.permute.xlu0 %4643
      %4645 = vrot.lane.b32.xlu0 %v3944, 32
      %v4646 = vpop.permute.xlu0 %4645
      %4647 = vrot.lane.b32.xlu0 %v3945, 32
      %v4648 = vpop.permute.xlu0 %4647
      %4649 = vrot.lane.b32.xlu0 %v3946, 32
      %v4650 = vpop.permute.xlu0 %4649
      %v4683 = vmul.f32 %v4089, %v4588
      %v4684 = vmul.f32 %v4104, %v4590
      %v4685 = vmul.f32 %v4119, %v4592
      %v4686 = vmul.f32 %v4134, %v4594
      %v4687 = vmul.f32 %v4149, %v4596
      %v4688 = vmul.f32 %v4164, %v4598
      %v4689 = vmul.f32 %v4179, %v4600
      %v4690 = vmul.f32 %v4194, %v4602
      %v4691 = vmul.f32 %v4209, %v4604
      %v4692 = vmul.f32 %v4224, %v4606
      %v4693 = vmul.f32 %v4239, %v4608
      %v4694 = vmul.f32 %v4254, %v4610
      %v4695 = vmul.f32 %v4269, %v4612
      %v4696 = vmul.f32 %v4284, %v4614
      %v4697 = vmul.f32 %v4299, %v4616
      %v4698 = vmul.f32 %v4314, %v4618
      %v4699 = vmul.f32 %v4329, %v4620
      %v4700 = vmul.f32 %v4344, %v4622
      %v4701 = vmul.f32 %v4359, %v4624
      %v4702 = vmul.f32 %v4374, %v4626
      %v4703 = vmul.f32 %v4389, %v4628
      %v4704 = vmul.f32 %v4404, %v4630
      %v4705 = vmul.f32 %v4419, %v4632
      %v4706 = vmul.f32 %v4434, %v4634
      %v4707 = vmul.f32 %v4449, %v4636
      %v4708 = vmul.f32 %v4464, %v4638
      %v4709 = vmul.f32 %v4479, %v4640
      %v4710 = vmul.f32 %v4494, %v4642
      %v4711 = vmul.f32 %v4509, %v4644
      %v4712 = vmul.f32 %v4524, %v4646
      %v4713 = vmul.f32 %v4539, %v4648
      %v4714 = vmul.f32 %v4554, %v4650
      %4747 = vrot.lane.b32.xlu0 %v4683, 64
      %v4748 = vpop.permute.xlu0 %4747
      %4749 = vrot.lane.b32.xlu0 %v4684, 64
      %v4750 = vpop.permute.xlu0 %4749
      %4751 = vrot.lane.b32.xlu0 %v4685, 64
      %v4752 = vpop.permute.xlu0 %4751
      %4753 = vrot.lane.b32.xlu0 %v4686, 64
      %v4754 = vpop.permute.xlu0 %4753
      %4755 = vrot.lane.b32.xlu0 %v4687, 64
      %v4756 = vpop.permute.xlu0 %4755
      %4757 = vrot.lane.b32.xlu0 %v4688, 64
      %v4758 = vpop.permute.xlu0 %4757
      %4759 = vrot.lane.b32.xlu0 %v4689, 64
      %v4760 = vpop.permute.xlu0 %4759
      %4761 = vrot.lane.b32.xlu0 %v4690, 64
      %v4762 = vpop.permute.xlu0 %4761
      %4763 = vrot.lane.b32.xlu0 %v4691, 64
      %v4764 = vpop.permute.xlu0 %4763
      %4765 = vrot.lane.b32.xlu0 %v4692, 64
      %v4766 = vpop.permute.xlu0 %4765
      %4767 = vrot.lane.b32.xlu0 %v4693, 64
      %v4768 = vpop.permute.xlu0 %4767
      %4769 = vrot.lane.b32.xlu0 %v4694, 64
      %v4770 = vpop.permute.xlu0 %4769
      %4771 = vrot.lane.b32.xlu0 %v4695, 64
      %v4772 = vpop.permute.xlu0 %4771
      %4773 = vrot.lane.b32.xlu0 %v4696, 64
      %v4774 = vpop.permute.xlu0 %4773
      %4775 = vrot.lane.b32.xlu0 %v4697, 64
      %v4776 = vpop.permute.xlu0 %4775
      %4777 = vrot.lane.b32.xlu0 %v4698, 64
      %v4778 = vpop.permute.xlu0 %4777
      %4779 = vrot.lane.b32.xlu0 %v4699, 64
      %v4780 = vpop.permute.xlu0 %4779
      %4781 = vrot.lane.b32.xlu0 %v4700, 64
      %v4782 = vpop.permute.xlu0 %4781
      %4783 = vrot.lane.b32.xlu0 %v4701, 64
      %v4784 = vpop.permute.xlu0 %4783
      %4785 = vrot.lane.b32.xlu0 %v4702, 64
      %v4786 = vpop.permute.xlu0 %4785
      %4787 = vrot.lane.b32.xlu0 %v4703, 64
      %v4788 = vpop.permute.xlu0 %4787
      %4789 = vrot.lane.b32.xlu0 %v4704, 64
      %v4790 = vpop.permute.xlu0 %4789
      %4791 = vrot.lane.b32.xlu0 %v4705, 64
      %v4792 = vpop.permute.xlu0 %4791
      %4793 = vrot.lane.b32.xlu0 %v4706, 64
      %v4794 = vpop.permute.xlu0 %4793
      %4795 = vrot.lane.b32.xlu0 %v4707, 64
      %v4796 = vpop.permute.xlu0 %4795
      %4797 = vrot.lane.b32.xlu0 %v4708, 64
      %v4798 = vpop.permute.xlu0 %4797
      %4799 = vrot.lane.b32.xlu0 %v4709, 64
      %v4800 = vpop.permute.xlu0 %4799
      %4801 = vrot.lane.b32.xlu0 %v4710, 64
      %v4802 = vpop.permute.xlu0 %4801
      %4803 = vrot.lane.b32.xlu0 %v4711, 64
      %v4804 = vpop.permute.xlu0 %4803
      %4805 = vrot.lane.b32.xlu0 %v4712, 64
      %v4806 = vpop.permute.xlu0 %4805
      %4807 = vrot.lane.b32.xlu0 %v4713, 64
      %v4808 = vpop.permute.xlu0 %4807
      %4809 = vrot.lane.b32.xlu0 %v4714, 64
      %v4810 = vpop.permute.xlu0 %4809
      %v4843 = vadd.f32 %v3915, %v4748
      %v4844 = vadd.f32 %v3916, %v4750
      %v4845 = vadd.f32 %v3917, %v4752
      %v4846 = vadd.f32 %v3918, %v4754
      %v4847 = vadd.f32 %v3919, %v4756
      %v4848 = vadd.f32 %v3920, %v4758
      %v4849 = vadd.f32 %v3921, %v4760
      %v4850 = vadd.f32 %v3922, %v4762
      %v4851 = vadd.f32 %v3923, %v4764
      %v4852 = vadd.f32 %v3924, %v4766
      %v4853 = vadd.f32 %v3925, %v4768
      %v4854 = vadd.f32 %v3926, %v4770
      %v4855 = vadd.f32 %v3927, %v4772
      %v4856 = vadd.f32 %v3928, %v4774
      %v4857 = vadd.f32 %v3929, %v4776
      %v4858 = vadd.f32 %v3930, %v4778
      %v4859 = vadd.f32 %v3931, %v4780
      %v4860 = vadd.f32 %v3932, %v4782
      %v4861 = vadd.f32 %v3933, %v4784
      %v4862 = vadd.f32 %v3934, %v4786
      %v4863 = vadd.f32 %v3935, %v4788
      %v4864 = vadd.f32 %v3936, %v4790
      %v4865 = vadd.f32 %v3937, %v4792
      %v4866 = vadd.f32 %v3938, %v4794
      %v4867 = vadd.f32 %v3939, %v4796
      %v4868 = vadd.f32 %v3940, %v4798
      %v4869 = vadd.f32 %v3941, %v4800
      %v4870 = vadd.f32 %v3942, %v4802
      %v4871 = vadd.f32 %v3943, %v4804
      %v4872 = vadd.f32 %v3944, %v4806
      %v4873 = vadd.f32 %v3945, %v4808
      %v4874 = vadd.f32 %v3946, %v4810
      %v4875 = vtanh.pop %v4843
      %v4876 = vtanh.pop %v4844
      %v4877 = vtanh.pop %v4845
      %v4878 = vtanh.pop %v4846
      %v4879 = vtanh.pop %v4847
      %v4880 = vtanh.pop %v4848
      %v4881 = vtanh.pop %v4849
      %v4882 = vtanh.pop %v4850
      %v4883 = vtanh.pop %v4851
      %v4884 = vtanh.pop %v4852
      %v4885 = vtanh.pop %v4853
      %v4886 = vtanh.pop %v4854
      %v4887 = vtanh.pop %v4855
      %v4888 = vtanh.pop %v4856
      %v4889 = vtanh.pop %v4857
      %v4890 = vtanh.pop %v4858
      %v4891 = vtanh.pop %v4859
      %v4892 = vtanh.pop %v4860
      %v4893 = vtanh.pop %v4861
      %v4894 = vtanh.pop %v4862
      %v4895 = vtanh.pop %v4863
      %v4896 = vtanh.pop %v4864
      %v4897 = vtanh.pop %v4865
      %v4898 = vtanh.pop %v4866
      %v4899 = vtanh.pop %v4867
      %v4900 = vtanh.pop %v4868
      %v4901 = vtanh.pop %v4869
      %v4902 = vtanh.pop %v4870
      %v4903 = vtanh.pop %v4871
      %v4904 = vtanh.pop %v4872
      %v4905 = vtanh.pop %v4873
      %v4906 = vtanh.pop %v4874
      %v4907 = vsub.f32 1.0, %v4089
      %v4908 = vsub.f32 1.0, %v4104
      %v4909 = vsub.f32 1.0, %v4119
      %v4910 = vsub.f32 1.0, %v4134
      %v4911 = vsub.f32 1.0, %v4149
      %v4912 = vsub.f32 1.0, %v4164
      %v4913 = vsub.f32 1.0, %v4179
      %v4914 = vsub.f32 1.0, %v4194
      %v4915 = vsub.f32 1.0, %v4209
      %v4916 = vsub.f32 1.0, %v4224
      %v4917 = vsub.f32 1.0, %v4239
      %v4918 = vsub.f32 1.0, %v4254
      %v4919 = vsub.f32 1.0, %v4269
      %v4920 = vsub.f32 1.0, %v4284
      %v4921 = vsub.f32 1.0, %v4299
      %v4922 = vsub.f32 1.0, %v4314
      %v4923 = vsub.f32 1.0, %v4329
      %v4924 = vsub.f32 1.0, %v4344
      %v4925 = vsub.f32 1.0, %v4359
      %v4926 = vsub.f32 1.0, %v4374
      %v4927 = vsub.f32 1.0, %v4389
      %v4928 = vsub.f32 1.0, %v4404
      %v4929 = vsub.f32 1.0, %v4419
      %v4930 = vsub.f32 1.0, %v4434
      %v4931 = vsub.f32 1.0, %v4449
      %v4932 = vsub.f32 1.0, %v4464
      %v4933 = vsub.f32 1.0, %v4479
      %v4934 = vsub.f32 1.0, %v4494
      %v4935 = vsub.f32 1.0, %v4509
      %v4936 = vsub.f32 1.0, %v4524
      %v4937 = vsub.f32 1.0, %v4539
      %v4938 = vsub.f32 1.0, %v4554
      %4971 = vrot.lane.b32.xlu0 %v358, 32
      %v4972 = vpop.permute.xlu0 %4971
      %4973 = vrot.lane.b32.xlu0 %v359, 32
      %v4974 = vpop.permute.xlu0 %4973
      %4975 = vrot.lane.b32.xlu0 %v360, 32
      %v4976 = vpop.permute.xlu0 %4975
      %4977 = vrot.lane.b32.xlu0 %v361, 32
      %v4978 = vpop.permute.xlu0 %4977
      %4979 = vrot.lane.b32.xlu0 %v362, 32
      %v4980 = vpop.permute.xlu0 %4979
      %4981 = vrot.lane.b32.xlu0 %v363, 32
      %v4982 = vpop.permute.xlu0 %4981
      %4983 = vrot.lane.b32.xlu0 %v364, 32
      %v4984 = vpop.permute.xlu0 %4983
      %4985 = vrot.lane.b32.xlu0 %v365, 32
      %v4986 = vpop.permute.xlu0 %4985
      %4987 = vrot.lane.b32.xlu0 %v366, 32
      %v4988 = vpop.permute.xlu0 %4987
      %4989 = vrot.lane.b32.xlu0 %v367, 32
      %v4990 = vpop.permute.xlu0 %4989
      %4991 = vrot.lane.b32.xlu0 %v368, 32
      %v4992 = vpop.permute.xlu0 %4991
      %4993 = vrot.lane.b32.xlu0 %v369, 32
      %v4994 = vpop.permute.xlu0 %4993
      %4995 = vrot.lane.b32.xlu0 %v370, 32
      %v4996 = vpop.permute.xlu0 %4995
      %4997 = vrot.lane.b32.xlu0 %v371, 32
      %v4998 = vpop.permute.xlu0 %4997
      %4999 = vrot.lane.b32.xlu0 %v372, 32
      %v5000 = vpop.permute.xlu0 %4999
      %5001 = vrot.lane.b32.xlu0 %v373, 32
      %v5002 = vpop.permute.xlu0 %5001
      %5003 = vrot.lane.b32.xlu0 %v374, 32
      %v5004 = vpop.permute.xlu0 %5003
      %5005 = vrot.lane.b32.xlu0 %v375, 32
      %v5006 = vpop.permute.xlu0 %5005
      %5007 = vrot.lane.b32.xlu0 %v376, 32
      %v5008 = vpop.permute.xlu0 %5007
      %5009 = vrot.lane.b32.xlu0 %v377, 32
      %v5010 = vpop.permute.xlu0 %5009
      %5011 = vrot.lane.b32.xlu0 %v378, 32
      %v5012 = vpop.permute.xlu0 %5011
      %5013 = vrot.lane.b32.xlu0 %v379, 32
      %v5014 = vpop.permute.xlu0 %5013
      %5015 = vrot.lane.b32.xlu0 %v380, 32
      %v5016 = vpop.permute.xlu0 %5015
      %5017 = vrot.lane.b32.xlu0 %v381, 32
      %v5018 = vpop.permute.xlu0 %5017
      %5019 = vrot.lane.b32.xlu0 %v382, 32
      %v5020 = vpop.permute.xlu0 %5019
      %5021 = vrot.lane.b32.xlu0 %v383, 32
      %v5022 = vpop.permute.xlu0 %5021
      %5023 = vrot.lane.b32.xlu0 %v384, 32
      %v5024 = vpop.permute.xlu0 %5023
      %5025 = vrot.lane.b32.xlu0 %v385, 32
      %v5026 = vpop.permute.xlu0 %5025
      %5027 = vrot.lane.b32.xlu0 %v386, 32
      %v5028 = vpop.permute.xlu0 %5027
      %5029 = vrot.lane.b32.xlu0 %v387, 32
      %v5030 = vpop.permute.xlu0 %5029
      %5031 = vrot.lane.b32.xlu0 %v388, 32
      %v5032 = vpop.permute.xlu0 %5031
      %5033 = vrot.lane.b32.xlu0 %v389, 32
      %v5034 = vpop.permute.xlu0 %5033
      %v5067 = vmul.f32 %v4907, %v4972
      %v5068 = vmul.f32 %v4908, %v4974
      %v5069 = vmul.f32 %v4909, %v4976
      %v5070 = vmul.f32 %v4910, %v4978
      %v5071 = vmul.f32 %v4911, %v4980
      %v5072 = vmul.f32 %v4912, %v4982
      %v5073 = vmul.f32 %v4913, %v4984
      %v5074 = vmul.f32 %v4914, %v4986
      %v5075 = vmul.f32 %v4915, %v4988
      %v5076 = vmul.f32 %v4916, %v4990
      %v5077 = vmul.f32 %v4917, %v4992
      %v5078 = vmul.f32 %v4918, %v4994
      %v5079 = vmul.f32 %v4919, %v4996
      %v5080 = vmul.f32 %v4920, %v4998
      %v5081 = vmul.f32 %v4921, %v5000
      %v5082 = vmul.f32 %v4922, %v5002
      %v5083 = vmul.f32 %v4923, %v5004
      %v5084 = vmul.f32 %v4924, %v5006
      %v5085 = vmul.f32 %v4925, %v5008
      %v5086 = vmul.f32 %v4926, %v5010
      %v5087 = vmul.f32 %v4927, %v5012
      %v5088 = vmul.f32 %v4928, %v5014
      %v5089 = vmul.f32 %v4929, %v5016
      %v5090 = vmul.f32 %v4930, %v5018
      %v5091 = vmul.f32 %v4931, %v5020
      %v5092 = vmul.f32 %v4932, %v5022
      %v5093 = vmul.f32 %v4933, %v5024
      %v5094 = vmul.f32 %v4934, %v5026
      %v5095 = vmul.f32 %v4935, %v5028
      %v5096 = vmul.f32 %v4936, %v5030
      %v5097 = vmul.f32 %v4937, %v5032
      %v5098 = vmul.f32 %v4938, %v5034
      %5131 = vrot.lane.b32.xlu0 %v4875, 96
      %v5132 = vpop.permute.xlu0 %5131
      %5133 = vrot.lane.b32.xlu0 %v4876, 96
      %v5134 = vpop.permute.xlu0 %5133
      %5135 = vrot.lane.b32.xlu0 %v4877, 96
      %v5136 = vpop.permute.xlu0 %5135
      %5137 = vrot.lane.b32.xlu0 %v4878, 96
      %v5138 = vpop.permute.xlu0 %5137
      %5139 = vrot.lane.b32.xlu0 %v4879, 96
      %v5140 = vpop.permute.xlu0 %5139
      %5141 = vrot.lane.b32.xlu0 %v4880, 96
      %v5142 = vpop.permute.xlu0 %5141
      %5143 = vrot.lane.b32.xlu0 %v4881, 96
      %v5144 = vpop.permute.xlu0 %5143
      %5145 = vrot.lane.b32.xlu0 %v4882, 96
      %v5146 = vpop.permute.xlu0 %5145
      %5147 = vrot.lane.b32.xlu0 %v4883, 96
      %v5148 = vpop.permute.xlu0 %5147
      %5149 = vrot.lane.b32.xlu0 %v4884, 96
      %v5150 = vpop.permute.xlu0 %5149
      %5151 = vrot.lane.b32.xlu0 %v4885, 96
      %v5152 = vpop.permute.xlu0 %5151
      %5153 = vrot.lane.b32.xlu0 %v4886, 96
      %v5154 = vpop.permute.xlu0 %5153
      %5155 = vrot.lane.b32.xlu0 %v4887, 96
      %v5156 = vpop.permute.xlu0 %5155
      %5157 = vrot.lane.b32.xlu0 %v4888, 96
      %v5158 = vpop.permute.xlu0 %5157
      %5159 = vrot.lane.b32.xlu0 %v4889, 96
      %v5160 = vpop.permute.xlu0 %5159
      %5161 = vrot.lane.b32.xlu0 %v4890, 96
      %v5162 = vpop.permute.xlu0 %5161
      %5163 = vrot.lane.b32.xlu0 %v4891, 96
      %v5164 = vpop.permute.xlu0 %5163
      %5165 = vrot.lane.b32.xlu0 %v4892, 96
      %v5166 = vpop.permute.xlu0 %5165
      %5167 = vrot.lane.b32.xlu0 %v4893, 96
      %v5168 = vpop.permute.xlu0 %5167
      %5169 = vrot.lane.b32.xlu0 %v4894, 96
      %v5170 = vpop.permute.xlu0 %5169
      %5171 = vrot.lane.b32.xlu0 %v4895, 96
      %v5172 = vpop.permute.xlu0 %5171
      %5173 = vrot.lane.b32.xlu0 %v4896, 96
      %v5174 = vpop.permute.xlu0 %5173
      %5175 = vrot.lane.b32.xlu0 %v4897, 96
      %v5176 = vpop.permute.xlu0 %5175
      %5177 = vrot.lane.b32.xlu0 %v4898, 96
      %v5178 = vpop.permute.xlu0 %5177
      %5179 = vrot.lane.b32.xlu0 %v4899, 96
      %v5180 = vpop.permute.xlu0 %5179
      %5181 = vrot.lane.b32.xlu0 %v4900, 96
      %v5182 = vpop.permute.xlu0 %5181
      %5183 = vrot.lane.b32.xlu0 %v4901, 96
      %v5184 = vpop.permute.xlu0 %5183
      %5185 = vrot.lane.b32.xlu0 %v4902, 96
      %v5186 = vpop.permute.xlu0 %5185
      %5187 = vrot.lane.b32.xlu0 %v4903, 96
      %v5188 = vpop.permute.xlu0 %5187
      %5189 = vrot.lane.b32.xlu0 %v4904, 96
      %v5190 = vpop.permute.xlu0 %5189
      %5191 = vrot.lane.b32.xlu0 %v4905, 96
      %v5192 = vpop.permute.xlu0 %5191
      %5193 = vrot.lane.b32.xlu0 %v4906, 96
      %v5194 = vpop.permute.xlu0 %5193
      %v5227 = vmul.f32 %v4089, %v5132
      %v5228 = vmul.f32 %v4104, %v5134
      %v5229 = vmul.f32 %v4119, %v5136
      %v5230 = vmul.f32 %v4134, %v5138
      %v5231 = vmul.f32 %v4149, %v5140
      %v5232 = vmul.f32 %v4164, %v5142
      %v5233 = vmul.f32 %v4179, %v5144
      %v5234 = vmul.f32 %v4194, %v5146
      %v5235 = vmul.f32 %v4209, %v5148
      %v5236 = vmul.f32 %v4224, %v5150
      %v5237 = vmul.f32 %v4239, %v5152
      %v5238 = vmul.f32 %v4254, %v5154
      %v5239 = vmul.f32 %v4269, %v5156
      %v5240 = vmul.f32 %v4284, %v5158
      %v5241 = vmul.f32 %v4299, %v5160
      %v5242 = vmul.f32 %v4314, %v5162
      %v5243 = vmul.f32 %v4329, %v5164
      %v5244 = vmul.f32 %v4344, %v5166
      %v5245 = vmul.f32 %v4359, %v5168
      %v5246 = vmul.f32 %v4374, %v5170
      %v5247 = vmul.f32 %v4389, %v5172
      %v5248 = vmul.f32 %v4404, %v5174
      %v5249 = vmul.f32 %v4419, %v5176
      %v5250 = vmul.f32 %v4434, %v5178
      %v5251 = vmul.f32 %v4449, %v5180
      %v5252 = vmul.f32 %v4464, %v5182
      %v5253 = vmul.f32 %v4479, %v5184
      %v5254 = vmul.f32 %v4494, %v5186
      %v5255 = vmul.f32 %v4509, %v5188
      %v5256 = vmul.f32 %v4524, %v5190
      %v5257 = vmul.f32 %v4539, %v5192
      %v5258 = vmul.f32 %v4554, %v5194
      %v5259 = vadd.f32 %v5067, %v5227
      %v5260 = vadd.f32 %v5068, %v5228
      %v5261 = vadd.f32 %v5069, %v5229
      %v5262 = vadd.f32 %v5070, %v5230
      %v5263 = vadd.f32 %v5071, %v5231
      %v5264 = vadd.f32 %v5072, %v5232
      %v5265 = vadd.f32 %v5073, %v5233
      %v5266 = vadd.f32 %v5074, %v5234
      %v5267 = vadd.f32 %v5075, %v5235
      %v5268 = vadd.f32 %v5076, %v5236
      %v5269 = vadd.f32 %v5077, %v5237
      %v5270 = vadd.f32 %v5078, %v5238
      %v5271 = vadd.f32 %v5079, %v5239
      %v5272 = vadd.f32 %v5080, %v5240
      %v5273 = vadd.f32 %v5081, %v5241
      %v5274 = vadd.f32 %v5082, %v5242
      %v5275 = vadd.f32 %v5083, %v5243
      %v5276 = vadd.f32 %v5084, %v5244
      %v5277 = vadd.f32 %v5085, %v5245
      %v5278 = vadd.f32 %v5086, %v5246
      %v5279 = vadd.f32 %v5087, %v5247
      %v5280 = vadd.f32 %v5088, %v5248
      %v5281 = vadd.f32 %v5089, %v5249
      %v5282 = vadd.f32 %v5090, %v5250
      %v5283 = vadd.f32 %v5091, %v5251
      %v5284 = vadd.f32 %v5092, %v5252
      %v5285 = vadd.f32 %v5093, %v5253
      %v5286 = vadd.f32 %v5094, %v5254
      %v5287 = vadd.f32 %v5095, %v5255
      %v5288 = vadd.f32 %v5096, %v5256
      %v5289 = vadd.f32 %v5097, %v5257
      %v5290 = vadd.f32 %v5098, %v5258
      %5323 = vrot.lane.b32.xlu0 %v5259, 96
      %v5324 = vpop.permute.xlu0 %5323
      %5325 = vrot.lane.b32.xlu0 %v5260, 96
      %v5326 = vpop.permute.xlu0 %5325
      %5327 = vrot.lane.b32.xlu0 %v5261, 96
      %v5328 = vpop.permute.xlu0 %5327
      %5329 = vrot.lane.b32.xlu0 %v5262, 96
      %v5330 = vpop.permute.xlu0 %5329
      %5331 = vrot.lane.b32.xlu0 %v5263, 96
      %v5332 = vpop.permute.xlu0 %5331
      %5333 = vrot.lane.b32.xlu0 %v5264, 96
      %v5334 = vpop.permute.xlu0 %5333
      %5335 = vrot.lane.b32.xlu0 %v5265, 96
      %v5336 = vpop.permute.xlu0 %5335
      %5337 = vrot.lane.b32.xlu0 %v5266, 96
      %v5338 = vpop.permute.xlu0 %5337
      %5339 = vrot.lane.b32.xlu0 %v5267, 96
      %v5340 = vpop.permute.xlu0 %5339
      %5341 = vrot.lane.b32.xlu0 %v5268, 96
      %v5342 = vpop.permute.xlu0 %5341
      %5343 = vrot.lane.b32.xlu0 %v5269, 96
      %v5344 = vpop.permute.xlu0 %5343
      %5345 = vrot.lane.b32.xlu0 %v5270, 96
      %v5346 = vpop.permute.xlu0 %5345
      %5347 = vrot.lane.b32.xlu0 %v5271, 96
      %v5348 = vpop.permute.xlu0 %5347
      %5349 = vrot.lane.b32.xlu0 %v5272, 96
      %v5350 = vpop.permute.xlu0 %5349
      %5351 = vrot.lane.b32.xlu0 %v5273, 96
      %v5352 = vpop.permute.xlu0 %5351
      %5353 = vrot.lane.b32.xlu0 %v5274, 96
      %v5354 = vpop.permute.xlu0 %5353
      %5355 = vrot.lane.b32.xlu0 %v5275, 96
      %v5356 = vpop.permute.xlu0 %5355
      %5357 = vrot.lane.b32.xlu0 %v5276, 96
      %v5358 = vpop.permute.xlu0 %5357
      %5359 = vrot.lane.b32.xlu0 %v5277, 96
      %v5360 = vpop.permute.xlu0 %5359
      %5361 = vrot.lane.b32.xlu0 %v5278, 96
      %v5362 = vpop.permute.xlu0 %5361
      %5363 = vrot.lane.b32.xlu0 %v5279, 96
      %v5364 = vpop.permute.xlu0 %5363
      %5365 = vrot.lane.b32.xlu0 %v5280, 96
      %v5366 = vpop.permute.xlu0 %5365
      %5367 = vrot.lane.b32.xlu0 %v5281, 96
      %v5368 = vpop.permute.xlu0 %5367
      %5369 = vrot.lane.b32.xlu0 %v5282, 96
      %v5370 = vpop.permute.xlu0 %5369
      %5371 = vrot.lane.b32.xlu0 %v5283, 96
      %v5372 = vpop.permute.xlu0 %5371
      %5373 = vrot.lane.b32.xlu0 %v5284, 96
      %v5374 = vpop.permute.xlu0 %5373
      %5375 = vrot.lane.b32.xlu0 %v5285, 96
      %v5376 = vpop.permute.xlu0 %5375
      %5377 = vrot.lane.b32.xlu0 %v5286, 96
      %v5378 = vpop.permute.xlu0 %5377
      %5379 = vrot.lane.b32.xlu0 %v5287, 96
      %v5380 = vpop.permute.xlu0 %5379
      %5381 = vrot.lane.b32.xlu0 %v5288, 96
      %v5382 = vpop.permute.xlu0 %5381
      %5383 = vrot.lane.b32.xlu0 %v5289, 96
      %v5384 = vpop.permute.xlu0 %5383
      %5385 = vrot.lane.b32.xlu0 %v5290, 96
      %v5386 = vpop.permute.xlu0 %5385
      %5419 = vst.msk [vmem:[%s302] sm:$0xff] %vm421, %v5324
      %5420 = vst.msk [vmem:[%s302 + $0x8] sm:$0xff] %vm421, %v5326
      %5421 = vst.msk [vmem:[%s302 + $0x10] sm:$0xff] %vm421, %v5328
      %5422 = vst.msk [vmem:[%s302 + $0x18] sm:$0xff] %vm421, %v5330
      %5423 = vst.msk [vmem:[%s302 + $0x20] sm:$0xff] %vm421, %v5332
      %5424 = vst.msk [vmem:[%s302 + $0x28] sm:$0xff] %vm421, %v5334
      %5425 = vst.msk [vmem:[%s302 + $0x30] sm:$0xff] %vm421, %v5336
      %5426 = vst.msk [vmem:[%s302 + $0x38] sm:$0xff] %vm421, %v5338
      %5427 = vst.msk [vmem:[%s302 + $0x40] sm:$0xff] %vm421, %v5340
      %5428 = vst.msk [vmem:[%s302 + $0x48] sm:$0xff] %vm421, %v5342
      %5429 = vst.msk [vmem:[%s302 + $0x50] sm:$0xff] %vm421, %v5344
      %5430 = vst.msk [vmem:[%s302 + $0x58] sm:$0xff] %vm421, %v5346
      %5431 = vst.msk [vmem:[%s302 + $0x60] sm:$0xff] %vm421, %v5348
      %5432 = vst.msk [vmem:[%s302 + $0x68] sm:$0xff] %vm421, %v5350
      %5433 = vst.msk [vmem:[%s302 + $0x70] sm:$0xff] %vm421, %v5352
      %5434 = vst.msk [vmem:[%s302 + $0x78] sm:$0xff] %vm421, %v5354
      %5435 = vst.msk [vmem:[%s302 + $0x80] sm:$0xff] %vm421, %v5356
      %5436 = vst.msk [vmem:[%s302 + $0x88] sm:$0xff] %vm421, %v5358
      %5437 = vst.msk [vmem:[%s302 + $0x90] sm:$0xff] %vm421, %v5360
      %5438 = vst.msk [vmem:[%s302 + $0x98] sm:$0xff] %vm421, %v5362
      %5439 = vst.msk [vmem:[%s302 + $0xa0] sm:$0xff] %vm421, %v5364
      %5440 = vst.msk [vmem:[%s302 + $0xa8] sm:$0xff] %vm421, %v5366
      %5441 = vst.msk [vmem:[%s302 + $0xb0] sm:$0xff] %vm421, %v5368
      %5442 = vst.msk [vmem:[%s302 + $0xb8] sm:$0xff] %vm421, %v5370
      %5443 = vst.msk [vmem:[%s302 + $0xc0] sm:$0xff] %vm421, %v5372
      %5444 = vst.msk [vmem:[%s302 + $0xc8] sm:$0xff] %vm421, %v5374
      %5445 = vst.msk [vmem:[%s302 + $0xd0] sm:$0xff] %vm421, %v5376
      %5446 = vst.msk [vmem:[%s302 + $0xd8] sm:$0xff] %vm421, %v5378
      %5447 = vst.msk [vmem:[%s302 + $0xe0] sm:$0xff] %vm421, %v5380
      %5448 = vst.msk [vmem:[%s302 + $0xe8] sm:$0xff] %vm421, %v5382
      %5449 = vst.msk [vmem:[%s302 + $0xf0] sm:$0xff] %vm421, %v5384
      %5450 = vst.msk [vmem:[%s302 + $0xf8] sm:$0xff] %vm421, %v5386
      %s5451 = smul.u32 32, %s18
      %p5452 = scmp.lt.s32.totalorder %s5451, 63
      %s5453 = scalar_select %p5452, %s5451, 63
      %s5454 = smul.addr %s5453, 8
      %s5455 = scalar_lea.vmem %s7, %s5454
      // Predicated region
      $region49: #{gnn_forward.1} parent=47 // pred_check
        %p5456 = pneg %p193
      $region50: #{gnn_forward.1} parent=47 // pred_check_branch
        %5458 = sbr.rel (%p5456) target = $region52
      $region51: #{gnn_forward.1} parent=47 // pred_region
        %s5459 = smul.u32 32, %s18
      $region52: #{gnn_forward.1} parent=47 // pred_fallthru
        _
    $region48: #{gnn_forward.1} parent=5 // pred_fallthru
      _
    %p5460 = scmp.le.s32.totalorder 2, %s13
    // Predicated region
    $region53: #{gnn_forward.1} parent=5 // pred_check
      %p5461 = pneg %p5460
    $region54: #{gnn_forward.1} parent=5 // pred_check_branch
      %5463 = sbr.rel (%p5461) target = $region56
    $region55: #{gnn_forward.1} parent=5 // pred_region
      %s5464 = ssub.s32 %s13, 2
      // Predicated region
      $region57: #{gnn_forward.1} parent=55 // pred_check
        %p5465 = pneg %p199
      $region58: #{gnn_forward.1} parent=55 // pred_check_branch
        %5467 = sbr.rel (%p5465) target = $region60
      $region59: #{gnn_forward.1} parent=55 // pred_region
        %s5468 = smul.u32 32, %s19
        %p5469 = scmp.lt.s32.totalorder %s5468, 63
        %s5470 = scalar_select %p5469, %s5468, 63
        %s5471 = smul.addr %s5470, 8
        %s5472 = scalar_lea.vmem %s7, %s5471
      $region60: #{gnn_forward.1} parent=55 // pred_fallthru
        _
    $region56: #{gnn_forward.1} parent=5 // pred_fallthru
      _
  $region6: #{gnn_forward.1} parent=0 // loop_footer
    %s17 = sadd.s32 1, %s13
  $region7: #{gnn_forward.1} parent=0 // loop_footer_branch
    %12 = sbr.rel target = $region3
  $region8: #{gnn_forward.1} parent=0 // loop_exit
    _

</llo_original>
